<compile_context>
chip_gen: v7x
topology: tpu7x:2x2x1
jax: 0.10.0
libtpu: 0.0.40
codegen_flags: <defaults>
</compile_context>

<pallas_src>
import functools
import numpy as np
import jax
import jax.numpy as jnp
from jax.experimental import pallas as pl
from jax.experimental.pallas import tpu as pltpu


def _round_up(x, m):
    return ((x + m - 1) // m) * m


# ----------------------------- mel filterbank (librosa-style, slaney) ----------------
def _hz_to_mel(f):
    f = np.asarray(f, dtype=np.float64)
    f_sp = 200.0 / 3
    mels = f / f_sp
    min_log_hz = 1000.0
    min_log_mel = min_log_hz / f_sp
    logstep = np.log(6.4) / 27.0
    return np.where(f >= min_log_hz,
                    min_log_mel + np.log(np.maximum(f, 1e-10) / min_log_hz) / logstep,
                    mels)


def _mel_to_hz(m):
    m = np.asarray(m, dtype=np.float64)
    f_sp = 200.0 / 3
    freqs = f_sp * m
    min_log_hz = 1000.0
    min_log_mel = min_log_hz / f_sp
    logstep = np.log(6.4) / 27.0
    return np.where(m >= min_log_mel,
                    min_log_hz * np.exp(logstep * (m - min_log_mel)),
                    freqs)


def mel_filterbank(sr, n_fft, n_mels, fmin, fmax):
    # deterministic, slaney-normalized triangular filters (librosa.filters.mel defaults)
    n_freq = n_fft // 2 + 1
    fftfreqs = np.linspace(0.0, sr / 2.0, n_freq)
    mel_pts = _mel_to_hz(np.linspace(_hz_to_mel(fmin), _hz_to_mel(fmax), n_mels + 2))
    fdiff = np.diff(mel_pts)
    ramps = mel_pts[:, None] - fftfreqs[None, :]
    weights = np.zeros((n_mels, n_freq), dtype=np.float64)
    for i in range(n_mels):
        lower = -ramps[i] / fdiff[i]
        upper = ramps[i + 2] / fdiff[i + 1]
        weights[i] = np.maximum(0.0, np.minimum(lower, upper))
    enorm = 2.0 / (mel_pts[2:n_mels + 2] - mel_pts[:n_mels])
    weights *= enorm[:, None]
    return weights.astype(np.float32)  # (n_mels, n_freq)


# ----------------------------- Pallas kernel -----------------------------------------
def _logmel_kernel(eps, n_freq_p, K, main_ref, tail_ref, w_ref, mel_ref, out_ref):
    # main_ref: (1, tf, hop) f32 chunks   tail_ref: (1, tail_chunks, hop) f32 chunks
    # w_ref:    (n_fft, 2*Fp) bf16        mel_ref:  (Fp, Mp) bf16
    main = main_ref[0]                              # (tf, hop)
    tail = tail_ref[0]                              # (tail_chunks, hop)
    tf = main.shape[0]
    chunks = jnp.concatenate([main, tail], axis=0)  # (tf + tail_chunks, hop)
    # frame j = chunks[j : j+K] flattened; i.e. frames[:, k*hop:(k+1)*hop] = chunks[k:k+tf]
    frames = jnp.concatenate([chunks[k:k + tf, :] for k in range(K)], axis=1)  # (tf, n_fft) f32

    f16 = frames.astype(jnp.bfloat16)
    ri = jnp.dot(f16, w_ref[...], preferred_element_type=jnp.float32)  # (tf, 2*Fp) f32
    re = ri[:, :n_freq_p]
    im = ri[:, n_freq_p:]
    mag = jnp.sqrt(re * re + im * im)                                  # |STFT|, zero on padded bins
    mel = jnp.dot(mag.astype(jnp.bfloat16), mel_ref[...],
                  preferred_element_type=jnp.float32)                  # (tf, Mp) f32
    out_ref[0] = jnp.log10(jnp.maximum(mel, eps))


def log_mel_spectrogram(x, *, fs=24000, hop_size=128, fft_size=1024,
                        n_mels=80, fmin=None, fmax=None, eps=1e-10,
                        frames_per_tile=256):
    """x: (B, 1, T) float32 waveform -> (B, n_frames, n_mels) float32 log-mel."""
    fmin = 0.0 if fmin is None else float(fmin)
    fmax = fs / 2.0 if fmax is None else float(fmax)
    B = x.shape[0]
    T = x.shape[-1]
    x2 = x.reshape(B, T).astype(jnp.float32)

    n_fft = fft_size
    hop = hop_size
    if n_fft % hop != 0:
        raise ValueError("in-kernel framing requires hop_size to divide fft_size")
    K = n_fft // hop                       # chunks per frame
    n_freq = n_fft // 2 + 1
    n_freq_p = _round_up(n_freq, 128)      # e.g. 513 -> 640
    n_mels_p = _round_up(n_mels, 128)      # e.g. 80  -> 128

    # hann window (torch.hann_window default: periodic) folded into the DFT matrices
    n = np.arange(n_fft, dtype=np.float64)
    window = 0.5 * (1.0 - np.cos(2.0 * np.pi * n / n_fft))
    k = np.arange(n_freq, dtype=np.float64)
    ang = 2.0 * np.pi * np.outer(n, k) / n_fft
    cos_mat = np.zeros((n_fft, n_freq_p), np.float32)
    sin_mat = np.zeros((n_fft, n_freq_p), np.float32)
    cos_mat[:, :n_freq] = (window[:, None] * np.cos(ang)).astype(np.float32)
    sin_mat[:, :n_freq] = (window[:, None] * -np.sin(ang)).astype(np.float32)
    # one fused weight so re+im come from a single MXU pass; split at a 128-aligned boundary
    w = jnp.asarray(np.concatenate([cos_mat, sin_mat], axis=1), dtype=jnp.bfloat16)

    # mel basis, transposed like the PyTorch buffer, zero-padded on both axes (exact)
    melw = mel_filterbank(fs, n_fft, n_mels, fmin, fmax)       # (n_mels, n_freq)
    mel_np = np.zeros((n_freq_p, n_mels_p), np.float32)
    mel_np[:n_freq, :n_mels] = melw.T
    mel_basis = jnp.asarray(mel_np, dtype=jnp.bfloat16)

    # framing geometry (torch.stft center=True semantics)
    n_frames = 1 + T // hop
    tail_chunks = _round_up(max(K - 1, 1), 8)                  # overlap chunks fetched per tile
    tf = min(frames_per_tile, _round_up(n_frames, 8))
    tf = _round_up(tf, tail_chunks)                            # keep tail block index integral
    n_tiles = -(-n_frames // tf)

    pad = n_fft // 2
    xp = jnp.pad(x2, ((0, 0), (pad, pad)), mode="reflect")
    n_chunks = n_tiles * tf + tail_chunks
    total = n_chunks * hop
    cur = xp.shape[1]
    if total >= cur:
        xp = jnp.pad(xp, ((0, 0), (0, total - cur)))           # zeros only touch padded frames
    else:
        xp = xp[:, :total]                                     # trailing samples never used
    chunks = xp.reshape(B, n_chunks, hop)

    kernel = functools.partial(_logmel_kernel, float(eps), n_freq_p, K)

    out = pl.pallas_call(
        kernel,
        out_shape=jax.ShapeDtypeStruct((B, n_tiles * tf, n_mels_p), jnp.float32),
        grid=(B, n_tiles),
        in_specs=[
            # main: tf consecutive hop-chunks of this tile
            pl.BlockSpec((1, tf, hop), lambda b, i: (b, i, 0)),
            # tail: the K-1 overlap chunks just past the tile (same array, second spec)
            pl.BlockSpec((1, tail_chunks, hop),
                         lambda b, i: (b, (i + 1) * (tf // tail_chunks), 0)),
            # constant weights: index_map is (0,0) so they are fetched once, never re-DMA'd
            pl.BlockSpec((n_fft, 2 * n_freq_p), lambda b, i: (0, 0)),
            pl.BlockSpec((n_freq_p, n_mels_p), lambda b, i: (0, 0)),
        ],
        out_specs=pl.BlockSpec((1, tf, n_mels_p), lambda b, i: (b, i, 0)),
        compiler_params=pltpu.CompilerParams(
            dimension_semantics=("parallel", "parallel"),
            vmem_limit_bytes=48 * 1024 * 1024,
        ),
    )(chunks, chunks, w, mel_basis)

    return out[:, :n_frames, :n_mels]


# ----------------------------- reference (pure JAX, f32) ------------------------------
def _reference(x, **kw):
    fs = kw.get("fs", 24000); hop = kw.get("hop_size", 128); n_fft = kw.get("fft_size", 1024)
    n_mels = kw.get("n_mels", 80); eps = kw.get("eps", 1e-10)
    fmin = kw.get("fmin", None); fmax = kw.get("fmax", None)
    fmin = 0.0 if fmin is None else float(fmin)
    fmax = fs / 2.0 if fmax is None else float(fmax)
    B, T = x.shape[0], x.shape[-1]
    x2 = x.reshape(B, T).astype(jnp.float32)
    n_freq = n_fft // 2 + 1
    n = np.arange(n_fft); window = 0.5 * (1 - np.cos(2 * np.pi * n / n_fft))
    k = np.arange(n_freq); ang = 2 * np.pi * np.outer(n, k) / n_fft
    C = jnp.asarray((window[:, None] * np.cos(ang)).astype(np.float32))
    S = jnp.asarray((window[:, None] * -np.sin(ang)).astype(np.float32))
    M = jnp.asarray(mel_filterbank(fs, n_fft, n_mels, fmin, fmax).T)
    xp = jnp.pad(x2, ((0, 0), (n_fft // 2, n_fft // 2)), mode="reflect")
    n_frames = 1 + T // hop
    idx = jnp.arange(n_frames)[:, None] * hop + jnp.arange(n_fft)[None, :]
    fr = xp[:, idx]
    re = jnp.einsum("btn,nk->btk", fr, C)
    im = jnp.einsum("btn,nk->btk", fr, S)
    mag = jnp.sqrt(re * re + im * im)
    mel = jnp.einsum("btk,km->btm", mag, M)
    return jnp.log10(jnp.maximum(mel, eps))


if __name__ == "__main__":
    # module defaults: fs=24000, fft_size=1024, n_mels=80; hop=128, small waveform:
    # B=2, T=4096 -> n_frames = 1 + 4096//128 = 33
    key = jax.random.PRNGKey(0)
    B, T = 2, 4096
    x = jax.random.normal(key, (B, 1, T), dtype=jnp.float32)

    kw = dict(fs=24000, hop_size=128, fft_size=1024, n_mels=80)
    out = log_mel_spectrogram(x, **kw)
    out = jax.block_until_ready(out)

    ref = jax.block_until_ready(_reference(x, **kw))
    n_frames = 1 + T // kw["hop_size"]
    assert out.shape == (B, n_frames, kw["n_mels"]), out.shape
    # bf16 matmul inputs with f32 accumulation: log-mel agrees with f32 reference to ~1e-2
    assert np.allclose(np.asarray(out), np.asarray(ref), rtol=5e-2, atol=5e-2), (
        float(np.max(np.abs(np.asarray(out) - np.asarray(ref)))))

    print("KERNEL_OK")
</pallas_src>

<mosaic_0001>
module attributes {stable_mosaic.version = 11 : i64} {
  func.func @_logmel_kernel(%arg0: i32, %arg1: i32, %arg2: memref<1x40x128xf32, #tpu.memory_space<vmem>>, %arg3: memref<1x8x128xf32, #tpu.memory_space<vmem>>, %arg4: memref<1024x1280xbf16, #tpu.memory_space<vmem>>, %arg5: memref<640x128xbf16, #tpu.memory_space<vmem>>, %arg6: memref<1x40x128xf32, #tpu.memory_space<vmem>>) attributes {dimension_semantics = [#tpu.dimension_semantics<parallel>, #tpu.dimension_semantics<parallel>], iteration_bounds = array<i64: 2, 1>, scalar_prefetch = 0 : i64, scratch_operands = 0 : i64, tpu.core_type = #tpu.core_type<tc>, window_params = [{transform_indices = @transform_0, window_bounds = array<i64: 1, 40, 128>}, {transform_indices = @transform_1, window_bounds = array<i64: 1, 8, 128>}, {pipeline_mode = #tpu.pipeline_mode<synchronous>, transform_indices = @transform_2, window_bounds = array<i64: 1024, 1280>}, {pipeline_mode = #tpu.pipeline_mode<synchronous>, transform_indices = @transform_3, window_bounds = array<i64: 640, 128>}, {transform_indices = @transform_4, window_bounds = array<i64: 1, 40, 128>}]} {
    %c0 = arith.constant 0 : index
    %c0_0 = arith.constant 0 : index
    %c0_1 = arith.constant 0 : index
    %0 = vector.load %arg2[%c0, %c0_0, %c0_1] : memref<1x40x128xf32, #tpu.memory_space<vmem>>, vector<1x40x128xf32>
    %1 = vector.shape_cast %0 : vector<1x40x128xf32> to vector<40x128xf32>
    %c0_2 = arith.constant 0 : index
    %c0_3 = arith.constant 0 : index
    %c0_4 = arith.constant 0 : index
    %2 = vector.load %arg3[%c0_2, %c0_3, %c0_4] : memref<1x8x128xf32, #tpu.memory_space<vmem>>, vector<1x8x128xf32>
    %3 = vector.shape_cast %2 : vector<1x8x128xf32> to vector<8x128xf32>
    %4 = tpu.concatenate %1, %3 in 0 : vector<40x128xf32>, vector<8x128xf32> -> vector<48x128xf32>
    %5 = vector.extract_strided_slice %4 {offsets = [0, 0], sizes = [40, 128], strides = [1, 1]} : vector<48x128xf32> to vector<40x128xf32>
    %6 = vector.extract_strided_slice %4 {offsets = [1, 0], sizes = [40, 128], strides = [1, 1]} : vector<48x128xf32> to vector<40x128xf32>
    %7 = vector.extract_strided_slice %4 {offsets = [2, 0], sizes = [40, 128], strides = [1, 1]} : vector<48x128xf32> to vector<40x128xf32>
    %8 = vector.extract_strided_slice %4 {offsets = [3, 0], sizes = [40, 128], strides = [1, 1]} : vector<48x128xf32> to vector<40x128xf32>
    %9 = vector.extract_strided_slice %4 {offsets = [4, 0], sizes = [40, 128], strides = [1, 1]} : vector<48x128xf32> to vector<40x128xf32>
    %10 = vector.extract_strided_slice %4 {offsets = [5, 0], sizes = [40, 128], strides = [1, 1]} : vector<48x128xf32> to vector<40x128xf32>
    %11 = vector.extract_strided_slice %4 {offsets = [6, 0], sizes = [40, 128], strides = [1, 1]} : vector<48x128xf32> to vector<40x128xf32>
    %12 = vector.extract_strided_slice %4 {offsets = [7, 0], sizes = [40, 128], strides = [1, 1]} : vector<48x128xf32> to vector<40x128xf32>
    %13 = tpu.concatenate %5, %6, %7, %8, %9, %10, %11, %12 in 1 : vector<40x128xf32>, vector<40x128xf32>, vector<40x128xf32>, vector<40x128xf32>, vector<40x128xf32>, vector<40x128xf32>, vector<40x128xf32>, vector<40x128xf32> -> vector<40x1024xf32>
    %14 = arith.truncf %13 : vector<40x1024xf32> to vector<40x1024xbf16>
    %c0_5 = arith.constant 0 : index
    %c0_6 = arith.constant 0 : index
    %15 = vector.load %arg4[%c0_5, %c0_6] : memref<1024x1280xbf16, #tpu.memory_space<vmem>>, vector<1024x1280xbf16>
    %cst = arith.constant dense<0.000000e+00> : vector<40x1280xf32>
    %16 = tpu.matmul %14, %15, %cst {dimension_numbers = #tpu.dot_dimension_numbers<[1], [0], [0], [1], [0, 0, 1, 1], [], []>} : vector<40x1024xbf16>, vector<1024x1280xbf16>, vector<40x1280xf32> -> vector<40x1280xf32>
    %17 = vector.extract_strided_slice %16 {offsets = [0, 0], sizes = [40, 640], strides = [1, 1]} : vector<40x1280xf32> to vector<40x640xf32>
    %18 = vector.extract_strided_slice %16 {offsets = [0, 640], sizes = [40, 640], strides = [1, 1]} : vector<40x1280xf32> to vector<40x640xf32>
    %19 = arith.mulf %17, %17 : vector<40x640xf32>
    %20 = arith.mulf %18, %18 : vector<40x640xf32>
    %21 = arith.addf %19, %20 : vector<40x640xf32>
    %22 = math.sqrt %21 : vector<40x640xf32>
    %23 = arith.truncf %22 : vector<40x640xf32> to vector<40x640xbf16>
    %c0_7 = arith.constant 0 : index
    %c0_8 = arith.constant 0 : index
    %24 = vector.load %arg5[%c0_7, %c0_8] : memref<640x128xbf16, #tpu.memory_space<vmem>>, vector<640x128xbf16>
    %cst_9 = arith.constant dense<0.000000e+00> : vector<40x128xf32>
    %25 = tpu.matmul %23, %24, %cst_9 {dimension_numbers = #tpu.dot_dimension_numbers<[1], [0], [0], [1], [0, 0, 1, 1], [], []>} : vector<40x640xbf16>, vector<640x128xbf16>, vector<40x128xf32> -> vector<40x128xf32>
    %cst_10 = arith.constant 1.000000e-10 : f32
    %26 = vector.broadcast %cst_10 : f32 to vector<40x128xf32>
    %27 = arith.maximumf %25, %26 : vector<40x128xf32>
    %28 = math.log %27 : vector<40x128xf32>
    %cst_11 = arith.constant 0.434294492 : f32
    %29 = vector.broadcast %cst_11 : f32 to vector<40x128xf32>
    %30 = arith.mulf %28, %29 : vector<40x128xf32>
    %c0_12 = arith.constant 0 : index
    %c0_13 = arith.constant 0 : index
    %c0_14 = arith.constant 0 : index
    %31 = vector.load %arg6[%c0_12, %c0_13, %c0_14] : memref<1x40x128xf32, #tpu.memory_space<vmem>>, vector<1x40x128xf32>
    %32 = vector.shape_cast %31 : vector<1x40x128xf32> to vector<40x128xf32>
    %33 = vector.shape_cast %30 : vector<40x128xf32> to vector<1x40x128xf32>
    tpu.vector_store %arg6[%c0_12, %c0_13, %c0_14], %33 {strides = array<i32>} : memref<1x40x128xf32, #tpu.memory_space<vmem>>, vector<1x40x128xf32>,
    return
  }
  func.func @transform_0(%arg0: i32, %arg1: i32) -> (i32, i32, i32) {
    %c0_i32 = arith.constant 0 : i32
    %c0_i32_0 = arith.constant 0 : i32
    return %arg0, %arg1, %c0_i32 : i32, i32, i32
  }
  func.func @transform_1(%arg0: i32, %arg1: i32) -> (i32, i32, i32) {
    %c1_i32 = arith.constant 1 : i32
    %0 = arith.addi %arg1, %c1_i32 : i32
    %c5_i32 = arith.constant 5 : i32
    %1 = arith.muli %0, %c5_i32 : i32
    %c0_i32 = arith.constant 0 : i32
    %c0_i32_0 = arith.constant 0 : i32
    return %arg0, %1, %c0_i32 : i32, i32, i32
  }
  func.func @transform_2(%arg0: i32, %arg1: i32) -> (i32, i32) {
    %c0_i32 = arith.constant 0 : i32
    %c0_i32_0 = arith.constant 0 : i32
    %c0_i32_1 = arith.constant 0 : i32
    return %c0_i32, %c0_i32_0 : i32, i32
  }
  func.func @transform_3(%arg0: i32, %arg1: i32) -> (i32, i32) {
    %c0_i32 = arith.constant 0 : i32
    %c0_i32_0 = arith.constant 0 : i32
    %c0_i32_1 = arith.constant 0 : i32
    return %c0_i32, %c0_i32_0 : i32, i32
  }
  func.func @transform_4(%arg0: i32, %arg1: i32) -> (i32, i32, i32) {
    %c0_i32 = arith.constant 0 : i32
    %c0_i32_0 = arith.constant 0 : i32
    return %arg0, %arg1, %c0_i32 : i32, i32, i32
  }
}

</mosaic_0001>

<llo_original>
// kernel: tpu_custom_call.1
$region0: #{tpu_custom_call.1}
  #allocation0 [shape = 'u32[]', space=smem, size = 0x4, offset = 0x4, fixed_abs, tag = 'smem constant byte address 0x4 - core index']
  #allocation1 [shape = 'u32[144,128]{1,0:T(1,128)}', space=vmem, size = 0x12000, scoped, tag = 'internal scratch']
  %s0 = inlined_call_operand.hbm [shape: f32[2,48,128], index: 0, kind: input, shape index: {}]
  %s1 = inlined_call_operand.hbm [shape: f32[2,48,128], index: 1, kind: input, shape index: {}]
  %s2 = inlined_call_operand.hbm [shape: bf16[1024,1280], index: 2, kind: input, shape index: {}]
  %s3 = inlined_call_operand.hbm [shape: bf16[640,128], index: 3, kind: input, shape index: {}]
  %s4 = inlined_call_operand.hbm [shape: f32[2,40,128], index: 4, kind: output, shape index: {}]
  %s5 = sld [smem:[#allocation0]]
  $region65: #{tpu_custom_call.1} parent=0
    _
  %s7 = ssub.s32 1, %s5
  %s8 = scalar_select 0, %s7, %s5
  $region1: #{tpu_custom_call.1} parent=0
    #allocation2 [shape = 'u8[40960]{0}', space=vmem, size = 0xa000, scoped, tag = 'input window, operand 0']
    #allocation3 [shape = 's32[2]{0}', space=sflag, size = 0x8, scoped, tag = 'scoped memory for tpu_custom_call.1']
    #allocation4 [shape = 's32[2]{0}', space=sflag, size = 0x8, scoped, tag = 'scoped memory for tpu_custom_call.1']
    #allocation5 [shape = 'u8[8192]{0}', space=vmem, size = 0x2000, scoped, tag = 'input window, operand 1']
    #allocation6 [shape = 's32[2]{0}', space=sflag, size = 0x8, scoped, tag = 'scoped memory for tpu_custom_call.1']
    #allocation7 [shape = 'u8[2621440]{0}', space=vmem, size = 0x280000, scoped, tag = 'input window, operand 2, single buffered']
    #allocation8 [shape = 'u8[163840]{0}', space=vmem, size = 0x28000, scoped, tag = 'input window, operand 3, single buffered']
    #allocation9 [shape = 's32[1]{0}', space=sflag, size = 0x4, scoped, tag = 'scoped memory for tpu_custom_call.1']
    #allocation10 [shape = 'u8[40960]{0}', space=vmem, size = 0xa000, scoped, tag = 'output window, operand 0']
    %9 = vsyncpa [#allocation3], 0
    %s10 = scalar_lea.sflag [#allocation3], 1
    %11 = vsyncpa %s10, 0
    %12 = vsyncpa [#allocation6], 0
    %s13 = scalar_lea.sflag [#allocation6], 1
    %14 = vsyncpa %s13, 0
    %15 = vsyncpa [#allocation9], 0
    %16 = vsyncpa [#allocation4], 0
    %s17 = scalar_lea.sflag [#allocation4], 1
    %18 = vsyncpa %s17, 0
    loop: start=0, step=1, limit=4
    $region2: #{tpu_custom_call.1} parent=1 // loop_pre_header
      _
    $region3: #{tpu_custom_call.1} parent=1 // loop_header
      %s20 = sphi 0, %s24
      %p21 = scmp.ge.s32.totalorder %s20, 4
      %s27 = sphi 0, %s39
      %s28 = sphi 0, %s35
      %s29 = sphi 0, %s27
      %s30 = sphi 0, %s28
      %s31 = sphi 0, %s29
      %s32 = sphi 0, %s30
      %s44 = sphi 0, %s46
      %s47 = sphi 0, %s44
      %s48 = sphi 0, %s47
      %s64 = sphi 0, %s48
      %s76 = sphi 0, %s78
      %s79 = sphi 0, %s76
      %s80 = sphi 0, %s79
      %s96 = sphi 0, %s80
      %s100 = sphi 0, %s100
      %s102 = sphi 0, %s100
      %s103 = sphi 0, %s102
      %s117 = sphi 0, %s103
      %s121 = sphi 0, %s121
      %s123 = sphi 0, %s121
      %s124 = sphi 0, %s123
      %s138 = sphi 0, %s124
      %s146 = sphi 0, %s148
      %s149 = sphi 0, %s146
      %s150 = sphi 0, %s149
      %s166 = sphi 0, %s150
    $region4: #{tpu_custom_call.1} parent=1 // loop_header_branch
      %23 = sbr.rel (%p21) target = $region8
    $region5: #{tpu_custom_call.1} parent=1 // loop_body
      %s25 = ssub.s32 %s20, 1
      %s26 = ssub.s32 %s20, 2
      %s33 = sadd.s32 1, %s28
      %p34 = scmp.ge.s32.totalorder %s33, 1
      %s35 = scalar_select %p34, 0, %s33
      %s36 = sadd.s32 1, %s27
      %s37 = scalar_select %p34, %s36, %s27
      %p38 = scmp.ge.s32.totalorder %s37, 2
      %s39 = scalar_select %p38, 0, %s37
      %s40 = ssub.s32 %s27, %s39
      %s41 = ssub.s32 %s28, %s35
      %s42 = sor.u32 %s40, %s41
      %p43 = scmp.eq.s32.totalorder %s42, 0
      %s45 = sadd.s32 %s44, 1
      %s46 = scalar_select %p43, %s44, %s45
      %p49 = pneg %p43
      %p50 = scmp.eq.s32.totalorder %s20, 1
      %p51 = por %p49, %p50
      %p52 = scmp.ne.s32.totalorder %s44, %s47
      %p53 = scmp.eq.s32.totalorder %s20, 0
      %p54 = por %p52, %p53
      %p55 = scmp.ne.s32.totalorder %s44, %s47
      %p56 = scmp.eq.s32.totalorder %s25, 1
      %p57 = por %p55, %p56
      %p58 = scmp.ne.s32.totalorder %s47, %s48
      %p59 = scmp.eq.s32.totalorder %s25, 0
      %p60 = por %p58, %p59
      %p61 = scmp.ne.s32.totalorder %s47, %s48
      %p62 = scmp.eq.s32.totalorder %s26, 1
      %p63 = por %p61, %p62
      %p65 = scmp.ne.s32.totalorder %s48, %s64
      %p66 = scmp.eq.s32.totalorder %s26, 0
      %p67 = por %p65, %p66
      %s68 = sadd.s32 %s28, 1
      %s69 = smul.u32 %s68, 5
      %s70 = sadd.s32 %s35, 1
      %s71 = smul.u32 %s70, 5
      %s72 = ssub.s32 %s27, %s39
      %s73 = ssub.s32 %s69, %s71
      %s74 = sor.u32 %s72, %s73
      %p75 = scmp.eq.s32.totalorder %s74, 0
      %s77 = sadd.s32 %s76, 1
      %s78 = scalar_select %p75, %s76, %s77
      %p81 = pneg %p75
      %p82 = scmp.eq.s32.totalorder %s20, 1
      %p83 = por %p81, %p82
      %p84 = scmp.ne.s32.totalorder %s76, %s79
      %p85 = scmp.eq.s32.totalorder %s20, 0
      %p86 = por %p84, %p85
      %p87 = scmp.ne.s32.totalorder %s76, %s79
      %p88 = scmp.eq.s32.totalorder %s25, 1
      %p89 = por %p87, %p88
      %p90 = scmp.ne.s32.totalorder %s79, %s80
      %p91 = scmp.eq.s32.totalorder %s25, 0
      %p92 = por %p90, %p91
      %p93 = scmp.ne.s32.totalorder %s79, %s80
      %p94 = scmp.eq.s32.totalorder %s26, 1
      %p95 = por %p93, %p94
      %p97 = scmp.ne.s32.totalorder %s80, %s96
      %p98 = scmp.eq.s32.totalorder %s26, 0
      %p99 = por %p97, %p98
      %s101 = sadd.s32 %s100, 1
      %p104 = scmp.eq.s32.totalorder %s20, 1
      %p105 = scmp.ne.s32.totalorder %s100, %s102
      %p106 = scmp.eq.s32.totalorder %s20, 0
      %p107 = por %p105, %p106
      %p108 = scmp.ne.s32.totalorder %s100, %s102
      %p109 = scmp.eq.s32.totalorder %s25, 1
      %p110 = por %p108, %p109
      %p111 = scmp.ne.s32.totalorder %s102, %s103
      %p112 = scmp.eq.s32.totalorder %s25, 0
      %p113 = por %p111, %p112
      %p114 = scmp.ne.s32.totalorder %s102, %s103
      %p115 = scmp.eq.s32.totalorder %s26, 1
      %p116 = por %p114, %p115
      %p118 = scmp.ne.s32.totalorder %s103, %s117
      %p119 = scmp.eq.s32.totalorder %s26, 0
      %p120 = por %p118, %p119
      %s122 = sadd.s32 %s121, 1
      %p125 = scmp.eq.s32.totalorder %s20, 1
      %p126 = scmp.ne.s32.totalorder %s121, %s123
      %p127 = scmp.eq.s32.totalorder %s20, 0
      %p128 = por %p126, %p127
      %p129 = scmp.ne.s32.totalorder %s121, %s123
      %p130 = scmp.eq.s32.totalorder %s25, 1
      %p131 = por %p129, %p130
      %p132 = scmp.ne.s32.totalorder %s123, %s124
      %p133 = scmp.eq.s32.totalorder %s25, 0
      %p134 = por %p132, %p133
      %p135 = scmp.ne.s32.totalorder %s123, %s124
      %p136 = scmp.eq.s32.totalorder %s26, 1
      %p137 = por %p135, %p136
      %p139 = scmp.ne.s32.totalorder %s124, %s138
      %p140 = scmp.eq.s32.totalorder %s26, 0
      %p141 = por %p139, %p140
      %s142 = ssub.s32 %s27, %s39
      %s143 = ssub.s32 %s28, %s35
      %s144 = sor.u32 %s142, %s143
      %p145 = scmp.eq.s32.totalorder %s144, 0
      %s147 = sadd.s32 %s146, 1
      %s148 = scalar_select %p145, %s146, %s147
      %p151 = pneg %p145
      %p152 = scmp.eq.s32.totalorder %s20, 1
      %p153 = por %p151, %p152
      %p154 = scmp.ne.s32.totalorder %s146, %s149
      %p155 = scmp.eq.s32.totalorder %s20, 0
      %p156 = por %p154, %p155
      %p157 = scmp.ne.s32.totalorder %s146, %s149
      %p158 = scmp.eq.s32.totalorder %s25, 1
      %p159 = por %p157, %p158
      %p160 = scmp.ne.s32.totalorder %s149, %s150
      %p161 = scmp.eq.s32.totalorder %s25, 0
      %p162 = por %p160, %p161
      %p163 = scmp.ne.s32.totalorder %s149, %s150
      %p164 = scmp.eq.s32.totalorder %s26, 1
      %p165 = por %p163, %p164
      %p167 = scmp.ne.s32.totalorder %s150, %s166
      %p168 = scmp.eq.s32.totalorder %s26, 0
      %p169 = por %p167, %p168
      %p170 = scmp.le.s32.totalorder 1, %s20
      %p171 = scmp.lt.s32.totalorder %s20, 3
      %p172 = pnand %p170, %p171
      %p173 = pneg %p172
      // Predicated region
      $region9: #{tpu_custom_call.1} parent=5 // pred_check
        _
      $region10: #{tpu_custom_call.1} parent=5 // pred_check_branch
        %175 = sbr.rel (%p172) target = $region12
      $region11: #{tpu_custom_call.1} parent=5 // pred_region
        %s176 = ssub.s32 %s20, 1
        // Predicated region
        $region13: #{tpu_custom_call.1} parent=11 // pred_check
          %p177 = pneg %p113
        $region14: #{tpu_custom_call.1} parent=11 // pred_check_branch
          %179 = sbr.rel (%p177) target = $region16
        $region15: #{tpu_custom_call.1} parent=11 // pred_region
          %s181 = ssub.s32 81920, 81920
          %182 = vsyncadd [#allocation6], %s181
          %s183 = sshll.u32 [#allocation7], 4
          %s184 = int_to_ptr.vmem [resolvable:$true] %s183
          %189 = dma.hbm_to_vmem [thread:$0]  %s2, 81920, %s184, [#allocation6], 640, 640, 40
        $region16: #{tpu_custom_call.1} parent=11 // pred_fallthru
          _
        // Predicated region
        $region17: #{tpu_custom_call.1} parent=11 // pred_check
          %p190 = pneg %p134
        $region18: #{tpu_custom_call.1} parent=11 // pred_check_branch
          %192 = sbr.rel (%p190) target = $region20
        $region19: #{tpu_custom_call.1} parent=11 // pred_region
          %s194 = ssub.s32 5120, 5120
          %195 = vsyncadd [#allocation9], %s194
          %s196 = sshll.u32 [#allocation8], 4
          %s197 = int_to_ptr.vmem [resolvable:$true] %s196
          %202 = dma.hbm_to_vmem [thread:$0]  %s3, 5120, %s197, [#allocation9], 64, 64, 4
        $region20: #{tpu_custom_call.1} parent=11 // pred_fallthru
          _
      $region12: #{tpu_custom_call.1} parent=5 // pred_fallthru
        _
      %p203 = scmp.lt.s32.totalorder %s20, 2
      // Predicated region
      $region21: #{tpu_custom_call.1} parent=5 // pred_check
        %p204 = pneg %p203
      $region22: #{tpu_custom_call.1} parent=5 // pred_check_branch
        %206 = sbr.rel (%p204) target = $region24
      $region23: #{tpu_custom_call.1} parent=5 // pred_region
        // Predicated region
        $region25: #{tpu_custom_call.1} parent=23 // pred_check
          %p207 = pneg %p54
        $region26: #{tpu_custom_call.1} parent=23 // pred_check_branch
          %209 = sbr.rel (%p207) target = $region28
        $region27: #{tpu_custom_call.1} parent=23 // pred_region
          %s210 = sand.u32 %s44, 1
          %s211 = scalar_lea.sflag [#allocation3], %s210
          %s212 = sand.u32 %s44, 1
          %s213 = smul.addr %s212, 40
          %s214 = scalar_lea.vmem [#allocation2], %s213
          %s215 = smul.u32 5, %s28
          %s216 = ssub.s32 6, %s215
          %p217 = scmp.lt.s32.totalorder %s216, 5
          %s218 = scalar_select %p217, %s216, 5
          %s219 = smul.u32 128, %s218
          %s221 = ssub.s32 640, %s219
          %222 = vsyncadd %s211, %s221
          %p223 = scmp.ne.s32.totalorder 0, %s219
          %s224 = smul.addr %s27, 6
          %s225 = sadd.s32 %s215, %s224
          %s226 = smul.addr %s225, 128
          %s227 = scalar_lea.hbm %s0, %s226
          %s228 = smul.u32 8, %s218
          %s229 = sshll.u32 %s214, 4
          %s230 = int_to_ptr.vmem [resolvable:$true] %s229
          %s231 = sshll.u32 %s228, 4
          %235 = dma.hbm_to_vmem [thread:$0]  (%p223), %s227, %s231, %s230, %s211, 128, 128, 8
        $region28: #{tpu_custom_call.1} parent=23 // pred_fallthru
          _
        // Predicated region
        $region29: #{tpu_custom_call.1} parent=23 // pred_check
          %p236 = pneg %p86
        $region30: #{tpu_custom_call.1} parent=23 // pred_check_branch
          %238 = sbr.rel (%p236) target = $region32
        $region31: #{tpu_custom_call.1} parent=23 // pred_region
          %s239 = sand.u32 %s20, 1
          %s240 = scalar_lea.sflag [#allocation6], %s239
          %s241 = sand.u32 %s76, 1
          %s242 = smul.addr %s241, 8
          %s243 = scalar_lea.vmem [#allocation5], %s242
          %s244 = sadd.s32 %s28, 1
          %s245 = smul.u32 %s244, 5
          %s247 = ssub.s32 128, 128
          %248 = vsyncadd %s240, %s247
          %s249 = smul.addr %s27, 6
          %s250 = sadd.s32 %s245, %s249
          %s251 = smul.addr %s250, 128
          %s252 = scalar_lea.hbm %s1, %s251
          %s254 = sshll.u32 %s243, 4
          %s255 = int_to_ptr.vmem [resolvable:$true] %s254
          %257 = dma.hbm_to_vmem [thread:$0]  %s252, 128, %s255, %s240
        $region32: #{tpu_custom_call.1} parent=23 // pred_fallthru
          _
      $region24: #{tpu_custom_call.1} parent=5 // pred_fallthru
        _
      %p258 = scmp.le.s32.totalorder 1, %s20
      %p259 = scmp.lt.s32.totalorder %s20, 3
      %p260 = pnand %p258, %p259
      %p261 = pneg %p260
      // Predicated region
      $region33: #{tpu_custom_call.1} parent=5 // pred_check
        _
      $region34: #{tpu_custom_call.1} parent=5 // pred_check_branch
        %263 = sbr.rel (%p260) target = $region36
      $region35: #{tpu_custom_call.1} parent=5 // pred_region
        %s264 = ssub.s32 %s20, 1
        %s265 = sand.u32 %s47, 1
        %s266 = scalar_lea.sflag [#allocation3], %s265
        %s267 = sand.u32 %s47, 1
        %s268 = smul.addr %s267, 40
        %s269 = scalar_lea.vmem [#allocation2], %s268
        // Predicated region
        $region37: #{tpu_custom_call.1} parent=35 // pred_check
          %p270 = pneg %p60
        $region38: #{tpu_custom_call.1} parent=35 // pred_check_branch
          %272 = sbr.rel (%p270) target = $region40
        $region39: #{tpu_custom_call.1} parent=35 // pred_region
          %273 = dma.done %s266, 640
        $region40: #{tpu_custom_call.1} parent=35 // pred_fallthru
          _
        %s274 = sand.u32 %s25, 1
        %s275 = scalar_lea.sflag [#allocation6], %s274
        %s276 = sand.u32 %s79, 1
        %s277 = smul.addr %s276, 8
        %s278 = scalar_lea.vmem [#allocation5], %s277
        // Predicated region
        $region41: #{tpu_custom_call.1} parent=35 // pred_check
          %p279 = pneg %p92
        $region42: #{tpu_custom_call.1} parent=35 // pred_check_branch
          %281 = sbr.rel (%p279) target = $region44
        $region43: #{tpu_custom_call.1} parent=35 // pred_region
          %282 = dma.done %s275, 128
        $region44: #{tpu_custom_call.1} parent=35 // pred_fallthru
          _
        // Predicated region
        $region45: #{tpu_custom_call.1} parent=35 // pred_check
          %p283 = pneg %p113
        $region46: #{tpu_custom_call.1} parent=35 // pred_check_branch
          %285 = sbr.rel (%p283) target = $region48
        $region47: #{tpu_custom_call.1} parent=35 // pred_region
          %286 = dma.done [#allocation6], 81920
        $region48: #{tpu_custom_call.1} parent=35 // pred_fallthru
          _
        // Predicated region
        $region49: #{tpu_custom_call.1} parent=35 // pred_check
          %p287 = pneg %p134
        $region50: #{tpu_custom_call.1} parent=35 // pred_check_branch
          %289 = sbr.rel (%p287) target = $region52
        $region51: #{tpu_custom_call.1} parent=35 // pred_region
          %290 = dma.done [#allocation9], 5120
        $region52: #{tpu_custom_call.1} parent=35 // pred_fallthru
          _
        %s291 = sand.u32 %s47, 1
        %s292 = scalar_lea.sflag [#allocation3], %s291
        %s293 = sand.u32 %s47, 1
        %s294 = smul.addr %s293, 40
        %s295 = scalar_lea.vmem [#allocation2], %s294
        %p296 = pneg %p60
        %p297 = pneg %p57
        %s298 = sand.u32 %s25, 1
        %s299 = scalar_lea.sflag [#allocation6], %s298
        %s300 = sand.u32 %s79, 1
        %s301 = smul.addr %s300, 8
        %s302 = scalar_lea.vmem [#allocation5], %s301
        %p303 = pneg %p92
        %p304 = pneg %p89
        %p305 = pneg %p113
        %p306 = pneg %p110
        %p307 = pneg %p134
        %p308 = pneg %p131
        %p309 = pneg %p162
        %p310 = pneg %p159
        %s311 = sand.u32 %s149, 1
        %s312 = scalar_lea.sflag [#allocation4], %s311
        %s313 = sand.u32 %s149, 1
        %s314 = smul.addr %s313, 40
        %s315 = scalar_lea.vmem [#allocation10], %s314
        %s316 = smul.u32 5, %s30
        %s317 = ssub.s32 6, %s316
        %p318 = scmp.lt.s32.totalorder %s317, 5
        %s319 = scalar_select %p318, %s317, 5
        %s320 = smul.u32 128, %s319
        %s321 = sadd.s32 %s30, 1
        %s322 = smul.u32 %s321, 5
        %s323 = smul.u32 5, %s30
        %v325 = vld [vmem:[%s269] sm:$0xff]
        %v326 = vld [vmem:[%s269 + $0x8] sm:$0xff]
        %v327 = vld [vmem:[%s269 + $0x10] sm:$0xff]
        %v328 = vld [vmem:[%s269 + $0x18] sm:$0xff]
        %v329 = vld [vmem:[%s269 + $0x20] sm:$0xff]
        %v330 = vld [vmem:[%s278] sm:$0xff]
        %vm337 = vcmask 1046528
        %v338 = vrot.slane %v325, 1
        %v339 = vrot.slane %v326, 1
        %v340 = vsel %vm337, %v338, %v339
        %v341 = vrot.slane %v327, 1
        %v342 = vsel %vm337, %v339, %v341
        %v343 = vrot.slane %v328, 1
        %v344 = vsel %vm337, %v341, %v343
        %v345 = vrot.slane %v329, 1
        %v346 = vsel %vm337, %v343, %v345
        %v347 = vrot.slane %v330, 1
        %v348 = vsel %vm337, %v345, %v347
        %vm354 = vcmask 1045504
        %v355 = vrot.slane %v325, 2
        %v356 = vrot.slane %v326, 2
        %v357 = vsel %vm354, %v355, %v356
        %v358 = vrot.slane %v327, 2
        %v359 = vsel %vm354, %v356, %v358
        %v360 = vrot.slane %v328, 2
        %v361 = vsel %vm354, %v358, %v360
        %v362 = vrot.slane %v329, 2
        %v363 = vsel %vm354, %v360, %v362
        %v364 = vrot.slane %v330, 2
        %v365 = vsel %vm354, %v362, %v364
        %vm371 = vcmask 1044480
        %v372 = vrot.slane %v325, 3
        %v373 = vrot.slane %v326, 3
        %v374 = vsel %vm371, %v372, %v373
        %v375 = vrot.slane %v327, 3
        %v376 = vsel %vm371, %v373, %v375
        %v377 = vrot.slane %v328, 3
        %v378 = vsel %vm371, %v375, %v377
        %v379 = vrot.slane %v329, 3
        %v380 = vsel %vm371, %v377, %v379
        %v381 = vrot.slane %v330, 3
        %v382 = vsel %vm371, %v379, %v381
        %vm388 = vcmask 1043456
        %v389 = vrot.slane %v325, 4
        %v390 = vrot.slane %v326, 4
        %v391 = vsel %vm388, %v389, %v390
        %v392 = vrot.slane %v327, 4
        %v393 = vsel %vm388, %v390, %v392
        %v394 = vrot.slane %v328, 4
        %v395 = vsel %vm388, %v392, %v394
        %v396 = vrot.slane %v329, 4
        %v397 = vsel %vm388, %v394, %v396
        %v398 = vrot.slane %v330, 4
        %v399 = vsel %vm388, %v396, %v398
        %vm405 = vcmask 1042432
        %v406 = vrot.slane %v325, 5
        %v407 = vrot.slane %v326, 5
        %v408 = vsel %vm405, %v406, %v407
        %v409 = vrot.slane %v327, 5
        %v410 = vsel %vm405, %v407, %v409
        %v411 = vrot.slane %v328, 5
        %v412 = vsel %vm405, %v409, %v411
        %v413 = vrot.slane %v329, 5
        %v414 = vsel %vm405, %v411, %v413
        %v415 = vrot.slane %v330, 5
        %v416 = vsel %vm405, %v413, %v415
        %vm422 = vcmask 1041408
        %v423 = vrot.slane %v325, 6
        %v424 = vrot.slane %v326, 6
        %v425 = vsel %vm422, %v423, %v424
        %v426 = vrot.slane %v327, 6
        %v427 = vsel %vm422, %v424, %v426
        %v428 = vrot.slane %v328, 6
        %v429 = vsel %vm422, %v426, %v428
        %v430 = vrot.slane %v329, 6
        %v431 = vsel %vm422, %v428, %v430
        %v432 = vrot.slane %v330, 6
        %v433 = vsel %vm422, %v430, %v432
        %vm439 = vcmask 1040384
        %v440 = vrot.slane %v325, 7
        %v441 = vrot.slane %v326, 7
        %v442 = vsel %vm439, %v440, %v441
        %v443 = vrot.slane %v327, 7
        %v444 = vsel %vm439, %v441, %v443
        %v445 = vrot.slane %v328, 7
        %v446 = vsel %vm439, %v443, %v445
        %v447 = vrot.slane %v329, 7
        %v448 = vsel %vm439, %v445, %v447
        %v449 = vrot.slane %v330, 7
        %v450 = vsel %vm439, %v447, %v449
        %v456 = vpack.c.bf16 %v326, %v325
        %v457 = vpack.c.bf16 %v342, %v340
        %v458 = vpack.c.bf16 %v359, %v357
        %v459 = vpack.c.bf16 %v376, %v374
        %v460 = vpack.c.bf16 %v393, %v391
        %v461 = vpack.c.bf16 %v410, %v408
        %v462 = vpack.c.bf16 %v427, %v425
        %v463 = vpack.c.bf16 %v444, %v442
        %v464 = vpack.c.bf16 %v328, %v327
        %v465 = vpack.c.bf16 %v346, %v344
        %v466 = vpack.c.bf16 %v363, %v361
        %v467 = vpack.c.bf16 %v380, %v378
        %v468 = vpack.c.bf16 %v397, %v395
        %v469 = vpack.c.bf16 %v414, %v412
        %v470 = vpack.c.bf16 %v431, %v429
        %v471 = vpack.c.bf16 %v448, %v446
        %v472 = vpack.c.bf16 %v329, %v329
        %v473 = vpack.c.bf16 %v348, %v348
        %v474 = vpack.c.bf16 %v365, %v365
        %v475 = vpack.c.bf16 %v382, %v382
        %v476 = vpack.c.bf16 %v399, %v399
        %v477 = vpack.c.bf16 %v416, %v416
        %v478 = vpack.c.bf16 %v433, %v433
        %v479 = vpack.c.bf16 %v450, %v450
        %v480 = vld [vmem:[#allocation7] sm:$0xff]
        %v481 = vld [vmem:[#allocation7 + $0x8] sm:$0xff]
        %v482 = vld [vmem:[#allocation7 + $0x10] sm:$0xff]
        %v483 = vld [vmem:[#allocation7 + $0x18] sm:$0xff]
        %v484 = vld [vmem:[#allocation7 + $0x20] sm:$0xff]
        %v485 = vld [vmem:[#allocation7 + $0x28] sm:$0xff]
        %v486 = vld [vmem:[#allocation7 + $0x30] sm:$0xff]
        %v487 = vld [vmem:[#allocation7 + $0x38] sm:$0xff]
        %v488 = vld [vmem:[#allocation7 + $0x40] sm:$0xff]
        %v489 = vld [vmem:[#allocation7 + $0x48] sm:$0xff]
        %v490 = vld [vmem:[#allocation7 + $0x50] sm:$0xff]
        %v491 = vld [vmem:[#allocation7 + $0x58] sm:$0xff]
        %v492 = vld [vmem:[#allocation7 + $0x60] sm:$0xff]
        %v493 = vld [vmem:[#allocation7 + $0x68] sm:$0xff]
        %v494 = vld [vmem:[#allocation7 + $0x70] sm:$0xff]
        %v495 = vld [vmem:[#allocation7 + $0x78] sm:$0xff]
        %v496 = vld [vmem:[#allocation7 + $0x80] sm:$0xff]
        %v497 = vld [vmem:[#allocation7 + $0x88] sm:$0xff]
        %v498 = vld [vmem:[#allocation7 + $0x90] sm:$0xff]
        %v499 = vld [vmem:[#allocation7 + $0x98] sm:$0xff]
        %v500 = vld [vmem:[#allocation7 + $0xa0] sm:$0xff]
        %v501 = vld [vmem:[#allocation7 + $0xa8] sm:$0xff]
        %v502 = vld [vmem:[#allocation7 + $0xb0] sm:$0xff]
        %v503 = vld [vmem:[#allocation7 + $0xb8] sm:$0xff]
        %v504 = vld [vmem:[#allocation7 + $0xc0] sm:$0xff]
        %v505 = vld [vmem:[#allocation7 + $0xc8] sm:$0xff]
        %v506 = vld [vmem:[#allocation7 + $0xd0] sm:$0xff]
        %v507 = vld [vmem:[#allocation7 + $0xd8] sm:$0xff]
        %v508 = vld [vmem:[#allocation7 + $0xe0] sm:$0xff]
        %v509 = vld [vmem:[#allocation7 + $0xe8] sm:$0xff]
        %v510 = vld [vmem:[#allocation7 + $0xf0] sm:$0xff]
        %v511 = vld [vmem:[#allocation7 + $0xf8] sm:$0xff]
        %v512 = vld [vmem:[#allocation7 + $0x100] sm:$0xff]
        %v513 = vld [vmem:[#allocation7 + $0x108] sm:$0xff]
        %v514 = vld [vmem:[#allocation7 + $0x110] sm:$0xff]
        %v515 = vld [vmem:[#allocation7 + $0x118] sm:$0xff]
        %v516 = vld [vmem:[#allocation7 + $0x120] sm:$0xff]
        %v517 = vld [vmem:[#allocation7 + $0x128] sm:$0xff]
        %v518 = vld [vmem:[#allocation7 + $0x130] sm:$0xff]
        %v519 = vld [vmem:[#allocation7 + $0x138] sm:$0xff]
        %v520 = vld [vmem:[#allocation7 + $0x140] sm:$0xff]
        %v521 = vld [vmem:[#allocation7 + $0x148] sm:$0xff]
        %v522 = vld [vmem:[#allocation7 + $0x150] sm:$0xff]
        %v523 = vld [vmem:[#allocation7 + $0x158] sm:$0xff]
        %v524 = vld [vmem:[#allocation7 + $0x160] sm:$0xff]
        %v525 = vld [vmem:[#allocation7 + $0x168] sm:$0xff]
        %v526 = vld [vmem:[#allocation7 + $0x170] sm:$0xff]
        %v527 = vld [vmem:[#allocation7 + $0x178] sm:$0xff]
        %v528 = vld [vmem:[#allocation7 + $0x180] sm:$0xff]
        %v529 = vld [vmem:[#allocation7 + $0x188] sm:$0xff]
        %v530 = vld [vmem:[#allocation7 + $0x190] sm:$0xff]
        %v531 = vld [vmem:[#allocation7 + $0x198] sm:$0xff]
        %v532 = vld [vmem:[#allocation7 + $0x1a0] sm:$0xff]
        %v533 = vld [vmem:[#allocation7 + $0x1a8] sm:$0xff]
        %v534 = vld [vmem:[#allocation7 + $0x1b0] sm:$0xff]
        %v535 = vld [vmem:[#allocation7 + $0x1b8] sm:$0xff]
        %v536 = vld [vmem:[#allocation7 + $0x1c0] sm:$0xff]
        %v537 = vld [vmem:[#allocation7 + $0x1c8] sm:$0xff]
        %v538 = vld [vmem:[#allocation7 + $0x1d0] sm:$0xff]
        %v539 = vld [vmem:[#allocation7 + $0x1d8] sm:$0xff]
        %v540 = vld [vmem:[#allocation7 + $0x1e0] sm:$0xff]
        %v541 = vld [vmem:[#allocation7 + $0x1e8] sm:$0xff]
        %v542 = vld [vmem:[#allocation7 + $0x1f0] sm:$0xff]
        %v543 = vld [vmem:[#allocation7 + $0x1f8] sm:$0xff]
        %v544 = vld [vmem:[#allocation7 + $0x200] sm:$0xff]
        %v545 = vld [vmem:[#allocation7 + $0x208] sm:$0xff]
        %v546 = vld [vmem:[#allocation7 + $0x210] sm:$0xff]
        %v547 = vld [vmem:[#allocation7 + $0x218] sm:$0xff]
        %v548 = vld [vmem:[#allocation7 + $0x220] sm:$0xff]
        %v549 = vld [vmem:[#allocation7 + $0x228] sm:$0xff]
        %v550 = vld [vmem:[#allocation7 + $0x230] sm:$0xff]
        %v551 = vld [vmem:[#allocation7 + $0x238] sm:$0xff]
        %v552 = vld [vmem:[#allocation7 + $0x240] sm:$0xff]
        %v553 = vld [vmem:[#allocation7 + $0x248] sm:$0xff]
        %v554 = vld [vmem:[#allocation7 + $0x250] sm:$0xff]
        %v555 = vld [vmem:[#allocation7 + $0x258] sm:$0xff]
        %v556 = vld [vmem:[#allocation7 + $0x260] sm:$0xff]
        %v557 = vld [vmem:[#allocation7 + $0x268] sm:$0xff]
        %v558 = vld [vmem:[#allocation7 + $0x270] sm:$0xff]
        %v559 = vld [vmem:[#allocation7 + $0x278] sm:$0xff]
        %v560 = vld [vmem:[#allocation7 + $0x280] sm:$0xff]
        %v561 = vld [vmem:[#allocation7 + $0x288] sm:$0xff]
        %v562 = vld [vmem:[#allocation7 + $0x290] sm:$0xff]
        %v563 = vld [vmem:[#allocation7 + $0x298] sm:$0xff]
        %v564 = vld [vmem:[#allocation7 + $0x2a0] sm:$0xff]
        %v565 = vld [vmem:[#allocation7 + $0x2a8] sm:$0xff]
        %v566 = vld [vmem:[#allocation7 + $0x2b0] sm:$0xff]
        %v567 = vld [vmem:[#allocation7 + $0x2b8] sm:$0xff]
        %v568 = vld [vmem:[#allocation7 + $0x2c0] sm:$0xff]
        %v569 = vld [vmem:[#allocation7 + $0x2c8] sm:$0xff]
        %v570 = vld [vmem:[#allocation7 + $0x2d0] sm:$0xff]
        %v571 = vld [vmem:[#allocation7 + $0x2d8] sm:$0xff]
        %v572 = vld [vmem:[#allocation7 + $0x2e0] sm:$0xff]
        %v573 = vld [vmem:[#allocation7 + $0x2e8] sm:$0xff]
        %v574 = vld [vmem:[#allocation7 + $0x2f0] sm:$0xff]
        %v575 = vld [vmem:[#allocation7 + $0x2f8] sm:$0xff]
        %v576 = vld [vmem:[#allocation7 + $0x300] sm:$0xff]
        %v577 = vld [vmem:[#allocation7 + $0x308] sm:$0xff]
        %v578 = vld [vmem:[#allocation7 + $0x310] sm:$0xff]
        %v579 = vld [vmem:[#allocation7 + $0x318] sm:$0xff]
        %v580 = vld [vmem:[#allocation7 + $0x320] sm:$0xff]
        %v581 = vld [vmem:[#allocation7 + $0x328] sm:$0xff]
        %v582 = vld [vmem:[#allocation7 + $0x330] sm:$0xff]
        %v583 = vld [vmem:[#allocation7 + $0x338] sm:$0xff]
        %v584 = vld [vmem:[#allocation7 + $0x340] sm:$0xff]
        %v585 = vld [vmem:[#allocation7 + $0x348] sm:$0xff]
        %v586 = vld [vmem:[#allocation7 + $0x350] sm:$0xff]
        %v587 = vld [vmem:[#allocation7 + $0x358] sm:$0xff]
        %v588 = vld [vmem:[#allocation7 + $0x360] sm:$0xff]
        %v589 = vld [vmem:[#allocation7 + $0x368] sm:$0xff]
        %v590 = vld [vmem:[#allocation7 + $0x370] sm:$0xff]
        %v591 = vld [vmem:[#allocation7 + $0x378] sm:$0xff]
        %v592 = vld [vmem:[#allocation7 + $0x380] sm:$0xff]
        %v593 = vld [vmem:[#allocation7 + $0x388] sm:$0xff]
        %v594 = vld [vmem:[#allocation7 + $0x390] sm:$0xff]
        %v595 = vld [vmem:[#allocation7 + $0x398] sm:$0xff]
        %v596 = vld [vmem:[#allocation7 + $0x3a0] sm:$0xff]
        %v597 = vld [vmem:[#allocation7 + $0x3a8] sm:$0xff]
        %v598 = vld [vmem:[#allocation7 + $0x3b0] sm:$0xff]
        %v599 = vld [vmem:[#allocation7 + $0x3b8] sm:$0xff]
        %v600 = vld [vmem:[#allocation7 + $0x3c0] sm:$0xff]
        %v601 = vld [vmem:[#allocation7 + $0x3c8] sm:$0xff]
        %v602 = vld [vmem:[#allocation7 + $0x3d0] sm:$0xff]
        %v603 = vld [vmem:[#allocation7 + $0x3d8] sm:$0xff]
        %v604 = vld [vmem:[#allocation7 + $0x3e0] sm:$0xff]
        %v605 = vld [vmem:[#allocation7 + $0x3e8] sm:$0xff]
        %v606 = vld [vmem:[#allocation7 + $0x3f0] sm:$0xff]
        %v607 = vld [vmem:[#allocation7 + $0x3f8] sm:$0xff]
        %v608 = vld [vmem:[#allocation7 + $0x400] sm:$0xff]
        %v609 = vld [vmem:[#allocation7 + $0x408] sm:$0xff]
        %v610 = vld [vmem:[#allocation7 + $0x410] sm:$0xff]
        %v611 = vld [vmem:[#allocation7 + $0x418] sm:$0xff]
        %v612 = vld [vmem:[#allocation7 + $0x420] sm:$0xff]
        %v613 = vld [vmem:[#allocation7 + $0x428] sm:$0xff]
        %v614 = vld [vmem:[#allocation7 + $0x430] sm:$0xff]
        %v615 = vld [vmem:[#allocation7 + $0x438] sm:$0xff]
        %v616 = vld [vmem:[#allocation7 + $0x440] sm:$0xff]
        %v617 = vld [vmem:[#allocation7 + $0x448] sm:$0xff]
        %v618 = vld [vmem:[#allocation7 + $0x450] sm:$0xff]
        %v619 = vld [vmem:[#allocation7 + $0x458] sm:$0xff]
        %v620 = vld [vmem:[#allocation7 + $0x460] sm:$0xff]
        %v621 = vld [vmem:[#allocation7 + $0x468] sm:$0xff]
        %v622 = vld [vmem:[#allocation7 + $0x470] sm:$0xff]
        %v623 = vld [vmem:[#allocation7 + $0x478] sm:$0xff]
        %v624 = vld [vmem:[#allocation7 + $0x480] sm:$0xff]
        %v625 = vld [vmem:[#allocation7 + $0x488] sm:$0xff]
        %v626 = vld [vmem:[#allocation7 + $0x490] sm:$0xff]
        %v627 = vld [vmem:[#allocation7 + $0x498] sm:$0xff]
        %v628 = vld [vmem:[#allocation7 + $0x4a0] sm:$0xff]
        %v629 = vld [vmem:[#allocation7 + $0x4a8] sm:$0xff]
        %v630 = vld [vmem:[#allocation7 + $0x4b0] sm:$0xff]
        %v631 = vld [vmem:[#allocation7 + $0x4b8] sm:$0xff]
        %v632 = vld [vmem:[#allocation7 + $0x4c0] sm:$0xff]
        %v633 = vld [vmem:[#allocation7 + $0x4c8] sm:$0xff]
        %v634 = vld [vmem:[#allocation7 + $0x4d0] sm:$0xff]
        %v635 = vld [vmem:[#allocation7 + $0x4d8] sm:$0xff]
        %v636 = vld [vmem:[#allocation7 + $0x4e0] sm:$0xff]
        %v637 = vld [vmem:[#allocation7 + $0x4e8] sm:$0xff]
        %v638 = vld [vmem:[#allocation7 + $0x4f0] sm:$0xff]
        %v639 = vld [vmem:[#allocation7 + $0x4f8] sm:$0xff]
        %v640 = vld [vmem:[#allocation7 + $0x500] sm:$0xff]
        %v641 = vld [vmem:[#allocation7 + $0x508] sm:$0xff]
        %v642 = vld [vmem:[#allocation7 + $0x510] sm:$0xff]
        %v643 = vld [vmem:[#allocation7 + $0x518] sm:$0xff]
        %v644 = vld [vmem:[#allocation7 + $0x520] sm:$0xff]
        %v645 = vld [vmem:[#allocation7 + $0x528] sm:$0xff]
        %v646 = vld [vmem:[#allocation7 + $0x530] sm:$0xff]
        %v647 = vld [vmem:[#allocation7 + $0x538] sm:$0xff]
        %v648 = vld [vmem:[#allocation7 + $0x540] sm:$0xff]
        %v649 = vld [vmem:[#allocation7 + $0x548] sm:$0xff]
        %v650 = vld [vmem:[#allocation7 + $0x550] sm:$0xff]
        %v651 = vld [vmem:[#allocation7 + $0x558] sm:$0xff]
        %v652 = vld [vmem:[#allocation7 + $0x560] sm:$0xff]
        %v653 = vld [vmem:[#allocation7 + $0x568] sm:$0xff]
        %v654 = vld [vmem:[#allocation7 + $0x570] sm:$0xff]
        %v655 = vld [vmem:[#allocation7 + $0x578] sm:$0xff]
        %v656 = vld [vmem:[#allocation7 + $0x580] sm:$0xff]
        %v657 = vld [vmem:[#allocation7 + $0x588] sm:$0xff]
        %v658 = vld [vmem:[#allocation7 + $0x590] sm:$0xff]
        %v659 = vld [vmem:[#allocation7 + $0x598] sm:$0xff]
        %v660 = vld [vmem:[#allocation7 + $0x5a0] sm:$0xff]
        %v661 = vld [vmem:[#allocation7 + $0x5a8] sm:$0xff]
        %v662 = vld [vmem:[#allocation7 + $0x5b0] sm:$0xff]
        %v663 = vld [vmem:[#allocation7 + $0x5b8] sm:$0xff]
        %v664 = vld [vmem:[#allocation7 + $0x5c0] sm:$0xff]
        %v665 = vld [vmem:[#allocation7 + $0x5c8] sm:$0xff]
        %v666 = vld [vmem:[#allocation7 + $0x5d0] sm:$0xff]
        %v667 = vld [vmem:[#allocation7 + $0x5d8] sm:$0xff]
        %v668 = vld [vmem:[#allocation7 + $0x5e0] sm:$0xff]
        %v669 = vld [vmem:[#allocation7 + $0x5e8] sm:$0xff]
        %v670 = vld [vmem:[#allocation7 + $0x5f0] sm:$0xff]
        %v671 = vld [vmem:[#allocation7 + $0x5f8] sm:$0xff]
        %v672 = vld [vmem:[#allocation7 + $0x600] sm:$0xff]
        %v673 = vld [vmem:[#allocation7 + $0x608] sm:$0xff]
        %v674 = vld [vmem:[#allocation7 + $0x610] sm:$0xff]
        %v675 = vld [vmem:[#allocation7 + $0x618] sm:$0xff]
        %v676 = vld [vmem:[#allocation7 + $0x620] sm:$0xff]
        %v677 = vld [vmem:[#allocation7 + $0x628] sm:$0xff]
        %v678 = vld [vmem:[#allocation7 + $0x630] sm:$0xff]
        %v679 = vld [vmem:[#allocation7 + $0x638] sm:$0xff]
        %v680 = vld [vmem:[#allocation7 + $0x640] sm:$0xff]
        %v681 = vld [vmem:[#allocation7 + $0x648] sm:$0xff]
        %v682 = vld [vmem:[#allocation7 + $0x650] sm:$0xff]
        %v683 = vld [vmem:[#allocation7 + $0x658] sm:$0xff]
        %v684 = vld [vmem:[#allocation7 + $0x660] sm:$0xff]
        %v685 = vld [vmem:[#allocation7 + $0x668] sm:$0xff]
        %v686 = vld [vmem:[#allocation7 + $0x670] sm:$0xff]
        %v687 = vld [vmem:[#allocation7 + $0x678] sm:$0xff]
        %v688 = vld [vmem:[#allocation7 + $0x680] sm:$0xff]
        %v689 = vld [vmem:[#allocation7 + $0x688] sm:$0xff]
        %v690 = vld [vmem:[#allocation7 + $0x690] sm:$0xff]
        %v691 = vld [vmem:[#allocation7 + $0x698] sm:$0xff]
        %v692 = vld [vmem:[#allocation7 + $0x6a0] sm:$0xff]
        %v693 = vld [vmem:[#allocation7 + $0x6a8] sm:$0xff]
        %v694 = vld [vmem:[#allocation7 + $0x6b0] sm:$0xff]
        %v695 = vld [vmem:[#allocation7 + $0x6b8] sm:$0xff]
        %v696 = vld [vmem:[#allocation7 + $0x6c0] sm:$0xff]
        %v697 = vld [vmem:[#allocation7 + $0x6c8] sm:$0xff]
        %v698 = vld [vmem:[#allocation7 + $0x6d0] sm:$0xff]
        %v699 = vld [vmem:[#allocation7 + $0x6d8] sm:$0xff]
        %v700 = vld [vmem:[#allocation7 + $0x6e0] sm:$0xff]
        %v701 = vld [vmem:[#allocation7 + $0x6e8] sm:$0xff]
        %v702 = vld [vmem:[#allocation7 + $0x6f0] sm:$0xff]
        %v703 = vld [vmem:[#allocation7 + $0x6f8] sm:$0xff]
        %v704 = vld [vmem:[#allocation7 + $0x700] sm:$0xff]
        %v705 = vld [vmem:[#allocation7 + $0x708] sm:$0xff]
        %v706 = vld [vmem:[#allocation7 + $0x710] sm:$0xff]
        %v707 = vld [vmem:[#allocation7 + $0x718] sm:$0xff]
        %v708 = vld [vmem:[#allocation7 + $0x720] sm:$0xff]
        %v709 = vld [vmem:[#allocation7 + $0x728] sm:$0xff]
        %v710 = vld [vmem:[#allocation7 + $0x730] sm:$0xff]
        %v711 = vld [vmem:[#allocation7 + $0x738] sm:$0xff]
        %v712 = vld [vmem:[#allocation7 + $0x740] sm:$0xff]
        %v713 = vld [vmem:[#allocation7 + $0x748] sm:$0xff]
        %v714 = vld [vmem:[#allocation7 + $0x750] sm:$0xff]
        %v715 = vld [vmem:[#allocation7 + $0x758] sm:$0xff]
        %v716 = vld [vmem:[#allocation7 + $0x760] sm:$0xff]
        %v717 = vld [vmem:[#allocation7 + $0x768] sm:$0xff]
        %v718 = vld [vmem:[#allocation7 + $0x770] sm:$0xff]
        %v719 = vld [vmem:[#allocation7 + $0x778] sm:$0xff]
        %v720 = vld [vmem:[#allocation7 + $0x780] sm:$0xff]
        %v721 = vld [vmem:[#allocation7 + $0x788] sm:$0xff]
        %v722 = vld [vmem:[#allocation7 + $0x790] sm:$0xff]
        %v723 = vld [vmem:[#allocation7 + $0x798] sm:$0xff]
        %v724 = vld [vmem:[#allocation7 + $0x7a0] sm:$0xff]
        %v725 = vld [vmem:[#allocation7 + $0x7a8] sm:$0xff]
        %v726 = vld [vmem:[#allocation7 + $0x7b0] sm:$0xff]
        %v727 = vld [vmem:[#allocation7 + $0x7b8] sm:$0xff]
        %v728 = vld [vmem:[#allocation7 + $0x7c0] sm:$0xff]
        %v729 = vld [vmem:[#allocation7 + $0x7c8] sm:$0xff]
        %v730 = vld [vmem:[#allocation7 + $0x7d0] sm:$0xff]
        %v731 = vld [vmem:[#allocation7 + $0x7d8] sm:$0xff]
        %v732 = vld [vmem:[#allocation7 + $0x7e0] sm:$0xff]
        %v733 = vld [vmem:[#allocation7 + $0x7e8] sm:$0xff]
        %v734 = vld [vmem:[#allocation7 + $0x7f0] sm:$0xff]
        %v735 = vld [vmem:[#allocation7 + $0x7f8] sm:$0xff]
        %v736 = vld [vmem:[#allocation7 + $0x800] sm:$0xff]
        %v737 = vld [vmem:[#allocation7 + $0x808] sm:$0xff]
        %v738 = vld [vmem:[#allocation7 + $0x810] sm:$0xff]
        %v739 = vld [vmem:[#allocation7 + $0x818] sm:$0xff]
        %v740 = vld [vmem:[#allocation7 + $0x820] sm:$0xff]
        %v741 = vld [vmem:[#allocation7 + $0x828] sm:$0xff]
        %v742 = vld [vmem:[#allocation7 + $0x830] sm:$0xff]
        %v743 = vld [vmem:[#allocation7 + $0x838] sm:$0xff]
        %v744 = vld [vmem:[#allocation7 + $0x840] sm:$0xff]
        %v745 = vld [vmem:[#allocation7 + $0x848] sm:$0xff]
        %v746 = vld [vmem:[#allocation7 + $0x850] sm:$0xff]
        %v747 = vld [vmem:[#allocation7 + $0x858] sm:$0xff]
        %v748 = vld [vmem:[#allocation7 + $0x860] sm:$0xff]
        %v749 = vld [vmem:[#allocation7 + $0x868] sm:$0xff]
        %v750 = vld [vmem:[#allocation7 + $0x870] sm:$0xff]
        %v751 = vld [vmem:[#allocation7 + $0x878] sm:$0xff]
        %v752 = vld [vmem:[#allocation7 + $0x880] sm:$0xff]
        %v753 = vld [vmem:[#allocation7 + $0x888] sm:$0xff]
        %v754 = vld [vmem:[#allocation7 + $0x890] sm:$0xff]
        %v755 = vld [vmem:[#allocation7 + $0x898] sm:$0xff]
        %v756 = vld [vmem:[#allocation7 + $0x8a0] sm:$0xff]
        %v757 = vld [vmem:[#allocation7 + $0x8a8] sm:$0xff]
        %v758 = vld [vmem:[#allocation7 + $0x8b0] sm:$0xff]
        %v759 = vld [vmem:[#allocation7 + $0x8b8] sm:$0xff]
        %v760 = vld [vmem:[#allocation7 + $0x8c0] sm:$0xff]
        %v761 = vld [vmem:[#allocation7 + $0x8c8] sm:$0xff]
        %v762 = vld [vmem:[#allocation7 + $0x8d0] sm:$0xff]
        %v763 = vld [vmem:[#allocation7 + $0x8d8] sm:$0xff]
        %v764 = vld [vmem:[#allocation7 + $0x8e0] sm:$0xff]
        %v765 = vld [vmem:[#allocation7 + $0x8e8] sm:$0xff]
        %v766 = vld [vmem:[#allocation7 + $0x8f0] sm:$0xff]
        %v767 = vld [vmem:[#allocation7 + $0x8f8] sm:$0xff]
        %v768 = vld [vmem:[#allocation7 + $0x900] sm:$0xff]
        %v769 = vld [vmem:[#allocation7 + $0x908] sm:$0xff]
        %v770 = vld [vmem:[#allocation7 + $0x910] sm:$0xff]
        %v771 = vld [vmem:[#allocation7 + $0x918] sm:$0xff]
        %v772 = vld [vmem:[#allocation7 + $0x920] sm:$0xff]
        %v773 = vld [vmem:[#allocation7 + $0x928] sm:$0xff]
        %v774 = vld [vmem:[#allocation7 + $0x930] sm:$0xff]
        %v775 = vld [vmem:[#allocation7 + $0x938] sm:$0xff]
        %v776 = vld [vmem:[#allocation7 + $0x940] sm:$0xff]
        %v777 = vld [vmem:[#allocation7 + $0x948] sm:$0xff]
        %v778 = vld [vmem:[#allocation7 + $0x950] sm:$0xff]
        %v779 = vld [vmem:[#allocation7 + $0x958] sm:$0xff]
        %v780 = vld [vmem:[#allocation7 + $0x960] sm:$0xff]
        %v781 = vld [vmem:[#allocation7 + $0x968] sm:$0xff]
        %v782 = vld [vmem:[#allocation7 + $0x970] sm:$0xff]
        %v783 = vld [vmem:[#allocation7 + $0x978] sm:$0xff]
        %v784 = vld [vmem:[#allocation7 + $0x980] sm:$0xff]
        %v785 = vld [vmem:[#allocation7 + $0x988] sm:$0xff]
        %v786 = vld [vmem:[#allocation7 + $0x990] sm:$0xff]
        %v787 = vld [vmem:[#allocation7 + $0x998] sm:$0xff]
        %v788 = vld [vmem:[#allocation7 + $0x9a0] sm:$0xff]
        %v789 = vld [vmem:[#allocation7 + $0x9a8] sm:$0xff]
        %v790 = vld [vmem:[#allocation7 + $0x9b0] sm:$0xff]
        %v791 = vld [vmem:[#allocation7 + $0x9b8] sm:$0xff]
        %v792 = vld [vmem:[#allocation7 + $0x9c0] sm:$0xff]
        %v793 = vld [vmem:[#allocation7 + $0x9c8] sm:$0xff]
        %v794 = vld [vmem:[#allocation7 + $0x9d0] sm:$0xff]
        %v795 = vld [vmem:[#allocation7 + $0x9d8] sm:$0xff]
        %v796 = vld [vmem:[#allocation7 + $0x9e0] sm:$0xff]
        %v797 = vld [vmem:[#allocation7 + $0x9e8] sm:$0xff]
        %v798 = vld [vmem:[#allocation7 + $0x9f0] sm:$0xff]
        %v799 = vld [vmem:[#allocation7 + $0x9f8] sm:$0xff]
        %v800 = vld [vmem:[#allocation7 + $0xa00] sm:$0xff]
        %v801 = vld [vmem:[#allocation7 + $0xa08] sm:$0xff]
        %v802 = vld [vmem:[#allocation7 + $0xa10] sm:$0xff]
        %v803 = vld [vmem:[#allocation7 + $0xa18] sm:$0xff]
        %v804 = vld [vmem:[#allocation7 + $0xa20] sm:$0xff]
        %v805 = vld [vmem:[#allocation7 + $0xa28] sm:$0xff]
        %v806 = vld [vmem:[#allocation7 + $0xa30] sm:$0xff]
        %v807 = vld [vmem:[#allocation7 + $0xa38] sm:$0xff]
        %v808 = vld [vmem:[#allocation7 + $0xa40] sm:$0xff]
        %v809 = vld [vmem:[#allocation7 + $0xa48] sm:$0xff]
        %v810 = vld [vmem:[#allocation7 + $0xa50] sm:$0xff]
        %v811 = vld [vmem:[#allocation7 + $0xa58] sm:$0xff]
        %v812 = vld [vmem:[#allocation7 + $0xa60] sm:$0xff]
        %v813 = vld [vmem:[#allocation7 + $0xa68] sm:$0xff]
        %v814 = vld [vmem:[#allocation7 + $0xa70] sm:$0xff]
        %v815 = vld [vmem:[#allocation7 + $0xa78] sm:$0xff]
        %v816 = vld [vmem:[#allocation7 + $0xa80] sm:$0xff]
        %v817 = vld [vmem:[#allocation7 + $0xa88] sm:$0xff]
        %v818 = vld [vmem:[#allocation7 + $0xa90] sm:$0xff]
        %v819 = vld [vmem:[#allocation7 + $0xa98] sm:$0xff]
        %v820 = vld [vmem:[#allocation7 + $0xaa0] sm:$0xff]
        %v821 = vld [vmem:[#allocation7 + $0xaa8] sm:$0xff]
        %v822 = vld [vmem:[#allocation7 + $0xab0] sm:$0xff]
        %v823 = vld [vmem:[#allocation7 + $0xab8] sm:$0xff]
        %v824 = vld [vmem:[#allocation7 + $0xac0] sm:$0xff]
        %v825 = vld [vmem:[#allocation7 + $0xac8] sm:$0xff]
        %v826 = vld [vmem:[#allocation7 + $0xad0] sm:$0xff]
        %v827 = vld [vmem:[#allocation7 + $0xad8] sm:$0xff]
        %v828 = vld [vmem:[#allocation7 + $0xae0] sm:$0xff]
        %v829 = vld [vmem:[#allocation7 + $0xae8] sm:$0xff]
        %v830 = vld [vmem:[#allocation7 + $0xaf0] sm:$0xff]
        %v831 = vld [vmem:[#allocation7 + $0xaf8] sm:$0xff]
        %v832 = vld [vmem:[#allocation7 + $0xb00] sm:$0xff]
        %v833 = vld [vmem:[#allocation7 + $0xb08] sm:$0xff]
        %v834 = vld [vmem:[#allocation7 + $0xb10] sm:$0xff]
        %v835 = vld [vmem:[#allocation7 + $0xb18] sm:$0xff]
        %v836 = vld [vmem:[#allocation7 + $0xb20] sm:$0xff]
        %v837 = vld [vmem:[#allocation7 + $0xb28] sm:$0xff]
        %v838 = vld [vmem:[#allocation7 + $0xb30] sm:$0xff]
        %v839 = vld [vmem:[#allocation7 + $0xb38] sm:$0xff]
        %v840 = vld [vmem:[#allocation7 + $0xb40] sm:$0xff]
        %v841 = vld [vmem:[#allocation7 + $0xb48] sm:$0xff]
        %v842 = vld [vmem:[#allocation7 + $0xb50] sm:$0xff]
        %v843 = vld [vmem:[#allocation7 + $0xb58] sm:$0xff]
        %v844 = vld [vmem:[#allocation7 + $0xb60] sm:$0xff]
        %v845 = vld [vmem:[#allocation7 + $0xb68] sm:$0xff]
        %v846 = vld [vmem:[#allocation7 + $0xb70] sm:$0xff]
        %v847 = vld [vmem:[#allocation7 + $0xb78] sm:$0xff]
        %v848 = vld [vmem:[#allocation7 + $0xb80] sm:$0xff]
        %v849 = vld [vmem:[#allocation7 + $0xb88] sm:$0xff]
        %v850 = vld [vmem:[#allocation7 + $0xb90] sm:$0xff]
        %v851 = vld [vmem:[#allocation7 + $0xb98] sm:$0xff]
        %v852 = vld [vmem:[#allocation7 + $0xba0] sm:$0xff]
        %v853 = vld [vmem:[#allocation7 + $0xba8] sm:$0xff]
        %v854 = vld [vmem:[#allocation7 + $0xbb0] sm:$0xff]
        %v855 = vld [vmem:[#allocation7 + $0xbb8] sm:$0xff]
        %v856 = vld [vmem:[#allocation7 + $0xbc0] sm:$0xff]
        %v857 = vld [vmem:[#allocation7 + $0xbc8] sm:$0xff]
        %v858 = vld [vmem:[#allocation7 + $0xbd0] sm:$0xff]
        %v859 = vld [vmem:[#allocation7 + $0xbd8] sm:$0xff]
        %v860 = vld [vmem:[#allocation7 + $0xbe0] sm:$0xff]
        %v861 = vld [vmem:[#allocation7 + $0xbe8] sm:$0xff]
        %v862 = vld [vmem:[#allocation7 + $0xbf0] sm:$0xff]
        %v863 = vld [vmem:[#allocation7 + $0xbf8] sm:$0xff]
        %v864 = vld [vmem:[#allocation7 + $0xc00] sm:$0xff]
        %v865 = vld [vmem:[#allocation7 + $0xc08] sm:$0xff]
        %v866 = vld [vmem:[#allocation7 + $0xc10] sm:$0xff]
        %v867 = vld [vmem:[#allocation7 + $0xc18] sm:$0xff]
        %v868 = vld [vmem:[#allocation7 + $0xc20] sm:$0xff]
        %v869 = vld [vmem:[#allocation7 + $0xc28] sm:$0xff]
        %v870 = vld [vmem:[#allocation7 + $0xc30] sm:$0xff]
        %v871 = vld [vmem:[#allocation7 + $0xc38] sm:$0xff]
        %v872 = vld [vmem:[#allocation7 + $0xc40] sm:$0xff]
        %v873 = vld [vmem:[#allocation7 + $0xc48] sm:$0xff]
        %v874 = vld [vmem:[#allocation7 + $0xc50] sm:$0xff]
        %v875 = vld [vmem:[#allocation7 + $0xc58] sm:$0xff]
        %v876 = vld [vmem:[#allocation7 + $0xc60] sm:$0xff]
        %v877 = vld [vmem:[#allocation7 + $0xc68] sm:$0xff]
        %v878 = vld [vmem:[#allocation7 + $0xc70] sm:$0xff]
        %v879 = vld [vmem:[#allocation7 + $0xc78] sm:$0xff]
        %v880 = vld [vmem:[#allocation7 + $0xc80] sm:$0xff]
        %v881 = vld [vmem:[#allocation7 + $0xc88] sm:$0xff]
        %v882 = vld [vmem:[#allocation7 + $0xc90] sm:$0xff]
        %v883 = vld [vmem:[#allocation7 + $0xc98] sm:$0xff]
        %v884 = vld [vmem:[#allocation7 + $0xca0] sm:$0xff]
        %v885 = vld [vmem:[#allocation7 + $0xca8] sm:$0xff]
        %v886 = vld [vmem:[#allocation7 + $0xcb0] sm:$0xff]
        %v887 = vld [vmem:[#allocation7 + $0xcb8] sm:$0xff]
        %v888 = vld [vmem:[#allocation7 + $0xcc0] sm:$0xff]
        %v889 = vld [vmem:[#allocation7 + $0xcc8] sm:$0xff]
        %v890 = vld [vmem:[#allocation7 + $0xcd0] sm:$0xff]
        %v891 = vld [vmem:[#allocation7 + $0xcd8] sm:$0xff]
        %v892 = vld [vmem:[#allocation7 + $0xce0] sm:$0xff]
        %v893 = vld [vmem:[#allocation7 + $0xce8] sm:$0xff]
        %v894 = vld [vmem:[#allocation7 + $0xcf0] sm:$0xff]
        %v895 = vld [vmem:[#allocation7 + $0xcf8] sm:$0xff]
        %v896 = vld [vmem:[#allocation7 + $0xd00] sm:$0xff]
        %v897 = vld [vmem:[#allocation7 + $0xd08] sm:$0xff]
        %v898 = vld [vmem:[#allocation7 + $0xd10] sm:$0xff]
        %v899 = vld [vmem:[#allocation7 + $0xd18] sm:$0xff]
        %v900 = vld [vmem:[#allocation7 + $0xd20] sm:$0xff]
        %v901 = vld [vmem:[#allocation7 + $0xd28] sm:$0xff]
        %v902 = vld [vmem:[#allocation7 + $0xd30] sm:$0xff]
        %v903 = vld [vmem:[#allocation7 + $0xd38] sm:$0xff]
        %v904 = vld [vmem:[#allocation7 + $0xd40] sm:$0xff]
        %v905 = vld [vmem:[#allocation7 + $0xd48] sm:$0xff]
        %v906 = vld [vmem:[#allocation7 + $0xd50] sm:$0xff]
        %v907 = vld [vmem:[#allocation7 + $0xd58] sm:$0xff]
        %v908 = vld [vmem:[#allocation7 + $0xd60] sm:$0xff]
        %v909 = vld [vmem:[#allocation7 + $0xd68] sm:$0xff]
        %v910 = vld [vmem:[#allocation7 + $0xd70] sm:$0xff]
        %v911 = vld [vmem:[#allocation7 + $0xd78] sm:$0xff]
        %v912 = vld [vmem:[#allocation7 + $0xd80] sm:$0xff]
        %v913 = vld [vmem:[#allocation7 + $0xd88] sm:$0xff]
        %v914 = vld [vmem:[#allocation7 + $0xd90] sm:$0xff]
        %v915 = vld [vmem:[#allocation7 + $0xd98] sm:$0xff]
        %v916 = vld [vmem:[#allocation7 + $0xda0] sm:$0xff]
        %v917 = vld [vmem:[#allocation7 + $0xda8] sm:$0xff]
        %v918 = vld [vmem:[#allocation7 + $0xdb0] sm:$0xff]
        %v919 = vld [vmem:[#allocation7 + $0xdb8] sm:$0xff]
        %v920 = vld [vmem:[#allocation7 + $0xdc0] sm:$0xff]
        %v921 = vld [vmem:[#allocation7 + $0xdc8] sm:$0xff]
        %v922 = vld [vmem:[#allocation7 + $0xdd0] sm:$0xff]
        %v923 = vld [vmem:[#allocation7 + $0xdd8] sm:$0xff]
        %v924 = vld [vmem:[#allocation7 + $0xde0] sm:$0xff]
        %v925 = vld [vmem:[#allocation7 + $0xde8] sm:$0xff]
        %v926 = vld [vmem:[#allocation7 + $0xdf0] sm:$0xff]
        %v927 = vld [vmem:[#allocation7 + $0xdf8] sm:$0xff]
        %v928 = vld [vmem:[#allocation7 + $0xe00] sm:$0xff]
        %v929 = vld [vmem:[#allocation7 + $0xe08] sm:$0xff]
        %v930 = vld [vmem:[#allocation7 + $0xe10] sm:$0xff]
        %v931 = vld [vmem:[#allocation7 + $0xe18] sm:$0xff]
        %v932 = vld [vmem:[#allocation7 + $0xe20] sm:$0xff]
        %v933 = vld [vmem:[#allocation7 + $0xe28] sm:$0xff]
        %v934 = vld [vmem:[#allocation7 + $0xe30] sm:$0xff]
        %v935 = vld [vmem:[#allocation7 + $0xe38] sm:$0xff]
        %v936 = vld [vmem:[#allocation7 + $0xe40] sm:$0xff]
        %v937 = vld [vmem:[#allocation7 + $0xe48] sm:$0xff]
        %v938 = vld [vmem:[#allocation7 + $0xe50] sm:$0xff]
        %v939 = vld [vmem:[#allocation7 + $0xe58] sm:$0xff]
        %v940 = vld [vmem:[#allocation7 + $0xe60] sm:$0xff]
        %v941 = vld [vmem:[#allocation7 + $0xe68] sm:$0xff]
        %v942 = vld [vmem:[#allocation7 + $0xe70] sm:$0xff]
        %v943 = vld [vmem:[#allocation7 + $0xe78] sm:$0xff]
        %v944 = vld [vmem:[#allocation7 + $0xe80] sm:$0xff]
        %v945 = vld [vmem:[#allocation7 + $0xe88] sm:$0xff]
        %v946 = vld [vmem:[#allocation7 + $0xe90] sm:$0xff]
        %v947 = vld [vmem:[#allocation7 + $0xe98] sm:$0xff]
        %v948 = vld [vmem:[#allocation7 + $0xea0] sm:$0xff]
        %v949 = vld [vmem:[#allocation7 + $0xea8] sm:$0xff]
        %v950 = vld [vmem:[#allocation7 + $0xeb0] sm:$0xff]
        %v951 = vld [vmem:[#allocation7 + $0xeb8] sm:$0xff]
        %v952 = vld [vmem:[#allocation7 + $0xec0] sm:$0xff]
        %v953 = vld [vmem:[#allocation7 + $0xec8] sm:$0xff]
        %v954 = vld [vmem:[#allocation7 + $0xed0] sm:$0xff]
        %v955 = vld [vmem:[#allocation7 + $0xed8] sm:$0xff]
        %v956 = vld [vmem:[#allocation7 + $0xee0] sm:$0xff]
        %v957 = vld [vmem:[#allocation7 + $0xee8] sm:$0xff]
        %v958 = vld [vmem:[#allocation7 + $0xef0] sm:$0xff]
        %v959 = vld [vmem:[#allocation7 + $0xef8] sm:$0xff]
        %v960 = vld [vmem:[#allocation7 + $0xf00] sm:$0xff]
        %v961 = vld [vmem:[#allocation7 + $0xf08] sm:$0xff]
        %v962 = vld [vmem:[#allocation7 + $0xf10] sm:$0xff]
        %v963 = vld [vmem:[#allocation7 + $0xf18] sm:$0xff]
        %v964 = vld [vmem:[#allocation7 + $0xf20] sm:$0xff]
        %v965 = vld [vmem:[#allocation7 + $0xf28] sm:$0xff]
        %v966 = vld [vmem:[#allocation7 + $0xf30] sm:$0xff]
        %v967 = vld [vmem:[#allocation7 + $0xf38] sm:$0xff]
        %v968 = vld [vmem:[#allocation7 + $0xf40] sm:$0xff]
        %v969 = vld [vmem:[#allocation7 + $0xf48] sm:$0xff]
        %v970 = vld [vmem:[#allocation7 + $0xf50] sm:$0xff]
        %v971 = vld [vmem:[#allocation7 + $0xf58] sm:$0xff]
        %v972 = vld [vmem:[#allocation7 + $0xf60] sm:$0xff]
        %v973 = vld [vmem:[#allocation7 + $0xf68] sm:$0xff]
        %v974 = vld [vmem:[#allocation7 + $0xf70] sm:$0xff]
        %v975 = vld [vmem:[#allocation7 + $0xf78] sm:$0xff]
        %v976 = vld [vmem:[#allocation7 + $0xf80] sm:$0xff]
        %v977 = vld [vmem:[#allocation7 + $0xf88] sm:$0xff]
        %v978 = vld [vmem:[#allocation7 + $0xf90] sm:$0xff]
        %v979 = vld [vmem:[#allocation7 + $0xf98] sm:$0xff]
        %v980 = vld [vmem:[#allocation7 + $0xfa0] sm:$0xff]
        %v981 = vld [vmem:[#allocation7 + $0xfa8] sm:$0xff]
        %v982 = vld [vmem:[#allocation7 + $0xfb0] sm:$0xff]
        %v983 = vld [vmem:[#allocation7 + $0xfb8] sm:$0xff]
        %v984 = vld [vmem:[#allocation7 + $0xfc0] sm:$0xff]
        %v985 = vld [vmem:[#allocation7 + $0xfc8] sm:$0xff]
        %v986 = vld [vmem:[#allocation7 + $0xfd0] sm:$0xff]
        %v987 = vld [vmem:[#allocation7 + $0xfd8] sm:$0xff]
        %v988 = vld [vmem:[#allocation7 + $0xfe0] sm:$0xff]
        %v989 = vld [vmem:[#allocation7 + $0xfe8] sm:$0xff]
        %v990 = vld [vmem:[#allocation7 + $0xff0] sm:$0xff]
        %v991 = vld [vmem:[#allocation7 + $0xff8] sm:$0xff]
        %v992 = vld [vmem:[#allocation7 + $0x1000] sm:$0xff]
        %v993 = vld [vmem:[#allocation7 + $0x1008] sm:$0xff]
        %v994 = vld [vmem:[#allocation7 + $0x1010] sm:$0xff]
        %v995 = vld [vmem:[#allocation7 + $0x1018] sm:$0xff]
        %v996 = vld [vmem:[#allocation7 + $0x1020] sm:$0xff]
        %v997 = vld [vmem:[#allocation7 + $0x1028] sm:$0xff]
        %v998 = vld [vmem:[#allocation7 + $0x1030] sm:$0xff]
        %v999 = vld [vmem:[#allocation7 + $0x1038] sm:$0xff]
        %v1000 = vld [vmem:[#allocation7 + $0x1040] sm:$0xff]
        %v1001 = vld [vmem:[#allocation7 + $0x1048] sm:$0xff]
        %v1002 = vld [vmem:[#allocation7 + $0x1050] sm:$0xff]
        %v1003 = vld [vmem:[#allocation7 + $0x1058] sm:$0xff]
        %v1004 = vld [vmem:[#allocation7 + $0x1060] sm:$0xff]
        %v1005 = vld [vmem:[#allocation7 + $0x1068] sm:$0xff]
        %v1006 = vld [vmem:[#allocation7 + $0x1070] sm:$0xff]
        %v1007 = vld [vmem:[#allocation7 + $0x1078] sm:$0xff]
        %v1008 = vld [vmem:[#allocation7 + $0x1080] sm:$0xff]
        %v1009 = vld [vmem:[#allocation7 + $0x1088] sm:$0xff]
        %v1010 = vld [vmem:[#allocation7 + $0x1090] sm:$0xff]
        %v1011 = vld [vmem:[#allocation7 + $0x1098] sm:$0xff]
        %v1012 = vld [vmem:[#allocation7 + $0x10a0] sm:$0xff]
        %v1013 = vld [vmem:[#allocation7 + $0x10a8] sm:$0xff]
        %v1014 = vld [vmem:[#allocation7 + $0x10b0] sm:$0xff]
        %v1015 = vld [vmem:[#allocation7 + $0x10b8] sm:$0xff]
        %v1016 = vld [vmem:[#allocation7 + $0x10c0] sm:$0xff]
        %v1017 = vld [vmem:[#allocation7 + $0x10c8] sm:$0xff]
        %v1018 = vld [vmem:[#allocation7 + $0x10d0] sm:$0xff]
        %v1019 = vld [vmem:[#allocation7 + $0x10d8] sm:$0xff]
        %v1020 = vld [vmem:[#allocation7 + $0x10e0] sm:$0xff]
        %v1021 = vld [vmem:[#allocation7 + $0x10e8] sm:$0xff]
        %v1022 = vld [vmem:[#allocation7 + $0x10f0] sm:$0xff]
        %v1023 = vld [vmem:[#allocation7 + $0x10f8] sm:$0xff]
        %v1024 = vld [vmem:[#allocation7 + $0x1100] sm:$0xff]
        %v1025 = vld [vmem:[#allocation7 + $0x1108] sm:$0xff]
        %v1026 = vld [vmem:[#allocation7 + $0x1110] sm:$0xff]
        %v1027 = vld [vmem:[#allocation7 + $0x1118] sm:$0xff]
        %v1028 = vld [vmem:[#allocation7 + $0x1120] sm:$0xff]
        %v1029 = vld [vmem:[#allocation7 + $0x1128] sm:$0xff]
        %v1030 = vld [vmem:[#allocation7 + $0x1130] sm:$0xff]
        %v1031 = vld [vmem:[#allocation7 + $0x1138] sm:$0xff]
        %v1032 = vld [vmem:[#allocation7 + $0x1140] sm:$0xff]
        %v1033 = vld [vmem:[#allocation7 + $0x1148] sm:$0xff]
        %v1034 = vld [vmem:[#allocation7 + $0x1150] sm:$0xff]
        %v1035 = vld [vmem:[#allocation7 + $0x1158] sm:$0xff]
        %v1036 = vld [vmem:[#allocation7 + $0x1160] sm:$0xff]
        %v1037 = vld [vmem:[#allocation7 + $0x1168] sm:$0xff]
        %v1038 = vld [vmem:[#allocation7 + $0x1170] sm:$0xff]
        %v1039 = vld [vmem:[#allocation7 + $0x1178] sm:$0xff]
        %v1040 = vld [vmem:[#allocation7 + $0x1180] sm:$0xff]
        %v1041 = vld [vmem:[#allocation7 + $0x1188] sm:$0xff]
        %v1042 = vld [vmem:[#allocation7 + $0x1190] sm:$0xff]
        %v1043 = vld [vmem:[#allocation7 + $0x1198] sm:$0xff]
        %v1044 = vld [vmem:[#allocation7 + $0x11a0] sm:$0xff]
        %v1045 = vld [vmem:[#allocation7 + $0x11a8] sm:$0xff]
        %v1046 = vld [vmem:[#allocation7 + $0x11b0] sm:$0xff]
        %v1047 = vld [vmem:[#allocation7 + $0x11b8] sm:$0xff]
        %v1048 = vld [vmem:[#allocation7 + $0x11c0] sm:$0xff]
        %v1049 = vld [vmem:[#allocation7 + $0x11c8] sm:$0xff]
        %v1050 = vld [vmem:[#allocation7 + $0x11d0] sm:$0xff]
        %v1051 = vld [vmem:[#allocation7 + $0x11d8] sm:$0xff]
        %v1052 = vld [vmem:[#allocation7 + $0x11e0] sm:$0xff]
        %v1053 = vld [vmem:[#allocation7 + $0x11e8] sm:$0xff]
        %v1054 = vld [vmem:[#allocation7 + $0x11f0] sm:$0xff]
        %v1055 = vld [vmem:[#allocation7 + $0x11f8] sm:$0xff]
        %v1056 = vld [vmem:[#allocation7 + $0x1200] sm:$0xff]
        %v1057 = vld [vmem:[#allocation7 + $0x1208] sm:$0xff]
        %v1058 = vld [vmem:[#allocation7 + $0x1210] sm:$0xff]
        %v1059 = vld [vmem:[#allocation7 + $0x1218] sm:$0xff]
        %v1060 = vld [vmem:[#allocation7 + $0x1220] sm:$0xff]
        %v1061 = vld [vmem:[#allocation7 + $0x1228] sm:$0xff]
        %v1062 = vld [vmem:[#allocation7 + $0x1230] sm:$0xff]
        %v1063 = vld [vmem:[#allocation7 + $0x1238] sm:$0xff]
        %v1064 = vld [vmem:[#allocation7 + $0x1240] sm:$0xff]
        %v1065 = vld [vmem:[#allocation7 + $0x1248] sm:$0xff]
        %v1066 = vld [vmem:[#allocation7 + $0x1250] sm:$0xff]
        %v1067 = vld [vmem:[#allocation7 + $0x1258] sm:$0xff]
        %v1068 = vld [vmem:[#allocation7 + $0x1260] sm:$0xff]
        %v1069 = vld [vmem:[#allocation7 + $0x1268] sm:$0xff]
        %v1070 = vld [vmem:[#allocation7 + $0x1270] sm:$0xff]
        %v1071 = vld [vmem:[#allocation7 + $0x1278] sm:$0xff]
        %v1072 = vld [vmem:[#allocation7 + $0x1280] sm:$0xff]
        %v1073 = vld [vmem:[#allocation7 + $0x1288] sm:$0xff]
        %v1074 = vld [vmem:[#allocation7 + $0x1290] sm:$0xff]
        %v1075 = vld [vmem:[#allocation7 + $0x1298] sm:$0xff]
        %v1076 = vld [vmem:[#allocation7 + $0x12a0] sm:$0xff]
        %v1077 = vld [vmem:[#allocation7 + $0x12a8] sm:$0xff]
        %v1078 = vld [vmem:[#allocation7 + $0x12b0] sm:$0xff]
        %v1079 = vld [vmem:[#allocation7 + $0x12b8] sm:$0xff]
        %v1080 = vld [vmem:[#allocation7 + $0x12c0] sm:$0xff]
        %v1081 = vld [vmem:[#allocation7 + $0x12c8] sm:$0xff]
        %v1082 = vld [vmem:[#allocation7 + $0x12d0] sm:$0xff]
        %v1083 = vld [vmem:[#allocation7 + $0x12d8] sm:$0xff]
        %v1084 = vld [vmem:[#allocation7 + $0x12e0] sm:$0xff]
        %v1085 = vld [vmem:[#allocation7 + $0x12e8] sm:$0xff]
        %v1086 = vld [vmem:[#allocation7 + $0x12f0] sm:$0xff]
        %v1087 = vld [vmem:[#allocation7 + $0x12f8] sm:$0xff]
        %v1088 = vld [vmem:[#allocation7 + $0x1300] sm:$0xff]
        %v1089 = vld [vmem:[#allocation7 + $0x1308] sm:$0xff]
        %v1090 = vld [vmem:[#allocation7 + $0x1310] sm:$0xff]
        %v1091 = vld [vmem:[#allocation7 + $0x1318] sm:$0xff]
        %v1092 = vld [vmem:[#allocation7 + $0x1320] sm:$0xff]
        %v1093 = vld [vmem:[#allocation7 + $0x1328] sm:$0xff]
        %v1094 = vld [vmem:[#allocation7 + $0x1330] sm:$0xff]
        %v1095 = vld [vmem:[#allocation7 + $0x1338] sm:$0xff]
        %v1096 = vld [vmem:[#allocation7 + $0x1340] sm:$0xff]
        %v1097 = vld [vmem:[#allocation7 + $0x1348] sm:$0xff]
        %v1098 = vld [vmem:[#allocation7 + $0x1350] sm:$0xff]
        %v1099 = vld [vmem:[#allocation7 + $0x1358] sm:$0xff]
        %v1100 = vld [vmem:[#allocation7 + $0x1360] sm:$0xff]
        %v1101 = vld [vmem:[#allocation7 + $0x1368] sm:$0xff]
        %v1102 = vld [vmem:[#allocation7 + $0x1370] sm:$0xff]
        %v1103 = vld [vmem:[#allocation7 + $0x1378] sm:$0xff]
        %v1104 = vld [vmem:[#allocation7 + $0x1380] sm:$0xff]
        %v1105 = vld [vmem:[#allocation7 + $0x1388] sm:$0xff]
        %v1106 = vld [vmem:[#allocation7 + $0x1390] sm:$0xff]
        %v1107 = vld [vmem:[#allocation7 + $0x1398] sm:$0xff]
        %v1108 = vld [vmem:[#allocation7 + $0x13a0] sm:$0xff]
        %v1109 = vld [vmem:[#allocation7 + $0x13a8] sm:$0xff]
        %v1110 = vld [vmem:[#allocation7 + $0x13b0] sm:$0xff]
        %v1111 = vld [vmem:[#allocation7 + $0x13b8] sm:$0xff]
        %v1112 = vld [vmem:[#allocation7 + $0x13c0] sm:$0xff]
        %v1113 = vld [vmem:[#allocation7 + $0x13c8] sm:$0xff]
        %v1114 = vld [vmem:[#allocation7 + $0x13d0] sm:$0xff]
        %v1115 = vld [vmem:[#allocation7 + $0x13d8] sm:$0xff]
        %v1116 = vld [vmem:[#allocation7 + $0x13e0] sm:$0xff]
        %v1117 = vld [vmem:[#allocation7 + $0x13e8] sm:$0xff]
        %v1118 = vld [vmem:[#allocation7 + $0x13f0] sm:$0xff]
        %v1119 = vld [vmem:[#allocation7 + $0x13f8] sm:$0xff]
        %v1760 = vunpack.c.l.b16 %v480
        %v1761 = vunpack.c.h.b16 %v480
        %v1762 = vunpack.c.l.b16 %v481
        %v1763 = vunpack.c.h.b16 %v481
        %v1764 = vunpack.c.l.b16 %v482
        %v1765 = vunpack.c.h.b16 %v482
        %v1766 = vunpack.c.l.b16 %v483
        %v1767 = vunpack.c.h.b16 %v483
        %v1768 = vunpack.c.l.b16 %v484
        %v1769 = vunpack.c.h.b16 %v484
        %v1770 = vunpack.c.l.b16 %v485
        %v1771 = vunpack.c.h.b16 %v485
        %v1772 = vunpack.c.l.b16 %v486
        %v1773 = vunpack.c.h.b16 %v486
        %v1774 = vunpack.c.l.b16 %v487
        %v1775 = vunpack.c.h.b16 %v487
        %v1776 = vunpack.c.l.b16 %v488
        %v1777 = vunpack.c.h.b16 %v488
        %v1778 = vunpack.c.l.b16 %v489
        %v1779 = vunpack.c.h.b16 %v489
        %v1780 = vunpack.c.l.b16 %v490
        %v1781 = vunpack.c.h.b16 %v490
        %v1782 = vunpack.c.l.b16 %v491
        %v1783 = vunpack.c.h.b16 %v491
        %v1784 = vunpack.c.l.b16 %v492
        %v1785 = vunpack.c.h.b16 %v492
        %v1786 = vunpack.c.l.b16 %v493
        %v1787 = vunpack.c.h.b16 %v493
        %v1788 = vunpack.c.l.b16 %v494
        %v1789 = vunpack.c.h.b16 %v494
        %v1790 = vunpack.c.l.b16 %v495
        %v1791 = vunpack.c.h.b16 %v495
        %v1792 = vunpack.c.l.b16 %v496
        %v1793 = vunpack.c.h.b16 %v496
        %v1794 = vunpack.c.l.b16 %v497
        %v1795 = vunpack.c.h.b16 %v497
        %v1796 = vunpack.c.l.b16 %v498
        %v1797 = vunpack.c.h.b16 %v498
        %v1798 = vunpack.c.l.b16 %v499
        %v1799 = vunpack.c.h.b16 %v499
        %v1800 = vunpack.c.l.b16 %v500
        %v1801 = vunpack.c.h.b16 %v500
        %v1802 = vunpack.c.l.b16 %v501
        %v1803 = vunpack.c.h.b16 %v501
        %v1804 = vunpack.c.l.b16 %v502
        %v1805 = vunpack.c.h.b16 %v502
        %v1806 = vunpack.c.l.b16 %v503
        %v1807 = vunpack.c.h.b16 %v503
        %v1808 = vunpack.c.l.b16 %v504
        %v1809 = vunpack.c.h.b16 %v504
        %v1810 = vunpack.c.l.b16 %v505
        %v1811 = vunpack.c.h.b16 %v505
        %v1812 = vunpack.c.l.b16 %v506
        %v1813 = vunpack.c.h.b16 %v506
        %v1814 = vunpack.c.l.b16 %v507
        %v1815 = vunpack.c.h.b16 %v507
        %v1816 = vunpack.c.l.b16 %v508
        %v1817 = vunpack.c.h.b16 %v508
        %v1818 = vunpack.c.l.b16 %v509
        %v1819 = vunpack.c.h.b16 %v509
        %v1820 = vunpack.c.l.b16 %v510
        %v1821 = vunpack.c.h.b16 %v510
        %v1822 = vunpack.c.l.b16 %v511
        %v1823 = vunpack.c.h.b16 %v511
        %v1824 = vunpack.c.l.b16 %v512
        %v1825 = vunpack.c.h.b16 %v512
        %v1826 = vunpack.c.l.b16 %v513
        %v1827 = vunpack.c.h.b16 %v513
        %v1828 = vunpack.c.l.b16 %v514
        %v1829 = vunpack.c.h.b16 %v514
        %v1830 = vunpack.c.l.b16 %v515
        %v1831 = vunpack.c.h.b16 %v515
        %v1832 = vunpack.c.l.b16 %v516
        %v1833 = vunpack.c.h.b16 %v516
        %v1834 = vunpack.c.l.b16 %v517
        %v1835 = vunpack.c.h.b16 %v517
        %v1836 = vunpack.c.l.b16 %v518
        %v1837 = vunpack.c.h.b16 %v518
        %v1838 = vunpack.c.l.b16 %v519
        %v1839 = vunpack.c.h.b16 %v519
        %v1840 = vunpack.c.l.b16 %v520
        %v1841 = vunpack.c.h.b16 %v520
        %v1842 = vunpack.c.l.b16 %v521
        %v1843 = vunpack.c.h.b16 %v521
        %v1844 = vunpack.c.l.b16 %v522
        %v1845 = vunpack.c.h.b16 %v522
        %v1846 = vunpack.c.l.b16 %v523
        %v1847 = vunpack.c.h.b16 %v523
        %v1848 = vunpack.c.l.b16 %v524
        %v1849 = vunpack.c.h.b16 %v524
        %v1850 = vunpack.c.l.b16 %v525
        %v1851 = vunpack.c.h.b16 %v525
        %v1852 = vunpack.c.l.b16 %v526
        %v1853 = vunpack.c.h.b16 %v526
        %v1854 = vunpack.c.l.b16 %v527
        %v1855 = vunpack.c.h.b16 %v527
        %v1856 = vunpack.c.l.b16 %v528
        %v1857 = vunpack.c.h.b16 %v528
        %v1858 = vunpack.c.l.b16 %v529
        %v1859 = vunpack.c.h.b16 %v529
        %v1860 = vunpack.c.l.b16 %v530
        %v1861 = vunpack.c.h.b16 %v530
        %v1862 = vunpack.c.l.b16 %v531
        %v1863 = vunpack.c.h.b16 %v531
        %v1864 = vunpack.c.l.b16 %v532
        %v1865 = vunpack.c.h.b16 %v532
        %v1866 = vunpack.c.l.b16 %v533
        %v1867 = vunpack.c.h.b16 %v533
        %v1868 = vunpack.c.l.b16 %v534
        %v1869 = vunpack.c.h.b16 %v534
        %v1870 = vunpack.c.l.b16 %v535
        %v1871 = vunpack.c.h.b16 %v535
        %v1872 = vunpack.c.l.b16 %v536
        %v1873 = vunpack.c.h.b16 %v536
        %v1874 = vunpack.c.l.b16 %v537
        %v1875 = vunpack.c.h.b16 %v537
        %v1876 = vunpack.c.l.b16 %v538
        %v1877 = vunpack.c.h.b16 %v538
        %v1878 = vunpack.c.l.b16 %v539
        %v1879 = vunpack.c.h.b16 %v539
        %v1880 = vunpack.c.l.b16 %v540
        %v1881 = vunpack.c.h.b16 %v540
        %v1882 = vunpack.c.l.b16 %v541
        %v1883 = vunpack.c.h.b16 %v541
        %v1884 = vunpack.c.l.b16 %v542
        %v1885 = vunpack.c.h.b16 %v542
        %v1886 = vunpack.c.l.b16 %v543
        %v1887 = vunpack.c.h.b16 %v543
        %v1888 = vunpack.c.l.b16 %v544
        %v1889 = vunpack.c.h.b16 %v544
        %v1890 = vunpack.c.l.b16 %v545
        %v1891 = vunpack.c.h.b16 %v545
        %v1892 = vunpack.c.l.b16 %v546
        %v1893 = vunpack.c.h.b16 %v546
        %v1894 = vunpack.c.l.b16 %v547
        %v1895 = vunpack.c.h.b16 %v547
        %v1896 = vunpack.c.l.b16 %v548
        %v1897 = vunpack.c.h.b16 %v548
        %v1898 = vunpack.c.l.b16 %v549
        %v1899 = vunpack.c.h.b16 %v549
        %v1900 = vunpack.c.l.b16 %v550
        %v1901 = vunpack.c.h.b16 %v550
        %v1902 = vunpack.c.l.b16 %v551
        %v1903 = vunpack.c.h.b16 %v551
        %v1904 = vunpack.c.l.b16 %v552
        %v1905 = vunpack.c.h.b16 %v552
        %v1906 = vunpack.c.l.b16 %v553
        %v1907 = vunpack.c.h.b16 %v553
        %v1908 = vunpack.c.l.b16 %v554
        %v1909 = vunpack.c.h.b16 %v554
        %v1910 = vunpack.c.l.b16 %v555
        %v1911 = vunpack.c.h.b16 %v555
        %v1912 = vunpack.c.l.b16 %v556
        %v1913 = vunpack.c.h.b16 %v556
        %v1914 = vunpack.c.l.b16 %v557
        %v1915 = vunpack.c.h.b16 %v557
        %v1916 = vunpack.c.l.b16 %v558
        %v1917 = vunpack.c.h.b16 %v558
        %v1918 = vunpack.c.l.b16 %v559
        %v1919 = vunpack.c.h.b16 %v559
        %v1920 = vunpack.c.l.b16 %v560
        %v1921 = vunpack.c.h.b16 %v560
        %v1922 = vunpack.c.l.b16 %v561
        %v1923 = vunpack.c.h.b16 %v561
        %v1924 = vunpack.c.l.b16 %v562
        %v1925 = vunpack.c.h.b16 %v562
        %v1926 = vunpack.c.l.b16 %v563
        %v1927 = vunpack.c.h.b16 %v563
        %v1928 = vunpack.c.l.b16 %v564
        %v1929 = vunpack.c.h.b16 %v564
        %v1930 = vunpack.c.l.b16 %v565
        %v1931 = vunpack.c.h.b16 %v565
        %v1932 = vunpack.c.l.b16 %v566
        %v1933 = vunpack.c.h.b16 %v566
        %v1934 = vunpack.c.l.b16 %v567
        %v1935 = vunpack.c.h.b16 %v567
        %v1936 = vunpack.c.l.b16 %v568
        %v1937 = vunpack.c.h.b16 %v568
        %v1938 = vunpack.c.l.b16 %v569
        %v1939 = vunpack.c.h.b16 %v569
        %v1940 = vunpack.c.l.b16 %v570
        %v1941 = vunpack.c.h.b16 %v570
        %v1942 = vunpack.c.l.b16 %v571
        %v1943 = vunpack.c.h.b16 %v571
        %v1944 = vunpack.c.l.b16 %v572
        %v1945 = vunpack.c.h.b16 %v572
        %v1946 = vunpack.c.l.b16 %v573
        %v1947 = vunpack.c.h.b16 %v573
        %v1948 = vunpack.c.l.b16 %v574
        %v1949 = vunpack.c.h.b16 %v574
        %v1950 = vunpack.c.l.b16 %v575
        %v1951 = vunpack.c.h.b16 %v575
        %v1952 = vunpack.c.l.b16 %v576
        %v1953 = vunpack.c.h.b16 %v576
        %v1954 = vunpack.c.l.b16 %v577
        %v1955 = vunpack.c.h.b16 %v577
        %v1956 = vunpack.c.l.b16 %v578
        %v1957 = vunpack.c.h.b16 %v578
        %v1958 = vunpack.c.l.b16 %v579
        %v1959 = vunpack.c.h.b16 %v579
        %v1960 = vunpack.c.l.b16 %v580
        %v1961 = vunpack.c.h.b16 %v580
        %v1962 = vunpack.c.l.b16 %v581
        %v1963 = vunpack.c.h.b16 %v581
        %v1964 = vunpack.c.l.b16 %v582
        %v1965 = vunpack.c.h.b16 %v582
        %v1966 = vunpack.c.l.b16 %v583
        %v1967 = vunpack.c.h.b16 %v583
        %v1968 = vunpack.c.l.b16 %v584
        %v1969 = vunpack.c.h.b16 %v584
        %v1970 = vunpack.c.l.b16 %v585
        %v1971 = vunpack.c.h.b16 %v585
        %v1972 = vunpack.c.l.b16 %v586
        %v1973 = vunpack.c.h.b16 %v586
        %v1974 = vunpack.c.l.b16 %v587
        %v1975 = vunpack.c.h.b16 %v587
        %v1976 = vunpack.c.l.b16 %v588
        %v1977 = vunpack.c.h.b16 %v588
        %v1978 = vunpack.c.l.b16 %v589
        %v1979 = vunpack.c.h.b16 %v589
        %v1980 = vunpack.c.l.b16 %v590
        %v1981 = vunpack.c.h.b16 %v590
        %v1982 = vunpack.c.l.b16 %v591
        %v1983 = vunpack.c.h.b16 %v591
        %v1984 = vunpack.c.l.b16 %v592
        %v1985 = vunpack.c.h.b16 %v592
        %v1986 = vunpack.c.l.b16 %v593
        %v1987 = vunpack.c.h.b16 %v593
        %v1988 = vunpack.c.l.b16 %v594
        %v1989 = vunpack.c.h.b16 %v594
        %v1990 = vunpack.c.l.b16 %v595
        %v1991 = vunpack.c.h.b16 %v595
        %v1992 = vunpack.c.l.b16 %v596
        %v1993 = vunpack.c.h.b16 %v596
        %v1994 = vunpack.c.l.b16 %v597
        %v1995 = vunpack.c.h.b16 %v597
        %v1996 = vunpack.c.l.b16 %v598
        %v1997 = vunpack.c.h.b16 %v598
        %v1998 = vunpack.c.l.b16 %v599
        %v1999 = vunpack.c.h.b16 %v599
        %v2000 = vunpack.c.l.b16 %v600
        %v2001 = vunpack.c.h.b16 %v600
        %v2002 = vunpack.c.l.b16 %v601
        %v2003 = vunpack.c.h.b16 %v601
        %v2004 = vunpack.c.l.b16 %v602
        %v2005 = vunpack.c.h.b16 %v602
        %v2006 = vunpack.c.l.b16 %v603
        %v2007 = vunpack.c.h.b16 %v603
        %v2008 = vunpack.c.l.b16 %v604
        %v2009 = vunpack.c.h.b16 %v604
        %v2010 = vunpack.c.l.b16 %v605
        %v2011 = vunpack.c.h.b16 %v605
        %v2012 = vunpack.c.l.b16 %v606
        %v2013 = vunpack.c.h.b16 %v606
        %v2014 = vunpack.c.l.b16 %v607
        %v2015 = vunpack.c.h.b16 %v607
        %v2016 = vunpack.c.l.b16 %v608
        %v2017 = vunpack.c.h.b16 %v608
        %v2018 = vunpack.c.l.b16 %v609
        %v2019 = vunpack.c.h.b16 %v609
        %v2020 = vunpack.c.l.b16 %v610
        %v2021 = vunpack.c.h.b16 %v610
        %v2022 = vunpack.c.l.b16 %v611
        %v2023 = vunpack.c.h.b16 %v611
        %v2024 = vunpack.c.l.b16 %v612
        %v2025 = vunpack.c.h.b16 %v612
        %v2026 = vunpack.c.l.b16 %v613
        %v2027 = vunpack.c.h.b16 %v613
        %v2028 = vunpack.c.l.b16 %v614
        %v2029 = vunpack.c.h.b16 %v614
        %v2030 = vunpack.c.l.b16 %v615
        %v2031 = vunpack.c.h.b16 %v615
        %v2032 = vunpack.c.l.b16 %v616
        %v2033 = vunpack.c.h.b16 %v616
        %v2034 = vunpack.c.l.b16 %v617
        %v2035 = vunpack.c.h.b16 %v617
        %v2036 = vunpack.c.l.b16 %v618
        %v2037 = vunpack.c.h.b16 %v618
        %v2038 = vunpack.c.l.b16 %v619
        %v2039 = vunpack.c.h.b16 %v619
        %v2040 = vunpack.c.l.b16 %v620
        %v2041 = vunpack.c.h.b16 %v620
        %v2042 = vunpack.c.l.b16 %v621
        %v2043 = vunpack.c.h.b16 %v621
        %v2044 = vunpack.c.l.b16 %v622
        %v2045 = vunpack.c.h.b16 %v622
        %v2046 = vunpack.c.l.b16 %v623
        %v2047 = vunpack.c.h.b16 %v623
        %v2048 = vunpack.c.l.b16 %v624
        %v2049 = vunpack.c.h.b16 %v624
        %v2050 = vunpack.c.l.b16 %v625
        %v2051 = vunpack.c.h.b16 %v625
        %v2052 = vunpack.c.l.b16 %v626
        %v2053 = vunpack.c.h.b16 %v626
        %v2054 = vunpack.c.l.b16 %v627
        %v2055 = vunpack.c.h.b16 %v627
        %v2056 = vunpack.c.l.b16 %v628
        %v2057 = vunpack.c.h.b16 %v628
        %v2058 = vunpack.c.l.b16 %v629
        %v2059 = vunpack.c.h.b16 %v629
        %v2060 = vunpack.c.l.b16 %v630
        %v2061 = vunpack.c.h.b16 %v630
        %v2062 = vunpack.c.l.b16 %v631
        %v2063 = vunpack.c.h.b16 %v631
        %v2064 = vunpack.c.l.b16 %v632
        %v2065 = vunpack.c.h.b16 %v632
        %v2066 = vunpack.c.l.b16 %v633
        %v2067 = vunpack.c.h.b16 %v633
        %v2068 = vunpack.c.l.b16 %v634
        %v2069 = vunpack.c.h.b16 %v634
        %v2070 = vunpack.c.l.b16 %v635
        %v2071 = vunpack.c.h.b16 %v635
        %v2072 = vunpack.c.l.b16 %v636
        %v2073 = vunpack.c.h.b16 %v636
        %v2074 = vunpack.c.l.b16 %v637
        %v2075 = vunpack.c.h.b16 %v637
        %v2076 = vunpack.c.l.b16 %v638
        %v2077 = vunpack.c.h.b16 %v638
        %v2078 = vunpack.c.l.b16 %v639
        %v2079 = vunpack.c.h.b16 %v639
        %v2080 = vunpack.c.l.b16 %v640
        %v2081 = vunpack.c.h.b16 %v640
        %v2082 = vunpack.c.l.b16 %v641
        %v2083 = vunpack.c.h.b16 %v641
        %v2084 = vunpack.c.l.b16 %v642
        %v2085 = vunpack.c.h.b16 %v642
        %v2086 = vunpack.c.l.b16 %v643
        %v2087 = vunpack.c.h.b16 %v643
        %v2088 = vunpack.c.l.b16 %v644
        %v2089 = vunpack.c.h.b16 %v644
        %v2090 = vunpack.c.l.b16 %v645
        %v2091 = vunpack.c.h.b16 %v645
        %v2092 = vunpack.c.l.b16 %v646
        %v2093 = vunpack.c.h.b16 %v646
        %v2094 = vunpack.c.l.b16 %v647
        %v2095 = vunpack.c.h.b16 %v647
        %v2096 = vunpack.c.l.b16 %v648
        %v2097 = vunpack.c.h.b16 %v648
        %v2098 = vunpack.c.l.b16 %v649
        %v2099 = vunpack.c.h.b16 %v649
        %v2100 = vunpack.c.l.b16 %v650
        %v2101 = vunpack.c.h.b16 %v650
        %v2102 = vunpack.c.l.b16 %v651
        %v2103 = vunpack.c.h.b16 %v651
        %v2104 = vunpack.c.l.b16 %v652
        %v2105 = vunpack.c.h.b16 %v652
        %v2106 = vunpack.c.l.b16 %v653
        %v2107 = vunpack.c.h.b16 %v653
        %v2108 = vunpack.c.l.b16 %v654
        %v2109 = vunpack.c.h.b16 %v654
        %v2110 = vunpack.c.l.b16 %v655
        %v2111 = vunpack.c.h.b16 %v655
        %v2112 = vunpack.c.l.b16 %v656
        %v2113 = vunpack.c.h.b16 %v656
        %v2114 = vunpack.c.l.b16 %v657
        %v2115 = vunpack.c.h.b16 %v657
        %v2116 = vunpack.c.l.b16 %v658
        %v2117 = vunpack.c.h.b16 %v658
        %v2118 = vunpack.c.l.b16 %v659
        %v2119 = vunpack.c.h.b16 %v659
        %v2120 = vunpack.c.l.b16 %v660
        %v2121 = vunpack.c.h.b16 %v660
        %v2122 = vunpack.c.l.b16 %v661
        %v2123 = vunpack.c.h.b16 %v661
        %v2124 = vunpack.c.l.b16 %v662
        %v2125 = vunpack.c.h.b16 %v662
        %v2126 = vunpack.c.l.b16 %v663
        %v2127 = vunpack.c.h.b16 %v663
        %v2128 = vunpack.c.l.b16 %v664
        %v2129 = vunpack.c.h.b16 %v664
        %v2130 = vunpack.c.l.b16 %v665
        %v2131 = vunpack.c.h.b16 %v665
        %v2132 = vunpack.c.l.b16 %v666
        %v2133 = vunpack.c.h.b16 %v666
        %v2134 = vunpack.c.l.b16 %v667
        %v2135 = vunpack.c.h.b16 %v667
        %v2136 = vunpack.c.l.b16 %v668
        %v2137 = vunpack.c.h.b16 %v668
        %v2138 = vunpack.c.l.b16 %v669
        %v2139 = vunpack.c.h.b16 %v669
        %v2140 = vunpack.c.l.b16 %v670
        %v2141 = vunpack.c.h.b16 %v670
        %v2142 = vunpack.c.l.b16 %v671
        %v2143 = vunpack.c.h.b16 %v671
        %v2144 = vunpack.c.l.b16 %v672
        %v2145 = vunpack.c.h.b16 %v672
        %v2146 = vunpack.c.l.b16 %v673
        %v2147 = vunpack.c.h.b16 %v673
        %v2148 = vunpack.c.l.b16 %v674
        %v2149 = vunpack.c.h.b16 %v674
        %v2150 = vunpack.c.l.b16 %v675
        %v2151 = vunpack.c.h.b16 %v675
        %v2152 = vunpack.c.l.b16 %v676
        %v2153 = vunpack.c.h.b16 %v676
        %v2154 = vunpack.c.l.b16 %v677
        %v2155 = vunpack.c.h.b16 %v677
        %v2156 = vunpack.c.l.b16 %v678
        %v2157 = vunpack.c.h.b16 %v678
        %v2158 = vunpack.c.l.b16 %v679
        %v2159 = vunpack.c.h.b16 %v679
        %v2160 = vunpack.c.l.b16 %v680
        %v2161 = vunpack.c.h.b16 %v680
        %v2162 = vunpack.c.l.b16 %v681
        %v2163 = vunpack.c.h.b16 %v681
        %v2164 = vunpack.c.l.b16 %v682
        %v2165 = vunpack.c.h.b16 %v682
        %v2166 = vunpack.c.l.b16 %v683
        %v2167 = vunpack.c.h.b16 %v683
        %v2168 = vunpack.c.l.b16 %v684
        %v2169 = vunpack.c.h.b16 %v684
        %v2170 = vunpack.c.l.b16 %v685
        %v2171 = vunpack.c.h.b16 %v685
        %v2172 = vunpack.c.l.b16 %v686
        %v2173 = vunpack.c.h.b16 %v686
        %v2174 = vunpack.c.l.b16 %v687
        %v2175 = vunpack.c.h.b16 %v687
        %v2176 = vunpack.c.l.b16 %v688
        %v2177 = vunpack.c.h.b16 %v688
        %v2178 = vunpack.c.l.b16 %v689
        %v2179 = vunpack.c.h.b16 %v689
        %v2180 = vunpack.c.l.b16 %v690
        %v2181 = vunpack.c.h.b16 %v690
        %v2182 = vunpack.c.l.b16 %v691
        %v2183 = vunpack.c.h.b16 %v691
        %v2184 = vunpack.c.l.b16 %v692
        %v2185 = vunpack.c.h.b16 %v692
        %v2186 = vunpack.c.l.b16 %v693
        %v2187 = vunpack.c.h.b16 %v693
        %v2188 = vunpack.c.l.b16 %v694
        %v2189 = vunpack.c.h.b16 %v694
        %v2190 = vunpack.c.l.b16 %v695
        %v2191 = vunpack.c.h.b16 %v695
        %v2192 = vunpack.c.l.b16 %v696
        %v2193 = vunpack.c.h.b16 %v696
        %v2194 = vunpack.c.l.b16 %v697
        %v2195 = vunpack.c.h.b16 %v697
        %v2196 = vunpack.c.l.b16 %v698
        %v2197 = vunpack.c.h.b16 %v698
        %v2198 = vunpack.c.l.b16 %v699
        %v2199 = vunpack.c.h.b16 %v699
        %v2200 = vunpack.c.l.b16 %v700
        %v2201 = vunpack.c.h.b16 %v700
        %v2202 = vunpack.c.l.b16 %v701
        %v2203 = vunpack.c.h.b16 %v701
        %v2204 = vunpack.c.l.b16 %v702
        %v2205 = vunpack.c.h.b16 %v702
        %v2206 = vunpack.c.l.b16 %v703
        %v2207 = vunpack.c.h.b16 %v703
        %v2208 = vunpack.c.l.b16 %v704
        %v2209 = vunpack.c.h.b16 %v704
        %v2210 = vunpack.c.l.b16 %v705
        %v2211 = vunpack.c.h.b16 %v705
        %v2212 = vunpack.c.l.b16 %v706
        %v2213 = vunpack.c.h.b16 %v706
        %v2214 = vunpack.c.l.b16 %v707
        %v2215 = vunpack.c.h.b16 %v707
        %v2216 = vunpack.c.l.b16 %v708
        %v2217 = vunpack.c.h.b16 %v708
        %v2218 = vunpack.c.l.b16 %v709
        %v2219 = vunpack.c.h.b16 %v709
        %v2220 = vunpack.c.l.b16 %v710
        %v2221 = vunpack.c.h.b16 %v710
        %v2222 = vunpack.c.l.b16 %v711
        %v2223 = vunpack.c.h.b16 %v711
        %v2224 = vunpack.c.l.b16 %v712
        %v2225 = vunpack.c.h.b16 %v712
        %v2226 = vunpack.c.l.b16 %v713
        %v2227 = vunpack.c.h.b16 %v713
        %v2228 = vunpack.c.l.b16 %v714
        %v2229 = vunpack.c.h.b16 %v714
        %v2230 = vunpack.c.l.b16 %v715
        %v2231 = vunpack.c.h.b16 %v715
        %v2232 = vunpack.c.l.b16 %v716
        %v2233 = vunpack.c.h.b16 %v716
        %v2234 = vunpack.c.l.b16 %v717
        %v2235 = vunpack.c.h.b16 %v717
        %v2236 = vunpack.c.l.b16 %v718
        %v2237 = vunpack.c.h.b16 %v718
        %v2238 = vunpack.c.l.b16 %v719
        %v2239 = vunpack.c.h.b16 %v719
        %v2240 = vunpack.c.l.b16 %v720
        %v2241 = vunpack.c.h.b16 %v720
        %v2242 = vunpack.c.l.b16 %v721
        %v2243 = vunpack.c.h.b16 %v721
        %v2244 = vunpack.c.l.b16 %v722
        %v2245 = vunpack.c.h.b16 %v722
        %v2246 = vunpack.c.l.b16 %v723
        %v2247 = vunpack.c.h.b16 %v723
        %v2248 = vunpack.c.l.b16 %v724
        %v2249 = vunpack.c.h.b16 %v724
        %v2250 = vunpack.c.l.b16 %v725
        %v2251 = vunpack.c.h.b16 %v725
        %v2252 = vunpack.c.l.b16 %v726
        %v2253 = vunpack.c.h.b16 %v726
        %v2254 = vunpack.c.l.b16 %v727
        %v2255 = vunpack.c.h.b16 %v727
        %v2256 = vunpack.c.l.b16 %v728
        %v2257 = vunpack.c.h.b16 %v728
        %v2258 = vunpack.c.l.b16 %v729
        %v2259 = vunpack.c.h.b16 %v729
        %v2260 = vunpack.c.l.b16 %v730
        %v2261 = vunpack.c.h.b16 %v730
        %v2262 = vunpack.c.l.b16 %v731
        %v2263 = vunpack.c.h.b16 %v731
        %v2264 = vunpack.c.l.b16 %v732
        %v2265 = vunpack.c.h.b16 %v732
        %v2266 = vunpack.c.l.b16 %v733
        %v2267 = vunpack.c.h.b16 %v733
        %v2268 = vunpack.c.l.b16 %v734
        %v2269 = vunpack.c.h.b16 %v734
        %v2270 = vunpack.c.l.b16 %v735
        %v2271 = vunpack.c.h.b16 %v735
        %v2272 = vunpack.c.l.b16 %v736
        %v2273 = vunpack.c.h.b16 %v736
        %v2274 = vunpack.c.l.b16 %v737
        %v2275 = vunpack.c.h.b16 %v737
        %v2276 = vunpack.c.l.b16 %v738
        %v2277 = vunpack.c.h.b16 %v738
        %v2278 = vunpack.c.l.b16 %v739
        %v2279 = vunpack.c.h.b16 %v739
        %v2280 = vunpack.c.l.b16 %v740
        %v2281 = vunpack.c.h.b16 %v740
        %v2282 = vunpack.c.l.b16 %v741
        %v2283 = vunpack.c.h.b16 %v741
        %v2284 = vunpack.c.l.b16 %v742
        %v2285 = vunpack.c.h.b16 %v742
        %v2286 = vunpack.c.l.b16 %v743
        %v2287 = vunpack.c.h.b16 %v743
        %v2288 = vunpack.c.l.b16 %v744
        %v2289 = vunpack.c.h.b16 %v744
        %v2290 = vunpack.c.l.b16 %v745
        %v2291 = vunpack.c.h.b16 %v745
        %v2292 = vunpack.c.l.b16 %v746
        %v2293 = vunpack.c.h.b16 %v746
        %v2294 = vunpack.c.l.b16 %v747
        %v2295 = vunpack.c.h.b16 %v747
        %v2296 = vunpack.c.l.b16 %v748
        %v2297 = vunpack.c.h.b16 %v748
        %v2298 = vunpack.c.l.b16 %v749
        %v2299 = vunpack.c.h.b16 %v749
        %v2300 = vunpack.c.l.b16 %v750
        %v2301 = vunpack.c.h.b16 %v750
        %v2302 = vunpack.c.l.b16 %v751
        %v2303 = vunpack.c.h.b16 %v751
        %v2304 = vunpack.c.l.b16 %v752
        %v2305 = vunpack.c.h.b16 %v752
        %v2306 = vunpack.c.l.b16 %v753
        %v2307 = vunpack.c.h.b16 %v753
        %v2308 = vunpack.c.l.b16 %v754
        %v2309 = vunpack.c.h.b16 %v754
        %v2310 = vunpack.c.l.b16 %v755
        %v2311 = vunpack.c.h.b16 %v755
        %v2312 = vunpack.c.l.b16 %v756
        %v2313 = vunpack.c.h.b16 %v756
        %v2314 = vunpack.c.l.b16 %v757
        %v2315 = vunpack.c.h.b16 %v757
        %v2316 = vunpack.c.l.b16 %v758
        %v2317 = vunpack.c.h.b16 %v758
        %v2318 = vunpack.c.l.b16 %v759
        %v2319 = vunpack.c.h.b16 %v759
        %v2320 = vunpack.c.l.b16 %v760
        %v2321 = vunpack.c.h.b16 %v760
        %v2322 = vunpack.c.l.b16 %v761
        %v2323 = vunpack.c.h.b16 %v761
        %v2324 = vunpack.c.l.b16 %v762
        %v2325 = vunpack.c.h.b16 %v762
        %v2326 = vunpack.c.l.b16 %v763
        %v2327 = vunpack.c.h.b16 %v763
        %v2328 = vunpack.c.l.b16 %v764
        %v2329 = vunpack.c.h.b16 %v764
        %v2330 = vunpack.c.l.b16 %v765
        %v2331 = vunpack.c.h.b16 %v765
        %v2332 = vunpack.c.l.b16 %v766
        %v2333 = vunpack.c.h.b16 %v766
        %v2334 = vunpack.c.l.b16 %v767
        %v2335 = vunpack.c.h.b16 %v767
        %v2336 = vunpack.c.l.b16 %v768
        %v2337 = vunpack.c.h.b16 %v768
        %v2338 = vunpack.c.l.b16 %v769
        %v2339 = vunpack.c.h.b16 %v769
        %v2340 = vunpack.c.l.b16 %v770
        %v2341 = vunpack.c.h.b16 %v770
        %v2342 = vunpack.c.l.b16 %v771
        %v2343 = vunpack.c.h.b16 %v771
        %v2344 = vunpack.c.l.b16 %v772
        %v2345 = vunpack.c.h.b16 %v772
        %v2346 = vunpack.c.l.b16 %v773
        %v2347 = vunpack.c.h.b16 %v773
        %v2348 = vunpack.c.l.b16 %v774
        %v2349 = vunpack.c.h.b16 %v774
        %v2350 = vunpack.c.l.b16 %v775
        %v2351 = vunpack.c.h.b16 %v775
        %v2352 = vunpack.c.l.b16 %v776
        %v2353 = vunpack.c.h.b16 %v776
        %v2354 = vunpack.c.l.b16 %v777
        %v2355 = vunpack.c.h.b16 %v777
        %v2356 = vunpack.c.l.b16 %v778
        %v2357 = vunpack.c.h.b16 %v778
        %v2358 = vunpack.c.l.b16 %v779
        %v2359 = vunpack.c.h.b16 %v779
        %v2360 = vunpack.c.l.b16 %v780
        %v2361 = vunpack.c.h.b16 %v780
        %v2362 = vunpack.c.l.b16 %v781
        %v2363 = vunpack.c.h.b16 %v781
        %v2364 = vunpack.c.l.b16 %v782
        %v2365 = vunpack.c.h.b16 %v782
        %v2366 = vunpack.c.l.b16 %v783
        %v2367 = vunpack.c.h.b16 %v783
        %v2368 = vunpack.c.l.b16 %v784
        %v2369 = vunpack.c.h.b16 %v784
        %v2370 = vunpack.c.l.b16 %v785
        %v2371 = vunpack.c.h.b16 %v785
        %v2372 = vunpack.c.l.b16 %v786
        %v2373 = vunpack.c.h.b16 %v786
        %v2374 = vunpack.c.l.b16 %v787
        %v2375 = vunpack.c.h.b16 %v787
        %v2376 = vunpack.c.l.b16 %v788
        %v2377 = vunpack.c.h.b16 %v788
        %v2378 = vunpack.c.l.b16 %v789
        %v2379 = vunpack.c.h.b16 %v789
        %v2380 = vunpack.c.l.b16 %v790
        %v2381 = vunpack.c.h.b16 %v790
        %v2382 = vunpack.c.l.b16 %v791
        %v2383 = vunpack.c.h.b16 %v791
        %v2384 = vunpack.c.l.b16 %v792
        %v2385 = vunpack.c.h.b16 %v792
        %v2386 = vunpack.c.l.b16 %v793
        %v2387 = vunpack.c.h.b16 %v793
        %v2388 = vunpack.c.l.b16 %v794
        %v2389 = vunpack.c.h.b16 %v794
        %v2390 = vunpack.c.l.b16 %v795
        %v2391 = vunpack.c.h.b16 %v795
        %v2392 = vunpack.c.l.b16 %v796
        %v2393 = vunpack.c.h.b16 %v796
        %v2394 = vunpack.c.l.b16 %v797
        %v2395 = vunpack.c.h.b16 %v797
        %v2396 = vunpack.c.l.b16 %v798
        %v2397 = vunpack.c.h.b16 %v798
        %v2398 = vunpack.c.l.b16 %v799
        %v2399 = vunpack.c.h.b16 %v799
        %v2400 = vunpack.c.l.b16 %v800
        %v2401 = vunpack.c.h.b16 %v800
        %v2402 = vunpack.c.l.b16 %v801
        %v2403 = vunpack.c.h.b16 %v801
        %v2404 = vunpack.c.l.b16 %v802
        %v2405 = vunpack.c.h.b16 %v802
        %v2406 = vunpack.c.l.b16 %v803
        %v2407 = vunpack.c.h.b16 %v803
        %v2408 = vunpack.c.l.b16 %v804
        %v2409 = vunpack.c.h.b16 %v804
        %v2410 = vunpack.c.l.b16 %v805
        %v2411 = vunpack.c.h.b16 %v805
        %v2412 = vunpack.c.l.b16 %v806
        %v2413 = vunpack.c.h.b16 %v806
        %v2414 = vunpack.c.l.b16 %v807
        %v2415 = vunpack.c.h.b16 %v807
        %v2416 = vunpack.c.l.b16 %v808
        %v2417 = vunpack.c.h.b16 %v808
        %v2418 = vunpack.c.l.b16 %v809
        %v2419 = vunpack.c.h.b16 %v809
        %v2420 = vunpack.c.l.b16 %v810
        %v2421 = vunpack.c.h.b16 %v810
        %v2422 = vunpack.c.l.b16 %v811
        %v2423 = vunpack.c.h.b16 %v811
        %v2424 = vunpack.c.l.b16 %v812
        %v2425 = vunpack.c.h.b16 %v812
        %v2426 = vunpack.c.l.b16 %v813
        %v2427 = vunpack.c.h.b16 %v813
        %v2428 = vunpack.c.l.b16 %v814
        %v2429 = vunpack.c.h.b16 %v814
        %v2430 = vunpack.c.l.b16 %v815
        %v2431 = vunpack.c.h.b16 %v815
        %v2432 = vunpack.c.l.b16 %v816
        %v2433 = vunpack.c.h.b16 %v816
        %v2434 = vunpack.c.l.b16 %v817
        %v2435 = vunpack.c.h.b16 %v817
        %v2436 = vunpack.c.l.b16 %v818
        %v2437 = vunpack.c.h.b16 %v818
        %v2438 = vunpack.c.l.b16 %v819
        %v2439 = vunpack.c.h.b16 %v819
        %v2440 = vunpack.c.l.b16 %v820
        %v2441 = vunpack.c.h.b16 %v820
        %v2442 = vunpack.c.l.b16 %v821
        %v2443 = vunpack.c.h.b16 %v821
        %v2444 = vunpack.c.l.b16 %v822
        %v2445 = vunpack.c.h.b16 %v822
        %v2446 = vunpack.c.l.b16 %v823
        %v2447 = vunpack.c.h.b16 %v823
        %v2448 = vunpack.c.l.b16 %v824
        %v2449 = vunpack.c.h.b16 %v824
        %v2450 = vunpack.c.l.b16 %v825
        %v2451 = vunpack.c.h.b16 %v825
        %v2452 = vunpack.c.l.b16 %v826
        %v2453 = vunpack.c.h.b16 %v826
        %v2454 = vunpack.c.l.b16 %v827
        %v2455 = vunpack.c.h.b16 %v827
        %v2456 = vunpack.c.l.b16 %v828
        %v2457 = vunpack.c.h.b16 %v828
        %v2458 = vunpack.c.l.b16 %v829
        %v2459 = vunpack.c.h.b16 %v829
        %v2460 = vunpack.c.l.b16 %v830
        %v2461 = vunpack.c.h.b16 %v830
        %v2462 = vunpack.c.l.b16 %v831
        %v2463 = vunpack.c.h.b16 %v831
        %v2464 = vunpack.c.l.b16 %v832
        %v2465 = vunpack.c.h.b16 %v832
        %v2466 = vunpack.c.l.b16 %v833
        %v2467 = vunpack.c.h.b16 %v833
        %v2468 = vunpack.c.l.b16 %v834
        %v2469 = vunpack.c.h.b16 %v834
        %v2470 = vunpack.c.l.b16 %v835
        %v2471 = vunpack.c.h.b16 %v835
        %v2472 = vunpack.c.l.b16 %v836
        %v2473 = vunpack.c.h.b16 %v836
        %v2474 = vunpack.c.l.b16 %v837
        %v2475 = vunpack.c.h.b16 %v837
        %v2476 = vunpack.c.l.b16 %v838
        %v2477 = vunpack.c.h.b16 %v838
        %v2478 = vunpack.c.l.b16 %v839
        %v2479 = vunpack.c.h.b16 %v839
        %v2480 = vunpack.c.l.b16 %v840
        %v2481 = vunpack.c.h.b16 %v840
        %v2482 = vunpack.c.l.b16 %v841
        %v2483 = vunpack.c.h.b16 %v841
        %v2484 = vunpack.c.l.b16 %v842
        %v2485 = vunpack.c.h.b16 %v842
        %v2486 = vunpack.c.l.b16 %v843
        %v2487 = vunpack.c.h.b16 %v843
        %v2488 = vunpack.c.l.b16 %v844
        %v2489 = vunpack.c.h.b16 %v844
        %v2490 = vunpack.c.l.b16 %v845
        %v2491 = vunpack.c.h.b16 %v845
        %v2492 = vunpack.c.l.b16 %v846
        %v2493 = vunpack.c.h.b16 %v846
        %v2494 = vunpack.c.l.b16 %v847
        %v2495 = vunpack.c.h.b16 %v847
        %v2496 = vunpack.c.l.b16 %v848
        %v2497 = vunpack.c.h.b16 %v848
        %v2498 = vunpack.c.l.b16 %v849
        %v2499 = vunpack.c.h.b16 %v849
        %v2500 = vunpack.c.l.b16 %v850
        %v2501 = vunpack.c.h.b16 %v850
        %v2502 = vunpack.c.l.b16 %v851
        %v2503 = vunpack.c.h.b16 %v851
        %v2504 = vunpack.c.l.b16 %v852
        %v2505 = vunpack.c.h.b16 %v852
        %v2506 = vunpack.c.l.b16 %v853
        %v2507 = vunpack.c.h.b16 %v853
        %v2508 = vunpack.c.l.b16 %v854
        %v2509 = vunpack.c.h.b16 %v854
        %v2510 = vunpack.c.l.b16 %v855
        %v2511 = vunpack.c.h.b16 %v855
        %v2512 = vunpack.c.l.b16 %v856
        %v2513 = vunpack.c.h.b16 %v856
        %v2514 = vunpack.c.l.b16 %v857
        %v2515 = vunpack.c.h.b16 %v857
        %v2516 = vunpack.c.l.b16 %v858
        %v2517 = vunpack.c.h.b16 %v858
        %v2518 = vunpack.c.l.b16 %v859
        %v2519 = vunpack.c.h.b16 %v859
        %v2520 = vunpack.c.l.b16 %v860
        %v2521 = vunpack.c.h.b16 %v860
        %v2522 = vunpack.c.l.b16 %v861
        %v2523 = vunpack.c.h.b16 %v861
        %v2524 = vunpack.c.l.b16 %v862
        %v2525 = vunpack.c.h.b16 %v862
        %v2526 = vunpack.c.l.b16 %v863
        %v2527 = vunpack.c.h.b16 %v863
        %v2528 = vunpack.c.l.b16 %v864
        %v2529 = vunpack.c.h.b16 %v864
        %v2530 = vunpack.c.l.b16 %v865
        %v2531 = vunpack.c.h.b16 %v865
        %v2532 = vunpack.c.l.b16 %v866
        %v2533 = vunpack.c.h.b16 %v866
        %v2534 = vunpack.c.l.b16 %v867
        %v2535 = vunpack.c.h.b16 %v867
        %v2536 = vunpack.c.l.b16 %v868
        %v2537 = vunpack.c.h.b16 %v868
        %v2538 = vunpack.c.l.b16 %v869
        %v2539 = vunpack.c.h.b16 %v869
        %v2540 = vunpack.c.l.b16 %v870
        %v2541 = vunpack.c.h.b16 %v870
        %v2542 = vunpack.c.l.b16 %v871
        %v2543 = vunpack.c.h.b16 %v871
        %v2544 = vunpack.c.l.b16 %v872
        %v2545 = vunpack.c.h.b16 %v872
        %v2546 = vunpack.c.l.b16 %v873
        %v2547 = vunpack.c.h.b16 %v873
        %v2548 = vunpack.c.l.b16 %v874
        %v2549 = vunpack.c.h.b16 %v874
        %v2550 = vunpack.c.l.b16 %v875
        %v2551 = vunpack.c.h.b16 %v875
        %v2552 = vunpack.c.l.b16 %v876
        %v2553 = vunpack.c.h.b16 %v876
        %v2554 = vunpack.c.l.b16 %v877
        %v2555 = vunpack.c.h.b16 %v877
        %v2556 = vunpack.c.l.b16 %v878
        %v2557 = vunpack.c.h.b16 %v878
        %v2558 = vunpack.c.l.b16 %v879
        %v2559 = vunpack.c.h.b16 %v879
        %v2560 = vunpack.c.l.b16 %v880
        %v2561 = vunpack.c.h.b16 %v880
        %v2562 = vunpack.c.l.b16 %v881
        %v2563 = vunpack.c.h.b16 %v881
        %v2564 = vunpack.c.l.b16 %v882
        %v2565 = vunpack.c.h.b16 %v882
        %v2566 = vunpack.c.l.b16 %v883
        %v2567 = vunpack.c.h.b16 %v883
        %v2568 = vunpack.c.l.b16 %v884
        %v2569 = vunpack.c.h.b16 %v884
        %v2570 = vunpack.c.l.b16 %v885
        %v2571 = vunpack.c.h.b16 %v885
        %v2572 = vunpack.c.l.b16 %v886
        %v2573 = vunpack.c.h.b16 %v886
        %v2574 = vunpack.c.l.b16 %v887
        %v2575 = vunpack.c.h.b16 %v887
        %v2576 = vunpack.c.l.b16 %v888
        %v2577 = vunpack.c.h.b16 %v888
        %v2578 = vunpack.c.l.b16 %v889
        %v2579 = vunpack.c.h.b16 %v889
        %v2580 = vunpack.c.l.b16 %v890
        %v2581 = vunpack.c.h.b16 %v890
        %v2582 = vunpack.c.l.b16 %v891
        %v2583 = vunpack.c.h.b16 %v891
        %v2584 = vunpack.c.l.b16 %v892
        %v2585 = vunpack.c.h.b16 %v892
        %v2586 = vunpack.c.l.b16 %v893
        %v2587 = vunpack.c.h.b16 %v893
        %v2588 = vunpack.c.l.b16 %v894
        %v2589 = vunpack.c.h.b16 %v894
        %v2590 = vunpack.c.l.b16 %v895
        %v2591 = vunpack.c.h.b16 %v895
        %v2592 = vunpack.c.l.b16 %v896
        %v2593 = vunpack.c.h.b16 %v896
        %v2594 = vunpack.c.l.b16 %v897
        %v2595 = vunpack.c.h.b16 %v897
        %v2596 = vunpack.c.l.b16 %v898
        %v2597 = vunpack.c.h.b16 %v898
        %v2598 = vunpack.c.l.b16 %v899
        %v2599 = vunpack.c.h.b16 %v899
        %v2600 = vunpack.c.l.b16 %v900
        %v2601 = vunpack.c.h.b16 %v900
        %v2602 = vunpack.c.l.b16 %v901
        %v2603 = vunpack.c.h.b16 %v901
        %v2604 = vunpack.c.l.b16 %v902
        %v2605 = vunpack.c.h.b16 %v902
        %v2606 = vunpack.c.l.b16 %v903
        %v2607 = vunpack.c.h.b16 %v903
        %v2608 = vunpack.c.l.b16 %v904
        %v2609 = vunpack.c.h.b16 %v904
        %v2610 = vunpack.c.l.b16 %v905
        %v2611 = vunpack.c.h.b16 %v905
        %v2612 = vunpack.c.l.b16 %v906
        %v2613 = vunpack.c.h.b16 %v906
        %v2614 = vunpack.c.l.b16 %v907
        %v2615 = vunpack.c.h.b16 %v907
        %v2616 = vunpack.c.l.b16 %v908
        %v2617 = vunpack.c.h.b16 %v908
        %v2618 = vunpack.c.l.b16 %v909
        %v2619 = vunpack.c.h.b16 %v909
        %v2620 = vunpack.c.l.b16 %v910
        %v2621 = vunpack.c.h.b16 %v910
        %v2622 = vunpack.c.l.b16 %v911
        %v2623 = vunpack.c.h.b16 %v911
        %v2624 = vunpack.c.l.b16 %v912
        %v2625 = vunpack.c.h.b16 %v912
        %v2626 = vunpack.c.l.b16 %v913
        %v2627 = vunpack.c.h.b16 %v913
        %v2628 = vunpack.c.l.b16 %v914
        %v2629 = vunpack.c.h.b16 %v914
        %v2630 = vunpack.c.l.b16 %v915
        %v2631 = vunpack.c.h.b16 %v915
        %v2632 = vunpack.c.l.b16 %v916
        %v2633 = vunpack.c.h.b16 %v916
        %v2634 = vunpack.c.l.b16 %v917
        %v2635 = vunpack.c.h.b16 %v917
        %v2636 = vunpack.c.l.b16 %v918
        %v2637 = vunpack.c.h.b16 %v918
        %v2638 = vunpack.c.l.b16 %v919
        %v2639 = vunpack.c.h.b16 %v919
        %v2640 = vunpack.c.l.b16 %v920
        %v2641 = vunpack.c.h.b16 %v920
        %v2642 = vunpack.c.l.b16 %v921
        %v2643 = vunpack.c.h.b16 %v921
        %v2644 = vunpack.c.l.b16 %v922
        %v2645 = vunpack.c.h.b16 %v922
        %v2646 = vunpack.c.l.b16 %v923
        %v2647 = vunpack.c.h.b16 %v923
        %v2648 = vunpack.c.l.b16 %v924
        %v2649 = vunpack.c.h.b16 %v924
        %v2650 = vunpack.c.l.b16 %v925
        %v2651 = vunpack.c.h.b16 %v925
        %v2652 = vunpack.c.l.b16 %v926
        %v2653 = vunpack.c.h.b16 %v926
        %v2654 = vunpack.c.l.b16 %v927
        %v2655 = vunpack.c.h.b16 %v927
        %v2656 = vunpack.c.l.b16 %v928
        %v2657 = vunpack.c.h.b16 %v928
        %v2658 = vunpack.c.l.b16 %v929
        %v2659 = vunpack.c.h.b16 %v929
        %v2660 = vunpack.c.l.b16 %v930
        %v2661 = vunpack.c.h.b16 %v930
        %v2662 = vunpack.c.l.b16 %v931
        %v2663 = vunpack.c.h.b16 %v931
        %v2664 = vunpack.c.l.b16 %v932
        %v2665 = vunpack.c.h.b16 %v932
        %v2666 = vunpack.c.l.b16 %v933
        %v2667 = vunpack.c.h.b16 %v933
        %v2668 = vunpack.c.l.b16 %v934
        %v2669 = vunpack.c.h.b16 %v934
        %v2670 = vunpack.c.l.b16 %v935
        %v2671 = vunpack.c.h.b16 %v935
        %v2672 = vunpack.c.l.b16 %v936
        %v2673 = vunpack.c.h.b16 %v936
        %v2674 = vunpack.c.l.b16 %v937
        %v2675 = vunpack.c.h.b16 %v937
        %v2676 = vunpack.c.l.b16 %v938
        %v2677 = vunpack.c.h.b16 %v938
        %v2678 = vunpack.c.l.b16 %v939
        %v2679 = vunpack.c.h.b16 %v939
        %v2680 = vunpack.c.l.b16 %v940
        %v2681 = vunpack.c.h.b16 %v940
        %v2682 = vunpack.c.l.b16 %v941
        %v2683 = vunpack.c.h.b16 %v941
        %v2684 = vunpack.c.l.b16 %v942
        %v2685 = vunpack.c.h.b16 %v942
        %v2686 = vunpack.c.l.b16 %v943
        %v2687 = vunpack.c.h.b16 %v943
        %v2688 = vunpack.c.l.b16 %v944
        %v2689 = vunpack.c.h.b16 %v944
        %v2690 = vunpack.c.l.b16 %v945
        %v2691 = vunpack.c.h.b16 %v945
        %v2692 = vunpack.c.l.b16 %v946
        %v2693 = vunpack.c.h.b16 %v946
        %v2694 = vunpack.c.l.b16 %v947
        %v2695 = vunpack.c.h.b16 %v947
        %v2696 = vunpack.c.l.b16 %v948
        %v2697 = vunpack.c.h.b16 %v948
        %v2698 = vunpack.c.l.b16 %v949
        %v2699 = vunpack.c.h.b16 %v949
        %v2700 = vunpack.c.l.b16 %v950
        %v2701 = vunpack.c.h.b16 %v950
        %v2702 = vunpack.c.l.b16 %v951
        %v2703 = vunpack.c.h.b16 %v951
        %v2704 = vunpack.c.l.b16 %v952
        %v2705 = vunpack.c.h.b16 %v952
        %v2706 = vunpack.c.l.b16 %v953
        %v2707 = vunpack.c.h.b16 %v953
        %v2708 = vunpack.c.l.b16 %v954
        %v2709 = vunpack.c.h.b16 %v954
        %v2710 = vunpack.c.l.b16 %v955
        %v2711 = vunpack.c.h.b16 %v955
        %v2712 = vunpack.c.l.b16 %v956
        %v2713 = vunpack.c.h.b16 %v956
        %v2714 = vunpack.c.l.b16 %v957
        %v2715 = vunpack.c.h.b16 %v957
        %v2716 = vunpack.c.l.b16 %v958
        %v2717 = vunpack.c.h.b16 %v958
        %v2718 = vunpack.c.l.b16 %v959
        %v2719 = vunpack.c.h.b16 %v959
        %v2720 = vunpack.c.l.b16 %v960
        %v2721 = vunpack.c.h.b16 %v960
        %v2722 = vunpack.c.l.b16 %v961
        %v2723 = vunpack.c.h.b16 %v961
        %v2724 = vunpack.c.l.b16 %v962
        %v2725 = vunpack.c.h.b16 %v962
        %v2726 = vunpack.c.l.b16 %v963
        %v2727 = vunpack.c.h.b16 %v963
        %v2728 = vunpack.c.l.b16 %v964
        %v2729 = vunpack.c.h.b16 %v964
        %v2730 = vunpack.c.l.b16 %v965
        %v2731 = vunpack.c.h.b16 %v965
        %v2732 = vunpack.c.l.b16 %v966
        %v2733 = vunpack.c.h.b16 %v966
        %v2734 = vunpack.c.l.b16 %v967
        %v2735 = vunpack.c.h.b16 %v967
        %v2736 = vunpack.c.l.b16 %v968
        %v2737 = vunpack.c.h.b16 %v968
        %v2738 = vunpack.c.l.b16 %v969
        %v2739 = vunpack.c.h.b16 %v969
        %v2740 = vunpack.c.l.b16 %v970
        %v2741 = vunpack.c.h.b16 %v970
        %v2742 = vunpack.c.l.b16 %v971
        %v2743 = vunpack.c.h.b16 %v971
        %v2744 = vunpack.c.l.b16 %v972
        %v2745 = vunpack.c.h.b16 %v972
        %v2746 = vunpack.c.l.b16 %v973
        %v2747 = vunpack.c.h.b16 %v973
        %v2748 = vunpack.c.l.b16 %v974
        %v2749 = vunpack.c.h.b16 %v974
        %v2750 = vunpack.c.l.b16 %v975
        %v2751 = vunpack.c.h.b16 %v975
        %v2752 = vunpack.c.l.b16 %v976
        %v2753 = vunpack.c.h.b16 %v976
        %v2754 = vunpack.c.l.b16 %v977
        %v2755 = vunpack.c.h.b16 %v977
        %v2756 = vunpack.c.l.b16 %v978
        %v2757 = vunpack.c.h.b16 %v978
        %v2758 = vunpack.c.l.b16 %v979
        %v2759 = vunpack.c.h.b16 %v979
        %v2760 = vunpack.c.l.b16 %v980
        %v2761 = vunpack.c.h.b16 %v980
        %v2762 = vunpack.c.l.b16 %v981
        %v2763 = vunpack.c.h.b16 %v981
        %v2764 = vunpack.c.l.b16 %v982
        %v2765 = vunpack.c.h.b16 %v982
        %v2766 = vunpack.c.l.b16 %v983
        %v2767 = vunpack.c.h.b16 %v983
        %v2768 = vunpack.c.l.b16 %v984
        %v2769 = vunpack.c.h.b16 %v984
        %v2770 = vunpack.c.l.b16 %v985
        %v2771 = vunpack.c.h.b16 %v985
        %v2772 = vunpack.c.l.b16 %v986
        %v2773 = vunpack.c.h.b16 %v986
        %v2774 = vunpack.c.l.b16 %v987
        %v2775 = vunpack.c.h.b16 %v987
        %v2776 = vunpack.c.l.b16 %v988
        %v2777 = vunpack.c.h.b16 %v988
        %v2778 = vunpack.c.l.b16 %v989
        %v2779 = vunpack.c.h.b16 %v989
        %v2780 = vunpack.c.l.b16 %v990
        %v2781 = vunpack.c.h.b16 %v990
        %v2782 = vunpack.c.l.b16 %v991
        %v2783 = vunpack.c.h.b16 %v991
        %v2784 = vunpack.c.l.b16 %v992
        %v2785 = vunpack.c.h.b16 %v992
        %v2786 = vunpack.c.l.b16 %v993
        %v2787 = vunpack.c.h.b16 %v993
        %v2788 = vunpack.c.l.b16 %v994
        %v2789 = vunpack.c.h.b16 %v994
        %v2790 = vunpack.c.l.b16 %v995
        %v2791 = vunpack.c.h.b16 %v995
        %v2792 = vunpack.c.l.b16 %v996
        %v2793 = vunpack.c.h.b16 %v996
        %v2794 = vunpack.c.l.b16 %v997
        %v2795 = vunpack.c.h.b16 %v997
        %v2796 = vunpack.c.l.b16 %v998
        %v2797 = vunpack.c.h.b16 %v998
        %v2798 = vunpack.c.l.b16 %v999
        %v2799 = vunpack.c.h.b16 %v999
        %v2800 = vunpack.c.l.b16 %v1000
        %v2801 = vunpack.c.h.b16 %v1000
        %v2802 = vunpack.c.l.b16 %v1001
        %v2803 = vunpack.c.h.b16 %v1001
        %v2804 = vunpack.c.l.b16 %v1002
        %v2805 = vunpack.c.h.b16 %v1002
        %v2806 = vunpack.c.l.b16 %v1003
        %v2807 = vunpack.c.h.b16 %v1003
        %v2808 = vunpack.c.l.b16 %v1004
        %v2809 = vunpack.c.h.b16 %v1004
        %v2810 = vunpack.c.l.b16 %v1005
        %v2811 = vunpack.c.h.b16 %v1005
        %v2812 = vunpack.c.l.b16 %v1006
        %v2813 = vunpack.c.h.b16 %v1006
        %v2814 = vunpack.c.l.b16 %v1007
        %v2815 = vunpack.c.h.b16 %v1007
        %v2816 = vunpack.c.l.b16 %v1008
        %v2817 = vunpack.c.h.b16 %v1008
        %v2818 = vunpack.c.l.b16 %v1009
        %v2819 = vunpack.c.h.b16 %v1009
        %v2820 = vunpack.c.l.b16 %v1010
        %v2821 = vunpack.c.h.b16 %v1010
        %v2822 = vunpack.c.l.b16 %v1011
        %v2823 = vunpack.c.h.b16 %v1011
        %v2824 = vunpack.c.l.b16 %v1012
        %v2825 = vunpack.c.h.b16 %v1012
        %v2826 = vunpack.c.l.b16 %v1013
        %v2827 = vunpack.c.h.b16 %v1013
        %v2828 = vunpack.c.l.b16 %v1014
        %v2829 = vunpack.c.h.b16 %v1014
        %v2830 = vunpack.c.l.b16 %v1015
        %v2831 = vunpack.c.h.b16 %v1015
        %v2832 = vunpack.c.l.b16 %v1016
        %v2833 = vunpack.c.h.b16 %v1016
        %v2834 = vunpack.c.l.b16 %v1017
        %v2835 = vunpack.c.h.b16 %v1017
        %v2836 = vunpack.c.l.b16 %v1018
        %v2837 = vunpack.c.h.b16 %v1018
        %v2838 = vunpack.c.l.b16 %v1019
        %v2839 = vunpack.c.h.b16 %v1019
        %v2840 = vunpack.c.l.b16 %v1020
        %v2841 = vunpack.c.h.b16 %v1020
        %v2842 = vunpack.c.l.b16 %v1021
        %v2843 = vunpack.c.h.b16 %v1021
        %v2844 = vunpack.c.l.b16 %v1022
        %v2845 = vunpack.c.h.b16 %v1022
        %v2846 = vunpack.c.l.b16 %v1023
        %v2847 = vunpack.c.h.b16 %v1023
        %v2848 = vunpack.c.l.b16 %v1024
        %v2849 = vunpack.c.h.b16 %v1024
        %v2850 = vunpack.c.l.b16 %v1025
        %v2851 = vunpack.c.h.b16 %v1025
        %v2852 = vunpack.c.l.b16 %v1026
        %v2853 = vunpack.c.h.b16 %v1026
        %v2854 = vunpack.c.l.b16 %v1027
        %v2855 = vunpack.c.h.b16 %v1027
        %v2856 = vunpack.c.l.b16 %v1028
        %v2857 = vunpack.c.h.b16 %v1028
        %v2858 = vunpack.c.l.b16 %v1029
        %v2859 = vunpack.c.h.b16 %v1029
        %v2860 = vunpack.c.l.b16 %v1030
        %v2861 = vunpack.c.h.b16 %v1030
        %v2862 = vunpack.c.l.b16 %v1031
        %v2863 = vunpack.c.h.b16 %v1031
        %v2864 = vunpack.c.l.b16 %v1032
        %v2865 = vunpack.c.h.b16 %v1032
        %v2866 = vunpack.c.l.b16 %v1033
        %v2867 = vunpack.c.h.b16 %v1033
        %v2868 = vunpack.c.l.b16 %v1034
        %v2869 = vunpack.c.h.b16 %v1034
        %v2870 = vunpack.c.l.b16 %v1035
        %v2871 = vunpack.c.h.b16 %v1035
        %v2872 = vunpack.c.l.b16 %v1036
        %v2873 = vunpack.c.h.b16 %v1036
        %v2874 = vunpack.c.l.b16 %v1037
        %v2875 = vunpack.c.h.b16 %v1037
        %v2876 = vunpack.c.l.b16 %v1038
        %v2877 = vunpack.c.h.b16 %v1038
        %v2878 = vunpack.c.l.b16 %v1039
        %v2879 = vunpack.c.h.b16 %v1039
        %v2880 = vunpack.c.l.b16 %v1040
        %v2881 = vunpack.c.h.b16 %v1040
        %v2882 = vunpack.c.l.b16 %v1041
        %v2883 = vunpack.c.h.b16 %v1041
        %v2884 = vunpack.c.l.b16 %v1042
        %v2885 = vunpack.c.h.b16 %v1042
        %v2886 = vunpack.c.l.b16 %v1043
        %v2887 = vunpack.c.h.b16 %v1043
        %v2888 = vunpack.c.l.b16 %v1044
        %v2889 = vunpack.c.h.b16 %v1044
        %v2890 = vunpack.c.l.b16 %v1045
        %v2891 = vunpack.c.h.b16 %v1045
        %v2892 = vunpack.c.l.b16 %v1046
        %v2893 = vunpack.c.h.b16 %v1046
        %v2894 = vunpack.c.l.b16 %v1047
        %v2895 = vunpack.c.h.b16 %v1047
        %v2896 = vunpack.c.l.b16 %v1048
        %v2897 = vunpack.c.h.b16 %v1048
        %v2898 = vunpack.c.l.b16 %v1049
        %v2899 = vunpack.c.h.b16 %v1049
        %v2900 = vunpack.c.l.b16 %v1050
        %v2901 = vunpack.c.h.b16 %v1050
        %v2902 = vunpack.c.l.b16 %v1051
        %v2903 = vunpack.c.h.b16 %v1051
        %v2904 = vunpack.c.l.b16 %v1052
        %v2905 = vunpack.c.h.b16 %v1052
        %v2906 = vunpack.c.l.b16 %v1053
        %v2907 = vunpack.c.h.b16 %v1053
        %v2908 = vunpack.c.l.b16 %v1054
        %v2909 = vunpack.c.h.b16 %v1054
        %v2910 = vunpack.c.l.b16 %v1055
        %v2911 = vunpack.c.h.b16 %v1055
        %v2912 = vunpack.c.l.b16 %v1056
        %v2913 = vunpack.c.h.b16 %v1056
        %v2914 = vunpack.c.l.b16 %v1057
        %v2915 = vunpack.c.h.b16 %v1057
        %v2916 = vunpack.c.l.b16 %v1058
        %v2917 = vunpack.c.h.b16 %v1058
        %v2918 = vunpack.c.l.b16 %v1059
        %v2919 = vunpack.c.h.b16 %v1059
        %v2920 = vunpack.c.l.b16 %v1060
        %v2921 = vunpack.c.h.b16 %v1060
        %v2922 = vunpack.c.l.b16 %v1061
        %v2923 = vunpack.c.h.b16 %v1061
        %v2924 = vunpack.c.l.b16 %v1062
        %v2925 = vunpack.c.h.b16 %v1062
        %v2926 = vunpack.c.l.b16 %v1063
        %v2927 = vunpack.c.h.b16 %v1063
        %v2928 = vunpack.c.l.b16 %v1064
        %v2929 = vunpack.c.h.b16 %v1064
        %v2930 = vunpack.c.l.b16 %v1065
        %v2931 = vunpack.c.h.b16 %v1065
        %v2932 = vunpack.c.l.b16 %v1066
        %v2933 = vunpack.c.h.b16 %v1066
        %v2934 = vunpack.c.l.b16 %v1067
        %v2935 = vunpack.c.h.b16 %v1067
        %v2936 = vunpack.c.l.b16 %v1068
        %v2937 = vunpack.c.h.b16 %v1068
        %v2938 = vunpack.c.l.b16 %v1069
        %v2939 = vunpack.c.h.b16 %v1069
        %v2940 = vunpack.c.l.b16 %v1070
        %v2941 = vunpack.c.h.b16 %v1070
        %v2942 = vunpack.c.l.b16 %v1071
        %v2943 = vunpack.c.h.b16 %v1071
        %v2944 = vunpack.c.l.b16 %v1072
        %v2945 = vunpack.c.h.b16 %v1072
        %v2946 = vunpack.c.l.b16 %v1073
        %v2947 = vunpack.c.h.b16 %v1073
        %v2948 = vunpack.c.l.b16 %v1074
        %v2949 = vunpack.c.h.b16 %v1074
        %v2950 = vunpack.c.l.b16 %v1075
        %v2951 = vunpack.c.h.b16 %v1075
        %v2952 = vunpack.c.l.b16 %v1076
        %v2953 = vunpack.c.h.b16 %v1076
        %v2954 = vunpack.c.l.b16 %v1077
        %v2955 = vunpack.c.h.b16 %v1077
        %v2956 = vunpack.c.l.b16 %v1078
        %v2957 = vunpack.c.h.b16 %v1078
        %v2958 = vunpack.c.l.b16 %v1079
        %v2959 = vunpack.c.h.b16 %v1079
        %v2960 = vunpack.c.l.b16 %v1080
        %v2961 = vunpack.c.h.b16 %v1080
        %v2962 = vunpack.c.l.b16 %v1081
        %v2963 = vunpack.c.h.b16 %v1081
        %v2964 = vunpack.c.l.b16 %v1082
        %v2965 = vunpack.c.h.b16 %v1082
        %v2966 = vunpack.c.l.b16 %v1083
        %v2967 = vunpack.c.h.b16 %v1083
        %v2968 = vunpack.c.l.b16 %v1084
        %v2969 = vunpack.c.h.b16 %v1084
        %v2970 = vunpack.c.l.b16 %v1085
        %v2971 = vunpack.c.h.b16 %v1085
        %v2972 = vunpack.c.l.b16 %v1086
        %v2973 = vunpack.c.h.b16 %v1086
        %v2974 = vunpack.c.l.b16 %v1087
        %v2975 = vunpack.c.h.b16 %v1087
        %v2976 = vunpack.c.l.b16 %v1088
        %v2977 = vunpack.c.h.b16 %v1088
        %v2978 = vunpack.c.l.b16 %v1089
        %v2979 = vunpack.c.h.b16 %v1089
        %v2980 = vunpack.c.l.b16 %v1090
        %v2981 = vunpack.c.h.b16 %v1090
        %v2982 = vunpack.c.l.b16 %v1091
        %v2983 = vunpack.c.h.b16 %v1091
        %v2984 = vunpack.c.l.b16 %v1092
        %v2985 = vunpack.c.h.b16 %v1092
        %v2986 = vunpack.c.l.b16 %v1093
        %v2987 = vunpack.c.h.b16 %v1093
        %v2988 = vunpack.c.l.b16 %v1094
        %v2989 = vunpack.c.h.b16 %v1094
        %v2990 = vunpack.c.l.b16 %v1095
        %v2991 = vunpack.c.h.b16 %v1095
        %v2992 = vunpack.c.l.b16 %v1096
        %v2993 = vunpack.c.h.b16 %v1096
        %v2994 = vunpack.c.l.b16 %v1097
        %v2995 = vunpack.c.h.b16 %v1097
        %v2996 = vunpack.c.l.b16 %v1098
        %v2997 = vunpack.c.h.b16 %v1098
        %v2998 = vunpack.c.l.b16 %v1099
        %v2999 = vunpack.c.h.b16 %v1099
        %v3000 = vunpack.c.l.b16 %v1100
        %v3001 = vunpack.c.h.b16 %v1100
        %v3002 = vunpack.c.l.b16 %v1101
        %v3003 = vunpack.c.h.b16 %v1101
        %v3004 = vunpack.c.l.b16 %v1102
        %v3005 = vunpack.c.h.b16 %v1102
        %v3006 = vunpack.c.l.b16 %v1103
        %v3007 = vunpack.c.h.b16 %v1103
        %v3008 = vunpack.c.l.b16 %v1104
        %v3009 = vunpack.c.h.b16 %v1104
        %v3010 = vunpack.c.l.b16 %v1105
        %v3011 = vunpack.c.h.b16 %v1105
        %v3012 = vunpack.c.l.b16 %v1106
        %v3013 = vunpack.c.h.b16 %v1106
        %v3014 = vunpack.c.l.b16 %v1107
        %v3015 = vunpack.c.h.b16 %v1107
        %v3016 = vunpack.c.l.b16 %v1108
        %v3017 = vunpack.c.h.b16 %v1108
        %v3018 = vunpack.c.l.b16 %v1109
        %v3019 = vunpack.c.h.b16 %v1109
        %v3020 = vunpack.c.l.b16 %v1110
        %v3021 = vunpack.c.h.b16 %v1110
        %v3022 = vunpack.c.l.b16 %v1111
        %v3023 = vunpack.c.h.b16 %v1111
        %v3024 = vunpack.c.l.b16 %v1112
        %v3025 = vunpack.c.h.b16 %v1112
        %v3026 = vunpack.c.l.b16 %v1113
        %v3027 = vunpack.c.h.b16 %v1113
        %v3028 = vunpack.c.l.b16 %v1114
        %v3029 = vunpack.c.h.b16 %v1114
        %v3030 = vunpack.c.l.b16 %v1115
        %v3031 = vunpack.c.h.b16 %v1115
        %v3032 = vunpack.c.l.b16 %v1116
        %v3033 = vunpack.c.h.b16 %v1116
        %v3034 = vunpack.c.l.b16 %v1117
        %v3035 = vunpack.c.h.b16 %v1117
        %v3036 = vunpack.c.l.b16 %v1118
        %v3037 = vunpack.c.h.b16 %v1118
        %v3038 = vunpack.c.l.b16 %v1119
        %v3039 = vunpack.c.h.b16 %v1119
        %v3040 = vpack.c.b16 %v1770, %v1760
        %v3041 = vpack.c.b16 %v1771, %v1761
        %v3042 = vpack.c.b16 %v1772, %v1762
        %v3043 = vpack.c.b16 %v1773, %v1763
        %v3044 = vpack.c.b16 %v1774, %v1764
        %v3045 = vpack.c.b16 %v1775, %v1765
        %v3046 = vpack.c.b16 %v1776, %v1766
        %v3047 = vpack.c.b16 %v1777, %v1767
        %v3048 = vpack.c.b16 %v1778, %v1768
        %v3049 = vpack.c.b16 %v1779, %v1769
        %v3050 = vpack.c.b16 %v1790, %v1780
        %v3051 = vpack.c.b16 %v1791, %v1781
        %v3052 = vpack.c.b16 %v1792, %v1782
        %v3053 = vpack.c.b16 %v1793, %v1783
        %v3054 = vpack.c.b16 %v1794, %v1784
        %v3055 = vpack.c.b16 %v1795, %v1785
        %v3056 = vpack.c.b16 %v1796, %v1786
        %v3057 = vpack.c.b16 %v1797, %v1787
        %v3058 = vpack.c.b16 %v1798, %v1788
        %v3059 = vpack.c.b16 %v1799, %v1789
        %v3060 = vpack.c.b16 %v1810, %v1800
        %v3061 = vpack.c.b16 %v1811, %v1801
        %v3062 = vpack.c.b16 %v1812, %v1802
        %v3063 = vpack.c.b16 %v1813, %v1803
        %v3064 = vpack.c.b16 %v1814, %v1804
        %v3065 = vpack.c.b16 %v1815, %v1805
        %v3066 = vpack.c.b16 %v1816, %v1806
        %v3067 = vpack.c.b16 %v1817, %v1807
        %v3068 = vpack.c.b16 %v1818, %v1808
        %v3069 = vpack.c.b16 %v1819, %v1809
        %v3070 = vpack.c.b16 %v1830, %v1820
        %v3071 = vpack.c.b16 %v1831, %v1821
        %v3072 = vpack.c.b16 %v1832, %v1822
        %v3073 = vpack.c.b16 %v1833, %v1823
        %v3074 = vpack.c.b16 %v1834, %v1824
        %v3075 = vpack.c.b16 %v1835, %v1825
        %v3076 = vpack.c.b16 %v1836, %v1826
        %v3077 = vpack.c.b16 %v1837, %v1827
        %v3078 = vpack.c.b16 %v1838, %v1828
        %v3079 = vpack.c.b16 %v1839, %v1829
        %v3080 = vpack.c.b16 %v1850, %v1840
        %v3081 = vpack.c.b16 %v1851, %v1841
        %v3082 = vpack.c.b16 %v1852, %v1842
        %v3083 = vpack.c.b16 %v1853, %v1843
        %v3084 = vpack.c.b16 %v1854, %v1844
        %v3085 = vpack.c.b16 %v1855, %v1845
        %v3086 = vpack.c.b16 %v1856, %v1846
        %v3087 = vpack.c.b16 %v1857, %v1847
        %v3088 = vpack.c.b16 %v1858, %v1848
        %v3089 = vpack.c.b16 %v1859, %v1849
        %v3090 = vpack.c.b16 %v1870, %v1860
        %v3091 = vpack.c.b16 %v1871, %v1861
        %v3092 = vpack.c.b16 %v1872, %v1862
        %v3093 = vpack.c.b16 %v1873, %v1863
        %v3094 = vpack.c.b16 %v1874, %v1864
        %v3095 = vpack.c.b16 %v1875, %v1865
        %v3096 = vpack.c.b16 %v1876, %v1866
        %v3097 = vpack.c.b16 %v1877, %v1867
        %v3098 = vpack.c.b16 %v1878, %v1868
        %v3099 = vpack.c.b16 %v1879, %v1869
        %v3100 = vpack.c.b16 %v1890, %v1880
        %v3101 = vpack.c.b16 %v1891, %v1881
        %v3102 = vpack.c.b16 %v1892, %v1882
        %v3103 = vpack.c.b16 %v1893, %v1883
        %v3104 = vpack.c.b16 %v1894, %v1884
        %v3105 = vpack.c.b16 %v1895, %v1885
        %v3106 = vpack.c.b16 %v1896, %v1886
        %v3107 = vpack.c.b16 %v1897, %v1887
        %v3108 = vpack.c.b16 %v1898, %v1888
        %v3109 = vpack.c.b16 %v1899, %v1889
        %v3110 = vpack.c.b16 %v1910, %v1900
        %v3111 = vpack.c.b16 %v1911, %v1901
        %v3112 = vpack.c.b16 %v1912, %v1902
        %v3113 = vpack.c.b16 %v1913, %v1903
        %v3114 = vpack.c.b16 %v1914, %v1904
        %v3115 = vpack.c.b16 %v1915, %v1905
        %v3116 = vpack.c.b16 %v1916, %v1906
        %v3117 = vpack.c.b16 %v1917, %v1907
        %v3118 = vpack.c.b16 %v1918, %v1908
        %v3119 = vpack.c.b16 %v1919, %v1909
        %v3120 = vpack.c.b16 %v1930, %v1920
        %v3121 = vpack.c.b16 %v1931, %v1921
        %v3122 = vpack.c.b16 %v1932, %v1922
        %v3123 = vpack.c.b16 %v1933, %v1923
        %v3124 = vpack.c.b16 %v1934, %v1924
        %v3125 = vpack.c.b16 %v1935, %v1925
        %v3126 = vpack.c.b16 %v1936, %v1926
        %v3127 = vpack.c.b16 %v1937, %v1927
        %v3128 = vpack.c.b16 %v1938, %v1928
        %v3129 = vpack.c.b16 %v1939, %v1929
        %v3130 = vpack.c.b16 %v1950, %v1940
        %v3131 = vpack.c.b16 %v1951, %v1941
        %v3132 = vpack.c.b16 %v1952, %v1942
        %v3133 = vpack.c.b16 %v1953, %v1943
        %v3134 = vpack.c.b16 %v1954, %v1944
        %v3135 = vpack.c.b16 %v1955, %v1945
        %v3136 = vpack.c.b16 %v1956, %v1946
        %v3137 = vpack.c.b16 %v1957, %v1947
        %v3138 = vpack.c.b16 %v1958, %v1948
        %v3139 = vpack.c.b16 %v1959, %v1949
        %v3140 = vpack.c.b16 %v1970, %v1960
        %v3141 = vpack.c.b16 %v1971, %v1961
        %v3142 = vpack.c.b16 %v1972, %v1962
        %v3143 = vpack.c.b16 %v1973, %v1963
        %v3144 = vpack.c.b16 %v1974, %v1964
        %v3145 = vpack.c.b16 %v1975, %v1965
        %v3146 = vpack.c.b16 %v1976, %v1966
        %v3147 = vpack.c.b16 %v1977, %v1967
        %v3148 = vpack.c.b16 %v1978, %v1968
        %v3149 = vpack.c.b16 %v1979, %v1969
        %v3150 = vpack.c.b16 %v1990, %v1980
        %v3151 = vpack.c.b16 %v1991, %v1981
        %v3152 = vpack.c.b16 %v1992, %v1982
        %v3153 = vpack.c.b16 %v1993, %v1983
        %v3154 = vpack.c.b16 %v1994, %v1984
        %v3155 = vpack.c.b16 %v1995, %v1985
        %v3156 = vpack.c.b16 %v1996, %v1986
        %v3157 = vpack.c.b16 %v1997, %v1987
        %v3158 = vpack.c.b16 %v1998, %v1988
        %v3159 = vpack.c.b16 %v1999, %v1989
        %v3160 = vpack.c.b16 %v2010, %v2000
        %v3161 = vpack.c.b16 %v2011, %v2001
        %v3162 = vpack.c.b16 %v2012, %v2002
        %v3163 = vpack.c.b16 %v2013, %v2003
        %v3164 = vpack.c.b16 %v2014, %v2004
        %v3165 = vpack.c.b16 %v2015, %v2005
        %v3166 = vpack.c.b16 %v2016, %v2006
        %v3167 = vpack.c.b16 %v2017, %v2007
        %v3168 = vpack.c.b16 %v2018, %v2008
        %v3169 = vpack.c.b16 %v2019, %v2009
        %v3170 = vpack.c.b16 %v2030, %v2020
        %v3171 = vpack.c.b16 %v2031, %v2021
        %v3172 = vpack.c.b16 %v2032, %v2022
        %v3173 = vpack.c.b16 %v2033, %v2023
        %v3174 = vpack.c.b16 %v2034, %v2024
        %v3175 = vpack.c.b16 %v2035, %v2025
        %v3176 = vpack.c.b16 %v2036, %v2026
        %v3177 = vpack.c.b16 %v2037, %v2027
        %v3178 = vpack.c.b16 %v2038, %v2028
        %v3179 = vpack.c.b16 %v2039, %v2029
        %v3180 = vpack.c.b16 %v2050, %v2040
        %v3181 = vpack.c.b16 %v2051, %v2041
        %v3182 = vpack.c.b16 %v2052, %v2042
        %v3183 = vpack.c.b16 %v2053, %v2043
        %v3184 = vpack.c.b16 %v2054, %v2044
        %v3185 = vpack.c.b16 %v2055, %v2045
        %v3186 = vpack.c.b16 %v2056, %v2046
        %v3187 = vpack.c.b16 %v2057, %v2047
        %v3188 = vpack.c.b16 %v2058, %v2048
        %v3189 = vpack.c.b16 %v2059, %v2049
        %v3190 = vpack.c.b16 %v2070, %v2060
        %v3191 = vpack.c.b16 %v2071, %v2061
        %v3192 = vpack.c.b16 %v2072, %v2062
        %v3193 = vpack.c.b16 %v2073, %v2063
        %v3194 = vpack.c.b16 %v2074, %v2064
        %v3195 = vpack.c.b16 %v2075, %v2065
        %v3196 = vpack.c.b16 %v2076, %v2066
        %v3197 = vpack.c.b16 %v2077, %v2067
        %v3198 = vpack.c.b16 %v2078, %v2068
        %v3199 = vpack.c.b16 %v2079, %v2069
        %v3200 = vpack.c.b16 %v2090, %v2080
        %v3201 = vpack.c.b16 %v2091, %v2081
        %v3202 = vpack.c.b16 %v2092, %v2082
        %v3203 = vpack.c.b16 %v2093, %v2083
        %v3204 = vpack.c.b16 %v2094, %v2084
        %v3205 = vpack.c.b16 %v2095, %v2085
        %v3206 = vpack.c.b16 %v2096, %v2086
        %v3207 = vpack.c.b16 %v2097, %v2087
        %v3208 = vpack.c.b16 %v2098, %v2088
        %v3209 = vpack.c.b16 %v2099, %v2089
        %v3210 = vpack.c.b16 %v2110, %v2100
        %v3211 = vpack.c.b16 %v2111, %v2101
        %v3212 = vpack.c.b16 %v2112, %v2102
        %v3213 = vpack.c.b16 %v2113, %v2103
        %v3214 = vpack.c.b16 %v2114, %v2104
        %v3215 = vpack.c.b16 %v2115, %v2105
        %v3216 = vpack.c.b16 %v2116, %v2106
        %v3217 = vpack.c.b16 %v2117, %v2107
        %v3218 = vpack.c.b16 %v2118, %v2108
        %v3219 = vpack.c.b16 %v2119, %v2109
        %v3220 = vpack.c.b16 %v2130, %v2120
        %v3221 = vpack.c.b16 %v2131, %v2121
        %v3222 = vpack.c.b16 %v2132, %v2122
        %v3223 = vpack.c.b16 %v2133, %v2123
        %v3224 = vpack.c.b16 %v2134, %v2124
        %v3225 = vpack.c.b16 %v2135, %v2125
        %v3226 = vpack.c.b16 %v2136, %v2126
        %v3227 = vpack.c.b16 %v2137, %v2127
        %v3228 = vpack.c.b16 %v2138, %v2128
        %v3229 = vpack.c.b16 %v2139, %v2129
        %v3230 = vpack.c.b16 %v2150, %v2140
        %v3231 = vpack.c.b16 %v2151, %v2141
        %v3232 = vpack.c.b16 %v2152, %v2142
        %v3233 = vpack.c.b16 %v2153, %v2143
        %v3234 = vpack.c.b16 %v2154, %v2144
        %v3235 = vpack.c.b16 %v2155, %v2145
        %v3236 = vpack.c.b16 %v2156, %v2146
        %v3237 = vpack.c.b16 %v2157, %v2147
        %v3238 = vpack.c.b16 %v2158, %v2148
        %v3239 = vpack.c.b16 %v2159, %v2149
        %v3240 = vpack.c.b16 %v2170, %v2160
        %v3241 = vpack.c.b16 %v2171, %v2161
        %v3242 = vpack.c.b16 %v2172, %v2162
        %v3243 = vpack.c.b16 %v2173, %v2163
        %v3244 = vpack.c.b16 %v2174, %v2164
        %v3245 = vpack.c.b16 %v2175, %v2165
        %v3246 = vpack.c.b16 %v2176, %v2166
        %v3247 = vpack.c.b16 %v2177, %v2167
        %v3248 = vpack.c.b16 %v2178, %v2168
        %v3249 = vpack.c.b16 %v2179, %v2169
        %v3250 = vpack.c.b16 %v2190, %v2180
        %v3251 = vpack.c.b16 %v2191, %v2181
        %v3252 = vpack.c.b16 %v2192, %v2182
        %v3253 = vpack.c.b16 %v2193, %v2183
        %v3254 = vpack.c.b16 %v2194, %v2184
        %v3255 = vpack.c.b16 %v2195, %v2185
        %v3256 = vpack.c.b16 %v2196, %v2186
        %v3257 = vpack.c.b16 %v2197, %v2187
        %v3258 = vpack.c.b16 %v2198, %v2188
        %v3259 = vpack.c.b16 %v2199, %v2189
        %v3260 = vpack.c.b16 %v2210, %v2200
        %v3261 = vpack.c.b16 %v2211, %v2201
        %v3262 = vpack.c.b16 %v2212, %v2202
        %v3263 = vpack.c.b16 %v2213, %v2203
        %v3264 = vpack.c.b16 %v2214, %v2204
        %v3265 = vpack.c.b16 %v2215, %v2205
        %v3266 = vpack.c.b16 %v2216, %v2206
        %v3267 = vpack.c.b16 %v2217, %v2207
        %v3268 = vpack.c.b16 %v2218, %v2208
        %v3269 = vpack.c.b16 %v2219, %v2209
        %v3270 = vpack.c.b16 %v2230, %v2220
        %v3271 = vpack.c.b16 %v2231, %v2221
        %v3272 = vpack.c.b16 %v2232, %v2222
        %v3273 = vpack.c.b16 %v2233, %v2223
        %v3274 = vpack.c.b16 %v2234, %v2224
        %v3275 = vpack.c.b16 %v2235, %v2225
        %v3276 = vpack.c.b16 %v2236, %v2226
        %v3277 = vpack.c.b16 %v2237, %v2227
        %v3278 = vpack.c.b16 %v2238, %v2228
        %v3279 = vpack.c.b16 %v2239, %v2229
        %v3280 = vpack.c.b16 %v2250, %v2240
        %v3281 = vpack.c.b16 %v2251, %v2241
        %v3282 = vpack.c.b16 %v2252, %v2242
        %v3283 = vpack.c.b16 %v2253, %v2243
        %v3284 = vpack.c.b16 %v2254, %v2244
        %v3285 = vpack.c.b16 %v2255, %v2245
        %v3286 = vpack.c.b16 %v2256, %v2246
        %v3287 = vpack.c.b16 %v2257, %v2247
        %v3288 = vpack.c.b16 %v2258, %v2248
        %v3289 = vpack.c.b16 %v2259, %v2249
        %v3290 = vpack.c.b16 %v2270, %v2260
        %v3291 = vpack.c.b16 %v2271, %v2261
        %v3292 = vpack.c.b16 %v2272, %v2262
        %v3293 = vpack.c.b16 %v2273, %v2263
        %v3294 = vpack.c.b16 %v2274, %v2264
        %v3295 = vpack.c.b16 %v2275, %v2265
        %v3296 = vpack.c.b16 %v2276, %v2266
        %v3297 = vpack.c.b16 %v2277, %v2267
        %v3298 = vpack.c.b16 %v2278, %v2268
        %v3299 = vpack.c.b16 %v2279, %v2269
        %v3300 = vpack.c.b16 %v2290, %v2280
        %v3301 = vpack.c.b16 %v2291, %v2281
        %v3302 = vpack.c.b16 %v2292, %v2282
        %v3303 = vpack.c.b16 %v2293, %v2283
        %v3304 = vpack.c.b16 %v2294, %v2284
        %v3305 = vpack.c.b16 %v2295, %v2285
        %v3306 = vpack.c.b16 %v2296, %v2286
        %v3307 = vpack.c.b16 %v2297, %v2287
        %v3308 = vpack.c.b16 %v2298, %v2288
        %v3309 = vpack.c.b16 %v2299, %v2289
        %v3310 = vpack.c.b16 %v2310, %v2300
        %v3311 = vpack.c.b16 %v2311, %v2301
        %v3312 = vpack.c.b16 %v2312, %v2302
        %v3313 = vpack.c.b16 %v2313, %v2303
        %v3314 = vpack.c.b16 %v2314, %v2304
        %v3315 = vpack.c.b16 %v2315, %v2305
        %v3316 = vpack.c.b16 %v2316, %v2306
        %v3317 = vpack.c.b16 %v2317, %v2307
        %v3318 = vpack.c.b16 %v2318, %v2308
        %v3319 = vpack.c.b16 %v2319, %v2309
        %v3320 = vpack.c.b16 %v2330, %v2320
        %v3321 = vpack.c.b16 %v2331, %v2321
        %v3322 = vpack.c.b16 %v2332, %v2322
        %v3323 = vpack.c.b16 %v2333, %v2323
        %v3324 = vpack.c.b16 %v2334, %v2324
        %v3325 = vpack.c.b16 %v2335, %v2325
        %v3326 = vpack.c.b16 %v2336, %v2326
        %v3327 = vpack.c.b16 %v2337, %v2327
        %v3328 = vpack.c.b16 %v2338, %v2328
        %v3329 = vpack.c.b16 %v2339, %v2329
        %v3330 = vpack.c.b16 %v2350, %v2340
        %v3331 = vpack.c.b16 %v2351, %v2341
        %v3332 = vpack.c.b16 %v2352, %v2342
        %v3333 = vpack.c.b16 %v2353, %v2343
        %v3334 = vpack.c.b16 %v2354, %v2344
        %v3335 = vpack.c.b16 %v2355, %v2345
        %v3336 = vpack.c.b16 %v2356, %v2346
        %v3337 = vpack.c.b16 %v2357, %v2347
        %v3338 = vpack.c.b16 %v2358, %v2348
        %v3339 = vpack.c.b16 %v2359, %v2349
        %v3340 = vpack.c.b16 %v2370, %v2360
        %v3341 = vpack.c.b16 %v2371, %v2361
        %v3342 = vpack.c.b16 %v2372, %v2362
        %v3343 = vpack.c.b16 %v2373, %v2363
        %v3344 = vpack.c.b16 %v2374, %v2364
        %v3345 = vpack.c.b16 %v2375, %v2365
        %v3346 = vpack.c.b16 %v2376, %v2366
        %v3347 = vpack.c.b16 %v2377, %v2367
        %v3348 = vpack.c.b16 %v2378, %v2368
        %v3349 = vpack.c.b16 %v2379, %v2369
        %v3350 = vpack.c.b16 %v2390, %v2380
        %v3351 = vpack.c.b16 %v2391, %v2381
        %v3352 = vpack.c.b16 %v2392, %v2382
        %v3353 = vpack.c.b16 %v2393, %v2383
        %v3354 = vpack.c.b16 %v2394, %v2384
        %v3355 = vpack.c.b16 %v2395, %v2385
        %v3356 = vpack.c.b16 %v2396, %v2386
        %v3357 = vpack.c.b16 %v2397, %v2387
        %v3358 = vpack.c.b16 %v2398, %v2388
        %v3359 = vpack.c.b16 %v2399, %v2389
        %v3360 = vpack.c.b16 %v2410, %v2400
        %v3361 = vpack.c.b16 %v2411, %v2401
        %v3362 = vpack.c.b16 %v2412, %v2402
        %v3363 = vpack.c.b16 %v2413, %v2403
        %v3364 = vpack.c.b16 %v2414, %v2404
        %v3365 = vpack.c.b16 %v2415, %v2405
        %v3366 = vpack.c.b16 %v2416, %v2406
        %v3367 = vpack.c.b16 %v2417, %v2407
        %v3368 = vpack.c.b16 %v2418, %v2408
        %v3369 = vpack.c.b16 %v2419, %v2409
        %v3370 = vpack.c.b16 %v2430, %v2420
        %v3371 = vpack.c.b16 %v2431, %v2421
        %v3372 = vpack.c.b16 %v2432, %v2422
        %v3373 = vpack.c.b16 %v2433, %v2423
        %v3374 = vpack.c.b16 %v2434, %v2424
        %v3375 = vpack.c.b16 %v2435, %v2425
        %v3376 = vpack.c.b16 %v2436, %v2426
        %v3377 = vpack.c.b16 %v2437, %v2427
        %v3378 = vpack.c.b16 %v2438, %v2428
        %v3379 = vpack.c.b16 %v2439, %v2429
        %v3380 = vpack.c.b16 %v2450, %v2440
        %v3381 = vpack.c.b16 %v2451, %v2441
        %v3382 = vpack.c.b16 %v2452, %v2442
        %v3383 = vpack.c.b16 %v2453, %v2443
        %v3384 = vpack.c.b16 %v2454, %v2444
        %v3385 = vpack.c.b16 %v2455, %v2445
        %v3386 = vpack.c.b16 %v2456, %v2446
        %v3387 = vpack.c.b16 %v2457, %v2447
        %v3388 = vpack.c.b16 %v2458, %v2448
        %v3389 = vpack.c.b16 %v2459, %v2449
        %v3390 = vpack.c.b16 %v2470, %v2460
        %v3391 = vpack.c.b16 %v2471, %v2461
        %v3392 = vpack.c.b16 %v2472, %v2462
        %v3393 = vpack.c.b16 %v2473, %v2463
        %v3394 = vpack.c.b16 %v2474, %v2464
        %v3395 = vpack.c.b16 %v2475, %v2465
        %v3396 = vpack.c.b16 %v2476, %v2466
        %v3397 = vpack.c.b16 %v2477, %v2467
        %v3398 = vpack.c.b16 %v2478, %v2468
        %v3399 = vpack.c.b16 %v2479, %v2469
        %v3400 = vpack.c.b16 %v2490, %v2480
        %v3401 = vpack.c.b16 %v2491, %v2481
        %v3402 = vpack.c.b16 %v2492, %v2482
        %v3403 = vpack.c.b16 %v2493, %v2483
        %v3404 = vpack.c.b16 %v2494, %v2484
        %v3405 = vpack.c.b16 %v2495, %v2485
        %v3406 = vpack.c.b16 %v2496, %v2486
        %v3407 = vpack.c.b16 %v2497, %v2487
        %v3408 = vpack.c.b16 %v2498, %v2488
        %v3409 = vpack.c.b16 %v2499, %v2489
        %v3410 = vpack.c.b16 %v2510, %v2500
        %v3411 = vpack.c.b16 %v2511, %v2501
        %v3412 = vpack.c.b16 %v2512, %v2502
        %v3413 = vpack.c.b16 %v2513, %v2503
        %v3414 = vpack.c.b16 %v2514, %v2504
        %v3415 = vpack.c.b16 %v2515, %v2505
        %v3416 = vpack.c.b16 %v2516, %v2506
        %v3417 = vpack.c.b16 %v2517, %v2507
        %v3418 = vpack.c.b16 %v2518, %v2508
        %v3419 = vpack.c.b16 %v2519, %v2509
        %v3420 = vpack.c.b16 %v2530, %v2520
        %v3421 = vpack.c.b16 %v2531, %v2521
        %v3422 = vpack.c.b16 %v2532, %v2522
        %v3423 = vpack.c.b16 %v2533, %v2523
        %v3424 = vpack.c.b16 %v2534, %v2524
        %v3425 = vpack.c.b16 %v2535, %v2525
        %v3426 = vpack.c.b16 %v2536, %v2526
        %v3427 = vpack.c.b16 %v2537, %v2527
        %v3428 = vpack.c.b16 %v2538, %v2528
        %v3429 = vpack.c.b16 %v2539, %v2529
        %v3430 = vpack.c.b16 %v2550, %v2540
        %v3431 = vpack.c.b16 %v2551, %v2541
        %v3432 = vpack.c.b16 %v2552, %v2542
        %v3433 = vpack.c.b16 %v2553, %v2543
        %v3434 = vpack.c.b16 %v2554, %v2544
        %v3435 = vpack.c.b16 %v2555, %v2545
        %v3436 = vpack.c.b16 %v2556, %v2546
        %v3437 = vpack.c.b16 %v2557, %v2547
        %v3438 = vpack.c.b16 %v2558, %v2548
        %v3439 = vpack.c.b16 %v2559, %v2549
        %v3440 = vpack.c.b16 %v2570, %v2560
        %v3441 = vpack.c.b16 %v2571, %v2561
        %v3442 = vpack.c.b16 %v2572, %v2562
        %v3443 = vpack.c.b16 %v2573, %v2563
        %v3444 = vpack.c.b16 %v2574, %v2564
        %v3445 = vpack.c.b16 %v2575, %v2565
        %v3446 = vpack.c.b16 %v2576, %v2566
        %v3447 = vpack.c.b16 %v2577, %v2567
        %v3448 = vpack.c.b16 %v2578, %v2568
        %v3449 = vpack.c.b16 %v2579, %v2569
        %v3450 = vpack.c.b16 %v2590, %v2580
        %v3451 = vpack.c.b16 %v2591, %v2581
        %v3452 = vpack.c.b16 %v2592, %v2582
        %v3453 = vpack.c.b16 %v2593, %v2583
        %v3454 = vpack.c.b16 %v2594, %v2584
        %v3455 = vpack.c.b16 %v2595, %v2585
        %v3456 = vpack.c.b16 %v2596, %v2586
        %v3457 = vpack.c.b16 %v2597, %v2587
        %v3458 = vpack.c.b16 %v2598, %v2588
        %v3459 = vpack.c.b16 %v2599, %v2589
        %v3460 = vpack.c.b16 %v2610, %v2600
        %v3461 = vpack.c.b16 %v2611, %v2601
        %v3462 = vpack.c.b16 %v2612, %v2602
        %v3463 = vpack.c.b16 %v2613, %v2603
        %v3464 = vpack.c.b16 %v2614, %v2604
        %v3465 = vpack.c.b16 %v2615, %v2605
        %v3466 = vpack.c.b16 %v2616, %v2606
        %v3467 = vpack.c.b16 %v2617, %v2607
        %v3468 = vpack.c.b16 %v2618, %v2608
        %v3469 = vpack.c.b16 %v2619, %v2609
        %v3470 = vpack.c.b16 %v2630, %v2620
        %v3471 = vpack.c.b16 %v2631, %v2621
        %v3472 = vpack.c.b16 %v2632, %v2622
        %v3473 = vpack.c.b16 %v2633, %v2623
        %v3474 = vpack.c.b16 %v2634, %v2624
        %v3475 = vpack.c.b16 %v2635, %v2625
        %v3476 = vpack.c.b16 %v2636, %v2626
        %v3477 = vpack.c.b16 %v2637, %v2627
        %v3478 = vpack.c.b16 %v2638, %v2628
        %v3479 = vpack.c.b16 %v2639, %v2629
        %v3480 = vpack.c.b16 %v2650, %v2640
        %v3481 = vpack.c.b16 %v2651, %v2641
        %v3482 = vpack.c.b16 %v2652, %v2642
        %v3483 = vpack.c.b16 %v2653, %v2643
        %v3484 = vpack.c.b16 %v2654, %v2644
        %v3485 = vpack.c.b16 %v2655, %v2645
        %v3486 = vpack.c.b16 %v2656, %v2646
        %v3487 = vpack.c.b16 %v2657, %v2647
        %v3488 = vpack.c.b16 %v2658, %v2648
        %v3489 = vpack.c.b16 %v2659, %v2649
        %v3490 = vpack.c.b16 %v2670, %v2660
        %v3491 = vpack.c.b16 %v2671, %v2661
        %v3492 = vpack.c.b16 %v2672, %v2662
        %v3493 = vpack.c.b16 %v2673, %v2663
        %v3494 = vpack.c.b16 %v2674, %v2664
        %v3495 = vpack.c.b16 %v2675, %v2665
        %v3496 = vpack.c.b16 %v2676, %v2666
        %v3497 = vpack.c.b16 %v2677, %v2667
        %v3498 = vpack.c.b16 %v2678, %v2668
        %v3499 = vpack.c.b16 %v2679, %v2669
        %v3500 = vpack.c.b16 %v2690, %v2680
        %v3501 = vpack.c.b16 %v2691, %v2681
        %v3502 = vpack.c.b16 %v2692, %v2682
        %v3503 = vpack.c.b16 %v2693, %v2683
        %v3504 = vpack.c.b16 %v2694, %v2684
        %v3505 = vpack.c.b16 %v2695, %v2685
        %v3506 = vpack.c.b16 %v2696, %v2686
        %v3507 = vpack.c.b16 %v2697, %v2687
        %v3508 = vpack.c.b16 %v2698, %v2688
        %v3509 = vpack.c.b16 %v2699, %v2689
        %v3510 = vpack.c.b16 %v2710, %v2700
        %v3511 = vpack.c.b16 %v2711, %v2701
        %v3512 = vpack.c.b16 %v2712, %v2702
        %v3513 = vpack.c.b16 %v2713, %v2703
        %v3514 = vpack.c.b16 %v2714, %v2704
        %v3515 = vpack.c.b16 %v2715, %v2705
        %v3516 = vpack.c.b16 %v2716, %v2706
        %v3517 = vpack.c.b16 %v2717, %v2707
        %v3518 = vpack.c.b16 %v2718, %v2708
        %v3519 = vpack.c.b16 %v2719, %v2709
        %v3520 = vpack.c.b16 %v2730, %v2720
        %v3521 = vpack.c.b16 %v2731, %v2721
        %v3522 = vpack.c.b16 %v2732, %v2722
        %v3523 = vpack.c.b16 %v2733, %v2723
        %v3524 = vpack.c.b16 %v2734, %v2724
        %v3525 = vpack.c.b16 %v2735, %v2725
        %v3526 = vpack.c.b16 %v2736, %v2726
        %v3527 = vpack.c.b16 %v2737, %v2727
        %v3528 = vpack.c.b16 %v2738, %v2728
        %v3529 = vpack.c.b16 %v2739, %v2729
        %v3530 = vpack.c.b16 %v2750, %v2740
        %v3531 = vpack.c.b16 %v2751, %v2741
        %v3532 = vpack.c.b16 %v2752, %v2742
        %v3533 = vpack.c.b16 %v2753, %v2743
        %v3534 = vpack.c.b16 %v2754, %v2744
        %v3535 = vpack.c.b16 %v2755, %v2745
        %v3536 = vpack.c.b16 %v2756, %v2746
        %v3537 = vpack.c.b16 %v2757, %v2747
        %v3538 = vpack.c.b16 %v2758, %v2748
        %v3539 = vpack.c.b16 %v2759, %v2749
        %v3540 = vpack.c.b16 %v2770, %v2760
        %v3541 = vpack.c.b16 %v2771, %v2761
        %v3542 = vpack.c.b16 %v2772, %v2762
        %v3543 = vpack.c.b16 %v2773, %v2763
        %v3544 = vpack.c.b16 %v2774, %v2764
        %v3545 = vpack.c.b16 %v2775, %v2765
        %v3546 = vpack.c.b16 %v2776, %v2766
        %v3547 = vpack.c.b16 %v2777, %v2767
        %v3548 = vpack.c.b16 %v2778, %v2768
        %v3549 = vpack.c.b16 %v2779, %v2769
        %v3550 = vpack.c.b16 %v2790, %v2780
        %v3551 = vpack.c.b16 %v2791, %v2781
        %v3552 = vpack.c.b16 %v2792, %v2782
        %v3553 = vpack.c.b16 %v2793, %v2783
        %v3554 = vpack.c.b16 %v2794, %v2784
        %v3555 = vpack.c.b16 %v2795, %v2785
        %v3556 = vpack.c.b16 %v2796, %v2786
        %v3557 = vpack.c.b16 %v2797, %v2787
        %v3558 = vpack.c.b16 %v2798, %v2788
        %v3559 = vpack.c.b16 %v2799, %v2789
        %v3560 = vpack.c.b16 %v2810, %v2800
        %v3561 = vpack.c.b16 %v2811, %v2801
        %v3562 = vpack.c.b16 %v2812, %v2802
        %v3563 = vpack.c.b16 %v2813, %v2803
        %v3564 = vpack.c.b16 %v2814, %v2804
        %v3565 = vpack.c.b16 %v2815, %v2805
        %v3566 = vpack.c.b16 %v2816, %v2806
        %v3567 = vpack.c.b16 %v2817, %v2807
        %v3568 = vpack.c.b16 %v2818, %v2808
        %v3569 = vpack.c.b16 %v2819, %v2809
        %v3570 = vpack.c.b16 %v2830, %v2820
        %v3571 = vpack.c.b16 %v2831, %v2821
        %v3572 = vpack.c.b16 %v2832, %v2822
        %v3573 = vpack.c.b16 %v2833, %v2823
        %v3574 = vpack.c.b16 %v2834, %v2824
        %v3575 = vpack.c.b16 %v2835, %v2825
        %v3576 = vpack.c.b16 %v2836, %v2826
        %v3577 = vpack.c.b16 %v2837, %v2827
        %v3578 = vpack.c.b16 %v2838, %v2828
        %v3579 = vpack.c.b16 %v2839, %v2829
        %v3580 = vpack.c.b16 %v2850, %v2840
        %v3581 = vpack.c.b16 %v2851, %v2841
        %v3582 = vpack.c.b16 %v2852, %v2842
        %v3583 = vpack.c.b16 %v2853, %v2843
        %v3584 = vpack.c.b16 %v2854, %v2844
        %v3585 = vpack.c.b16 %v2855, %v2845
        %v3586 = vpack.c.b16 %v2856, %v2846
        %v3587 = vpack.c.b16 %v2857, %v2847
        %v3588 = vpack.c.b16 %v2858, %v2848
        %v3589 = vpack.c.b16 %v2859, %v2849
        %v3590 = vpack.c.b16 %v2870, %v2860
        %v3591 = vpack.c.b16 %v2871, %v2861
        %v3592 = vpack.c.b16 %v2872, %v2862
        %v3593 = vpack.c.b16 %v2873, %v2863
        %v3594 = vpack.c.b16 %v2874, %v2864
        %v3595 = vpack.c.b16 %v2875, %v2865
        %v3596 = vpack.c.b16 %v2876, %v2866
        %v3597 = vpack.c.b16 %v2877, %v2867
        %v3598 = vpack.c.b16 %v2878, %v2868
        %v3599 = vpack.c.b16 %v2879, %v2869
        %v3600 = vpack.c.b16 %v2890, %v2880
        %v3601 = vpack.c.b16 %v2891, %v2881
        %v3602 = vpack.c.b16 %v2892, %v2882
        %v3603 = vpack.c.b16 %v2893, %v2883
        %v3604 = vpack.c.b16 %v2894, %v2884
        %v3605 = vpack.c.b16 %v2895, %v2885
        %v3606 = vpack.c.b16 %v2896, %v2886
        %v3607 = vpack.c.b16 %v2897, %v2887
        %v3608 = vpack.c.b16 %v2898, %v2888
        %v3609 = vpack.c.b16 %v2899, %v2889
        %v3610 = vpack.c.b16 %v2910, %v2900
        %v3611 = vpack.c.b16 %v2911, %v2901
        %v3612 = vpack.c.b16 %v2912, %v2902
        %v3613 = vpack.c.b16 %v2913, %v2903
        %v3614 = vpack.c.b16 %v2914, %v2904
        %v3615 = vpack.c.b16 %v2915, %v2905
        %v3616 = vpack.c.b16 %v2916, %v2906
        %v3617 = vpack.c.b16 %v2917, %v2907
        %v3618 = vpack.c.b16 %v2918, %v2908
        %v3619 = vpack.c.b16 %v2919, %v2909
        %v3620 = vpack.c.b16 %v2930, %v2920
        %v3621 = vpack.c.b16 %v2931, %v2921
        %v3622 = vpack.c.b16 %v2932, %v2922
        %v3623 = vpack.c.b16 %v2933, %v2923
        %v3624 = vpack.c.b16 %v2934, %v2924
        %v3625 = vpack.c.b16 %v2935, %v2925
        %v3626 = vpack.c.b16 %v2936, %v2926
        %v3627 = vpack.c.b16 %v2937, %v2927
        %v3628 = vpack.c.b16 %v2938, %v2928
        %v3629 = vpack.c.b16 %v2939, %v2929
        %v3630 = vpack.c.b16 %v2950, %v2940
        %v3631 = vpack.c.b16 %v2951, %v2941
        %v3632 = vpack.c.b16 %v2952, %v2942
        %v3633 = vpack.c.b16 %v2953, %v2943
        %v3634 = vpack.c.b16 %v2954, %v2944
        %v3635 = vpack.c.b16 %v2955, %v2945
        %v3636 = vpack.c.b16 %v2956, %v2946
        %v3637 = vpack.c.b16 %v2957, %v2947
        %v3638 = vpack.c.b16 %v2958, %v2948
        %v3639 = vpack.c.b16 %v2959, %v2949
        %v3640 = vpack.c.b16 %v2970, %v2960
        %v3641 = vpack.c.b16 %v2971, %v2961
        %v3642 = vpack.c.b16 %v2972, %v2962
        %v3643 = vpack.c.b16 %v2973, %v2963
        %v3644 = vpack.c.b16 %v2974, %v2964
        %v3645 = vpack.c.b16 %v2975, %v2965
        %v3646 = vpack.c.b16 %v2976, %v2966
        %v3647 = vpack.c.b16 %v2977, %v2967
        %v3648 = vpack.c.b16 %v2978, %v2968
        %v3649 = vpack.c.b16 %v2979, %v2969
        %v3650 = vpack.c.b16 %v2990, %v2980
        %v3651 = vpack.c.b16 %v2991, %v2981
        %v3652 = vpack.c.b16 %v2992, %v2982
        %v3653 = vpack.c.b16 %v2993, %v2983
        %v3654 = vpack.c.b16 %v2994, %v2984
        %v3655 = vpack.c.b16 %v2995, %v2985
        %v3656 = vpack.c.b16 %v2996, %v2986
        %v3657 = vpack.c.b16 %v2997, %v2987
        %v3658 = vpack.c.b16 %v2998, %v2988
        %v3659 = vpack.c.b16 %v2999, %v2989
        %v3660 = vpack.c.b16 %v3010, %v3000
        %v3661 = vpack.c.b16 %v3011, %v3001
        %v3662 = vpack.c.b16 %v3012, %v3002
        %v3663 = vpack.c.b16 %v3013, %v3003
        %v3664 = vpack.c.b16 %v3014, %v3004
        %v3665 = vpack.c.b16 %v3015, %v3005
        %v3666 = vpack.c.b16 %v3016, %v3006
        %v3667 = vpack.c.b16 %v3017, %v3007
        %v3668 = vpack.c.b16 %v3018, %v3008
        %v3669 = vpack.c.b16 %v3019, %v3009
        %v3670 = vpack.c.b16 %v3030, %v3020
        %v3671 = vpack.c.b16 %v3031, %v3021
        %v3672 = vpack.c.b16 %v3032, %v3022
        %v3673 = vpack.c.b16 %v3033, %v3023
        %v3674 = vpack.c.b16 %v3034, %v3024
        %v3675 = vpack.c.b16 %v3035, %v3025
        %v3676 = vpack.c.b16 %v3036, %v3026
        %v3677 = vpack.c.b16 %v3037, %v3027
        %v3678 = vpack.c.b16 %v3038, %v3028
        %v3679 = vpack.c.b16 %v3039, %v3029
        %4320 = vmatprep.subr.bf16.mxu0 %v3041
        %4321 = vmatpush1.bf16.msra.mxu0 %v3040
        %4322 = vmatprep.subr.bf16.mxu0 %v3051
        %4323 = vmatpush1.bf16.msra.mxu0 %v3050
        %4324 = vmatprep.subr.bf16.mxu0 %v3061
        %4325 = vmatpush1.bf16.msra.mxu0 %v3060
        %4326 = vmatprep.subr.bf16.mxu0 %v3071
        %4327 = vmatpush1.bf16.msra.mxu0 %v3070
        %4328 = vmatprep.subr.bf16.mxu0 %v3081
        %4329 = vmatpush1.bf16.msra.mxu0 %v3080
        %4330 = vmatprep.subr.bf16.mxu0 %v3091
        %4331 = vmatpush1.bf16.msra.mxu0 %v3090
        %4332 = vmatprep.subr.bf16.mxu0 %v3101
        %4333 = vmatpush1.bf16.msra.mxu0 %v3100
        %4334 = vmatprep.subr.bf16.mxu0 %v3111
        %4335 = vmatpush1.bf16.msra.mxu0 %v3110
        %4336 = vmatprep.subr.bf16.mxu0 %v3121
        %4337 = vmatpush1.bf16.msra.mxu0 %v3120
        %4338 = vmatprep.subr.bf16.mxu0 %v3131
        %4339 = vmatpush1.bf16.msra.mxu0 %v3130
        %4340 = vmatprep.subr.bf16.mxu0 %v3141
        %4341 = vmatpush1.bf16.msra.mxu0 %v3140
        %4342 = vmatprep.subr.bf16.mxu0 %v3151
        %4343 = vmatpush1.bf16.msra.mxu0 %v3150
        %4344 = vmatprep.subr.bf16.mxu0 %v3161
        %4345 = vmatpush1.bf16.msra.mxu0 %v3160
        %4346 = vmatprep.subr.bf16.mxu0 %v3171
        %4347 = vmatpush1.bf16.msra.mxu0 %v3170
        %4348 = vmatprep.subr.bf16.mxu0 %v3181
        %4349 = vmatpush1.bf16.msra.mxu0 %v3180
        %4350 = vmatprep.subr.bf16.mxu0 %v3191
        %4351 = vmatpush1.bf16.msra.mxu0 %v3190
        %4352 = vmatprep.mubr.bf16.mxu0 %v457
        %4353 = vmatmul.mubr.bf16.gmra.mrb[0].mxu0 %v456
        %v4354 = vpop.f32.mrb[0].mxu0
        %v4355 = vadd.f32 0.0, %v4354
        %v4356 = vpop.f32.mrb[0].mxu0
        %v4357 = vadd.f32 0.0, %v4356
        %v4358 = vpop.f32.mrb[0].mxu0
        %v4359 = vadd.f32 0.0, %v4358
        %v4360 = vpop.f32.mrb[0].mxu0
        %v4361 = vadd.f32 0.0, %v4360
        %4362 = vmatprep.mubr.bf16.mxu0 %v465
        %4363 = vmatmul.mubr.bf16.gmra.mrb[0].mxu0 %v464
        %v4364 = vpop.f32.mrb[0].mxu0
        %v4365 = vadd.f32 0.0, %v4364
        %v4366 = vpop.f32.mrb[0].mxu0
        %v4367 = vadd.f32 0.0, %v4366
        %v4368 = vpop.f32.mrb[0].mxu0
        %v4369 = vadd.f32 0.0, %v4368
        %v4370 = vpop.f32.mrb[0].mxu0
        %v4371 = vadd.f32 0.0, %v4370
        %4372 = vmatprep.mubr.bf16.mxu0 %v473
        %4373 = vmatmul.mubr.bf16.gmra.mrb[0].mxu0 %v472
        %v4374 = vpop.f32.mrb[0].mxu0
        %v4375 = vadd.f32 0.0, %v4374
        %v4376 = vpop.f32.mrb[0].mxu0
        %v4377 = vadd.f32 0.0, %v4376
        %v4378 = vpop.f32.mrb[0].mxu0
        %v4379 = vpop.f32.mrb[0].mxu0
        %4380 = vdwg.mxu0
        %4381 = vmatprep.subr.bf16.mxu0 %v3201
        %4382 = vmatpush1.bf16.msra.mxu0 %v3200
        %4383 = vmatprep.subr.bf16.mxu0 %v3211
        %4384 = vmatpush1.bf16.msra.mxu0 %v3210
        %4385 = vmatprep.subr.bf16.mxu0 %v3221
        %4386 = vmatpush1.bf16.msra.mxu0 %v3220
        %4387 = vmatprep.subr.bf16.mxu0 %v3231
        %4388 = vmatpush1.bf16.msra.mxu0 %v3230
        %4389 = vmatprep.subr.bf16.mxu0 %v3241
        %4390 = vmatpush1.bf16.msra.mxu0 %v3240
        %4391 = vmatprep.subr.bf16.mxu0 %v3251
        %4392 = vmatpush1.bf16.msra.mxu0 %v3250
        %4393 = vmatprep.subr.bf16.mxu0 %v3261
        %4394 = vmatpush1.bf16.msra.mxu0 %v3260
        %4395 = vmatprep.subr.bf16.mxu0 %v3271
        %4396 = vmatpush1.bf16.msra.mxu0 %v3270
        %4397 = vmatprep.subr.bf16.mxu0 %v3281
        %4398 = vmatpush1.bf16.msra.mxu0 %v3280
        %4399 = vmatprep.subr.bf16.mxu0 %v3291
        %4400 = vmatpush1.bf16.msra.mxu0 %v3290
        %4401 = vmatprep.subr.bf16.mxu0 %v3301
        %4402 = vmatpush1.bf16.msra.mxu0 %v3300
        %4403 = vmatprep.subr.bf16.mxu0 %v3311
        %4404 = vmatpush1.bf16.msra.mxu0 %v3310
        %4405 = vmatprep.subr.bf16.mxu0 %v3321
        %4406 = vmatpush1.bf16.msra.mxu0 %v3320
        %4407 = vmatprep.subr.bf16.mxu0 %v3331
        %4408 = vmatpush1.bf16.msra.mxu0 %v3330
        %4409 = vmatprep.subr.bf16.mxu0 %v3341
        %4410 = vmatpush1.bf16.msra.mxu0 %v3340
        %4411 = vmatprep.subr.bf16.mxu0 %v3351
        %4412 = vmatpush1.bf16.msra.mxu0 %v3350
        %4413 = vmatprep.mubr.bf16.mxu0 %v459
        %4414 = vmatmul.mubr.bf16.gmra.mrb[0].mxu0 %v458
        %v4415 = vpop.f32.mrb[0].mxu0
        %v4416 = vadd.f32 %v4355, %v4415
        %v4417 = vpop.f32.mrb[0].mxu0
        %v4418 = vadd.f32 %v4357, %v4417
        %v4419 = vpop.f32.mrb[0].mxu0
        %v4420 = vadd.f32 %v4359, %v4419
        %v4421 = vpop.f32.mrb[0].mxu0
        %v4422 = vadd.f32 %v4361, %v4421
        %4423 = vmatprep.mubr.bf16.mxu0 %v467
        %4424 = vmatmul.mubr.bf16.gmra.mrb[0].mxu0 %v466
        %v4425 = vpop.f32.mrb[0].mxu0
        %v4426 = vadd.f32 %v4365, %v4425
        %v4427 = vpop.f32.mrb[0].mxu0
        %v4428 = vadd.f32 %v4367, %v4427
        %v4429 = vpop.f32.mrb[0].mxu0
        %v4430 = vadd.f32 %v4369, %v4429
        %v4431 = vpop.f32.mrb[0].mxu0
        %v4432 = vadd.f32 %v4371, %v4431
        %4433 = vmatprep.mubr.bf16.mxu0 %v475
        %4434 = vmatmul.mubr.bf16.gmra.mrb[0].mxu0 %v474
        %v4435 = vpop.f32.mrb[0].mxu0
        %v4436 = vadd.f32 %v4375, %v4435
        %v4437 = vpop.f32.mrb[0].mxu0
        %v4438 = vadd.f32 %v4377, %v4437
        %v4439 = vpop.f32.mrb[0].mxu0
        %v4440 = vpop.f32.mrb[0].mxu0
        %4441 = vdwg.mxu0
        %4442 = vmatprep.subr.bf16.mxu0 %v3361
        %4443 = vmatpush1.bf16.msra.mxu0 %v3360
        %4444 = vmatprep.subr.bf16.mxu0 %v3371
        %4445 = vmatpush1.bf16.msra.mxu0 %v3370
        %4446 = vmatprep.subr.bf16.mxu0 %v3381
        %4447 = vmatpush1.bf16.msra.mxu0 %v3380
        %4448 = vmatprep.subr.bf16.mxu0 %v3391
        %4449 = vmatpush1.bf16.msra.mxu0 %v3390
        %4450 = vmatprep.subr.bf16.mxu0 %v3401
        %4451 = vmatpush1.bf16.msra.mxu0 %v3400
        %4452 = vmatprep.subr.bf16.mxu0 %v3411
        %4453 = vmatpush1.bf16.msra.mxu0 %v3410
        %4454 = vmatprep.subr.bf16.mxu0 %v3421
        %4455 = vmatpush1.bf16.msra.mxu0 %v3420
        %4456 = vmatprep.subr.bf16.mxu0 %v3431
        %4457 = vmatpush1.bf16.msra.mxu0 %v3430
        %4458 = vmatprep.subr.bf16.mxu0 %v3441
        %4459 = vmatpush1.bf16.msra.mxu0 %v3440
        %4460 = vmatprep.subr.bf16.mxu0 %v3451
        %4461 = vmatpush1.bf16.msra.mxu0 %v3450
        %4462 = vmatprep.subr.bf16.mxu0 %v3461
        %4463 = vmatpush1.bf16.msra.mxu0 %v3460
        %4464 = vmatprep.subr.bf16.mxu0 %v3471
        %4465 = vmatpush1.bf16.msra.mxu0 %v3470
        %4466 = vmatprep.subr.bf16.mxu0 %v3481
        %4467 = vmatpush1.bf16.msra.mxu0 %v3480
        %4468 = vmatprep.subr.bf16.mxu0 %v3491
        %4469 = vmatpush1.bf16.msra.mxu0 %v3490
        %4470 = vmatprep.subr.bf16.mxu0 %v3501
        %4471 = vmatpush1.bf16.msra.mxu0 %v3500
        %4472 = vmatprep.subr.bf16.mxu0 %v3511
        %4473 = vmatpush1.bf16.msra.mxu0 %v3510
        %4474 = vmatprep.mubr.bf16.mxu0 %v461
        %4475 = vmatmul.mubr.bf16.gmra.mrb[0].mxu0 %v460
        %v4476 = vpop.f32.mrb[0].mxu0
        %v4477 = vadd.f32 %v4416, %v4476
        %v4478 = vpop.f32.mrb[0].mxu0
        %v4479 = vadd.f32 %v4418, %v4478
        %v4480 = vpop.f32.mrb[0].mxu0
        %v4481 = vadd.f32 %v4420, %v4480
        %v4482 = vpop.f32.mrb[0].mxu0
        %v4483 = vadd.f32 %v4422, %v4482
        %4484 = vmatprep.mubr.bf16.mxu0 %v469
        %4485 = vmatmul.mubr.bf16.gmra.mrb[0].mxu0 %v468
        %v4486 = vpop.f32.mrb[0].mxu0
        %v4487 = vadd.f32 %v4426, %v4486
        %v4488 = vpop.f32.mrb[0].mxu0
        %v4489 = vadd.f32 %v4428, %v4488
        %v4490 = vpop.f32.mrb[0].mxu0
        %v4491 = vadd.f32 %v4430, %v4490
        %v4492 = vpop.f32.mrb[0].mxu0
        %v4493 = vadd.f32 %v4432, %v4492
        %4494 = vmatprep.mubr.bf16.mxu0 %v477
        %4495 = vmatmul.mubr.bf16.gmra.mrb[0].mxu0 %v476
        %v4496 = vpop.f32.mrb[0].mxu0
        %v4497 = vadd.f32 %v4436, %v4496
        %v4498 = vpop.f32.mrb[0].mxu0
        %v4499 = vadd.f32 %v4438, %v4498
        %v4500 = vpop.f32.mrb[0].mxu0
        %v4501 = vpop.f32.mrb[0].mxu0
        %4502 = vdwg.mxu0
        %4503 = vmatprep.subr.bf16.mxu0 %v3521
        %4504 = vmatpush1.bf16.msra.mxu0 %v3520
        %4505 = vmatprep.subr.bf16.mxu0 %v3531
        %4506 = vmatpush1.bf16.msra.mxu0 %v3530
        %4507 = vmatprep.subr.bf16.mxu0 %v3541
        %4508 = vmatpush1.bf16.msra.mxu0 %v3540
        %4509 = vmatprep.subr.bf16.mxu0 %v3551
        %4510 = vmatpush1.bf16.msra.mxu0 %v3550
        %4511 = vmatprep.subr.bf16.mxu0 %v3561
        %4512 = vmatpush1.bf16.msra.mxu0 %v3560
        %4513 = vmatprep.subr.bf16.mxu0 %v3571
        %4514 = vmatpush1.bf16.msra.mxu0 %v3570
        %4515 = vmatprep.subr.bf16.mxu0 %v3581
        %4516 = vmatpush1.bf16.msra.mxu0 %v3580
        %4517 = vmatprep.subr.bf16.mxu0 %v3591
        %4518 = vmatpush1.bf16.msra.mxu0 %v3590
        %4519 = vmatprep.subr.bf16.mxu0 %v3601
        %4520 = vmatpush1.bf16.msra.mxu0 %v3600
        %4521 = vmatprep.subr.bf16.mxu0 %v3611
        %4522 = vmatpush1.bf16.msra.mxu0 %v3610
        %4523 = vmatprep.subr.bf16.mxu0 %v3621
        %4524 = vmatpush1.bf16.msra.mxu0 %v3620
        %4525 = vmatprep.subr.bf16.mxu0 %v3631
        %4526 = vmatpush1.bf16.msra.mxu0 %v3630
        %4527 = vmatprep.subr.bf16.mxu0 %v3641
        %4528 = vmatpush1.bf16.msra.mxu0 %v3640
        %4529 = vmatprep.subr.bf16.mxu0 %v3651
        %4530 = vmatpush1.bf16.msra.mxu0 %v3650
        %4531 = vmatprep.subr.bf16.mxu0 %v3661
        %4532 = vmatpush1.bf16.msra.mxu0 %v3660
        %4533 = vmatprep.subr.bf16.mxu0 %v3671
        %4534 = vmatpush1.bf16.msra.mxu0 %v3670
        %4535 = vmatprep.mubr.bf16.mxu0 %v463
        %4536 = vmatmul.mubr.bf16.gmra.mrb[0].mxu0 %v462
        %v4537 = vpop.f32.mrb[0].mxu0
        %v4538 = vadd.f32 %v4477, %v4537
        %v4539 = vpop.f32.mrb[0].mxu0
        %v4540 = vadd.f32 %v4479, %v4539
        %v4541 = vpop.f32.mrb[0].mxu0
        %v4542 = vadd.f32 %v4481, %v4541
        %v4543 = vpop.f32.mrb[0].mxu0
        %v4544 = vadd.f32 %v4483, %v4543
        %4545 = vmatprep.mubr.bf16.mxu0 %v471
        %4546 = vmatmul.mubr.bf16.gmra.mrb[0].mxu0 %v470
        %v4547 = vpop.f32.mrb[0].mxu0
        %v4548 = vadd.f32 %v4487, %v4547
        %v4549 = vpop.f32.mrb[0].mxu0
        %v4550 = vadd.f32 %v4489, %v4549
        %v4551 = vpop.f32.mrb[0].mxu0
        %v4552 = vadd.f32 %v4491, %v4551
        %v4553 = vpop.f32.mrb[0].mxu0
        %v4554 = vadd.f32 %v4493, %v4553
        %4555 = vmatprep.mubr.bf16.mxu0 %v479
        %4556 = vmatmul.mubr.bf16.gmra.mrb[0].mxu0 %v478
        %v4557 = vpop.f32.mrb[0].mxu0
        %v4558 = vadd.f32 %v4497, %v4557
        %v4559 = vpop.f32.mrb[0].mxu0
        %v4560 = vadd.f32 %v4499, %v4559
        %v4561 = vpop.f32.mrb[0].mxu0
        %v4562 = vpop.f32.mrb[0].mxu0
        %4563 = vdwg.mxu0
        %4564 = vmatprep.subr.bf16.mxu0 %v3043
        %4565 = vmatpush1.bf16.msra.mxu0 %v3042
        %4566 = vmatprep.subr.bf16.mxu0 %v3053
        %4567 = vmatpush1.bf16.msra.mxu0 %v3052
        %4568 = vmatprep.subr.bf16.mxu0 %v3063
        %4569 = vmatpush1.bf16.msra.mxu0 %v3062
        %4570 = vmatprep.subr.bf16.mxu0 %v3073
        %4571 = vmatpush1.bf16.msra.mxu0 %v3072
        %4572 = vmatprep.subr.bf16.mxu0 %v3083
        %4573 = vmatpush1.bf16.msra.mxu0 %v3082
        %4574 = vmatprep.subr.bf16.mxu0 %v3093
        %4575 = vmatpush1.bf16.msra.mxu0 %v3092
        %4576 = vmatprep.subr.bf16.mxu0 %v3103
        %4577 = vmatpush1.bf16.msra.mxu0 %v3102
        %4578 = vmatprep.subr.bf16.mxu0 %v3113
        %4579 = vmatpush1.bf16.msra.mxu0 %v3112
        %4580 = vmatprep.subr.bf16.mxu0 %v3123
        %4581 = vmatpush1.bf16.msra.mxu0 %v3122
        %4582 = vmatprep.subr.bf16.mxu0 %v3133
        %4583 = vmatpush1.bf16.msra.mxu0 %v3132
        %4584 = vmatprep.subr.bf16.mxu0 %v3143
        %4585 = vmatpush1.bf16.msra.mxu0 %v3142
        %4586 = vmatprep.subr.bf16.mxu0 %v3153
        %4587 = vmatpush1.bf16.msra.mxu0 %v3152
        %4588 = vmatprep.subr.bf16.mxu0 %v3163
        %4589 = vmatpush1.bf16.msra.mxu0 %v3162
        %4590 = vmatprep.subr.bf16.mxu0 %v3173
        %4591 = vmatpush1.bf16.msra.mxu0 %v3172
        %4592 = vmatprep.subr.bf16.mxu0 %v3183
        %4593 = vmatpush1.bf16.msra.mxu0 %v3182
        %4594 = vmatprep.subr.bf16.mxu0 %v3193
        %4595 = vmatpush1.bf16.msra.mxu0 %v3192
        %4596 = vmatprep.mubr.bf16.mxu0 %v457
        %4597 = vmatmul.mubr.bf16.gmra.mrb[0].mxu0 %v456
        %v4598 = vpop.f32.mrb[0].mxu0
        %v4599 = vadd.f32 0.0, %v4598
        %v4600 = vpop.f32.mrb[0].mxu0
        %v4601 = vadd.f32 0.0, %v4600
        %v4602 = vpop.f32.mrb[0].mxu0
        %v4603 = vadd.f32 0.0, %v4602
        %v4604 = vpop.f32.mrb[0].mxu0
        %v4605 = vadd.f32 0.0, %v4604
        %4606 = vmatprep.mubr.bf16.mxu0 %v465
        %4607 = vmatmul.mubr.bf16.gmra.mrb[0].mxu0 %v464
        %v4608 = vpop.f32.mrb[0].mxu0
        %v4609 = vadd.f32 0.0, %v4608
        %v4610 = vpop.f32.mrb[0].mxu0
        %v4611 = vadd.f32 0.0, %v4610
        %v4612 = vpop.f32.mrb[0].mxu0
        %v4613 = vadd.f32 0.0, %v4612
        %v4614 = vpop.f32.mrb[0].mxu0
        %v4615 = vadd.f32 0.0, %v4614
        %4616 = vmatprep.mubr.bf16.mxu0 %v473
        %4617 = vmatmul.mubr.bf16.gmra.mrb[0].mxu0 %v472
        %v4618 = vpop.f32.mrb[0].mxu0
        %v4619 = vadd.f32 0.0, %v4618
        %v4620 = vpop.f32.mrb[0].mxu0
        %v4621 = vadd.f32 0.0, %v4620
        %v4622 = vpop.f32.mrb[0].mxu0
        %v4623 = vpop.f32.mrb[0].mxu0
        %4624 = vdwg.mxu0
        %4625 = vmatprep.subr.bf16.mxu0 %v3203
        %4626 = vmatpush1.bf16.msra.mxu0 %v3202
        %4627 = vmatprep.subr.bf16.mxu0 %v3213
        %4628 = vmatpush1.bf16.msra.mxu0 %v3212
        %4629 = vmatprep.subr.bf16.mxu0 %v3223
        %4630 = vmatpush1.bf16.msra.mxu0 %v3222
        %4631 = vmatprep.subr.bf16.mxu0 %v3233
        %4632 = vmatpush1.bf16.msra.mxu0 %v3232
        %4633 = vmatprep.subr.bf16.mxu0 %v3243
        %4634 = vmatpush1.bf16.msra.mxu0 %v3242
        %4635 = vmatprep.subr.bf16.mxu0 %v3253
        %4636 = vmatpush1.bf16.msra.mxu0 %v3252
        %4637 = vmatprep.subr.bf16.mxu0 %v3263
        %4638 = vmatpush1.bf16.msra.mxu0 %v3262
        %4639 = vmatprep.subr.bf16.mxu0 %v3273
        %4640 = vmatpush1.bf16.msra.mxu0 %v3272
        %4641 = vmatprep.subr.bf16.mxu0 %v3283
        %4642 = vmatpush1.bf16.msra.mxu0 %v3282
        %4643 = vmatprep.subr.bf16.mxu0 %v3293
        %4644 = vmatpush1.bf16.msra.mxu0 %v3292
        %4645 = vmatprep.subr.bf16.mxu0 %v3303
        %4646 = vmatpush1.bf16.msra.mxu0 %v3302
        %4647 = vmatprep.subr.bf16.mxu0 %v3313
        %4648 = vmatpush1.bf16.msra.mxu0 %v3312
        %4649 = vmatprep.subr.bf16.mxu0 %v3323
        %4650 = vmatpush1.bf16.msra.mxu0 %v3322
        %4651 = vmatprep.subr.bf16.mxu0 %v3333
        %4652 = vmatpush1.bf16.msra.mxu0 %v3332
        %4653 = vmatprep.subr.bf16.mxu0 %v3343
        %4654 = vmatpush1.bf16.msra.mxu0 %v3342
        %4655 = vmatprep.subr.bf16.mxu0 %v3353
        %4656 = vmatpush1.bf16.msra.mxu0 %v3352
        %4657 = vmatprep.mubr.bf16.mxu0 %v459
        %4658 = vmatmul.mubr.bf16.gmra.mrb[0].mxu0 %v458
        %v4659 = vpop.f32.mrb[0].mxu0
        %v4660 = vadd.f32 %v4599, %v4659
        %v4661 = vpop.f32.mrb[0].mxu0
        %v4662 = vadd.f32 %v4601, %v4661
        %v4663 = vpop.f32.mrb[0].mxu0
        %v4664 = vadd.f32 %v4603, %v4663
        %v4665 = vpop.f32.mrb[0].mxu0
        %v4666 = vadd.f32 %v4605, %v4665
        %4667 = vmatprep.mubr.bf16.mxu0 %v467
        %4668 = vmatmul.mubr.bf16.gmra.mrb[0].mxu0 %v466
        %v4669 = vpop.f32.mrb[0].mxu0
        %v4670 = vadd.f32 %v4609, %v4669
        %v4671 = vpop.f32.mrb[0].mxu0
        %v4672 = vadd.f32 %v4611, %v4671
        %v4673 = vpop.f32.mrb[0].mxu0
        %v4674 = vadd.f32 %v4613, %v4673
        %v4675 = vpop.f32.mrb[0].mxu0
        %v4676 = vadd.f32 %v4615, %v4675
        %4677 = vmatprep.mubr.bf16.mxu0 %v475
        %4678 = vmatmul.mubr.bf16.gmra.mrb[0].mxu0 %v474
        %v4679 = vpop.f32.mrb[0].mxu0
        %v4680 = vadd.f32 %v4619, %v4679
        %v4681 = vpop.f32.mrb[0].mxu0
        %v4682 = vadd.f32 %v4621, %v4681
        %v4683 = vpop.f32.mrb[0].mxu0
        %v4684 = vpop.f32.mrb[0].mxu0
        %4685 = vdwg.mxu0
        %4686 = vmatprep.subr.bf16.mxu0 %v3363
        %4687 = vmatpush1.bf16.msra.mxu0 %v3362
        %4688 = vmatprep.subr.bf16.mxu0 %v3373
        %4689 = vmatpush1.bf16.msra.mxu0 %v3372
        %4690 = vmatprep.subr.bf16.mxu0 %v3383
        %4691 = vmatpush1.bf16.msra.mxu0 %v3382
        %4692 = vmatprep.subr.bf16.mxu0 %v3393
        %4693 = vmatpush1.bf16.msra.mxu0 %v3392
        %4694 = vmatprep.subr.bf16.mxu0 %v3403
        %4695 = vmatpush1.bf16.msra.mxu0 %v3402
        %4696 = vmatprep.subr.bf16.mxu0 %v3413
        %4697 = vmatpush1.bf16.msra.mxu0 %v3412
        %4698 = vmatprep.subr.bf16.mxu0 %v3423
        %4699 = vmatpush1.bf16.msra.mxu0 %v3422
        %4700 = vmatprep.subr.bf16.mxu0 %v3433
        %4701 = vmatpush1.bf16.msra.mxu0 %v3432
        %4702 = vmatprep.subr.bf16.mxu0 %v3443
        %4703 = vmatpush1.bf16.msra.mxu0 %v3442
        %4704 = vmatprep.subr.bf16.mxu0 %v3453
        %4705 = vmatpush1.bf16.msra.mxu0 %v3452
        %4706 = vmatprep.subr.bf16.mxu0 %v3463
        %4707 = vmatpush1.bf16.msra.mxu0 %v3462
        %4708 = vmatprep.subr.bf16.mxu0 %v3473
        %4709 = vmatpush1.bf16.msra.mxu0 %v3472
        %4710 = vmatprep.subr.bf16.mxu0 %v3483
        %4711 = vmatpush1.bf16.msra.mxu0 %v3482
        %4712 = vmatprep.subr.bf16.mxu0 %v3493
        %4713 = vmatpush1.bf16.msra.mxu0 %v3492
        %4714 = vmatprep.subr.bf16.mxu0 %v3503
        %4715 = vmatpush1.bf16.msra.mxu0 %v3502
        %4716 = vmatprep.subr.bf16.mxu0 %v3513
        %4717 = vmatpush1.bf16.msra.mxu0 %v3512
        %4718 = vmatprep.mubr.bf16.mxu0 %v461
        %4719 = vmatmul.mubr.bf16.gmra.mrb[0].mxu0 %v460
        %v4720 = vpop.f32.mrb[0].mxu0
        %v4721 = vadd.f32 %v4660, %v4720
        %v4722 = vpop.f32.mrb[0].mxu0
        %v4723 = vadd.f32 %v4662, %v4722
        %v4724 = vpop.f32.mrb[0].mxu0
        %v4725 = vadd.f32 %v4664, %v4724
        %v4726 = vpop.f32.mrb[0].mxu0
        %v4727 = vadd.f32 %v4666, %v4726
        %4728 = vmatprep.mubr.bf16.mxu0 %v469
        %4729 = vmatmul.mubr.bf16.gmra.mrb[0].mxu0 %v468
        %v4730 = vpop.f32.mrb[0].mxu0
        %v4731 = vadd.f32 %v4670, %v4730
        %v4732 = vpop.f32.mrb[0].mxu0
        %v4733 = vadd.f32 %v4672, %v4732
        %v4734 = vpop.f32.mrb[0].mxu0
        %v4735 = vadd.f32 %v4674, %v4734
        %v4736 = vpop.f32.mrb[0].mxu0
        %v4737 = vadd.f32 %v4676, %v4736
        %4738 = vmatprep.mubr.bf16.mxu0 %v477
        %4739 = vmatmul.mubr.bf16.gmra.mrb[0].mxu0 %v476
        %v4740 = vpop.f32.mrb[0].mxu0
        %v4741 = vadd.f32 %v4680, %v4740
        %v4742 = vpop.f32.mrb[0].mxu0
        %v4743 = vadd.f32 %v4682, %v4742
        %v4744 = vpop.f32.mrb[0].mxu0
        %v4745 = vpop.f32.mrb[0].mxu0
        %4746 = vdwg.mxu0
        %4747 = vmatprep.subr.bf16.mxu0 %v3523
        %4748 = vmatpush1.bf16.msra.mxu0 %v3522
        %4749 = vmatprep.subr.bf16.mxu0 %v3533
        %4750 = vmatpush1.bf16.msra.mxu0 %v3532
        %4751 = vmatprep.subr.bf16.mxu0 %v3543
        %4752 = vmatpush1.bf16.msra.mxu0 %v3542
        %4753 = vmatprep.subr.bf16.mxu0 %v3553
        %4754 = vmatpush1.bf16.msra.mxu0 %v3552
        %4755 = vmatprep.subr.bf16.mxu0 %v3563
        %4756 = vmatpush1.bf16.msra.mxu0 %v3562
        %4757 = vmatprep.subr.bf16.mxu0 %v3573
        %4758 = vmatpush1.bf16.msra.mxu0 %v3572
        %4759 = vmatprep.subr.bf16.mxu0 %v3583
        %4760 = vmatpush1.bf16.msra.mxu0 %v3582
        %4761 = vmatprep.subr.bf16.mxu0 %v3593
        %4762 = vmatpush1.bf16.msra.mxu0 %v3592
        %4763 = vmatprep.subr.bf16.mxu0 %v3603
        %4764 = vmatpush1.bf16.msra.mxu0 %v3602
        %4765 = vmatprep.subr.bf16.mxu0 %v3613
        %4766 = vmatpush1.bf16.msra.mxu0 %v3612
        %4767 = vmatprep.subr.bf16.mxu0 %v3623
        %4768 = vmatpush1.bf16.msra.mxu0 %v3622
        %4769 = vmatprep.subr.bf16.mxu0 %v3633
        %4770 = vmatpush1.bf16.msra.mxu0 %v3632
        %4771 = vmatprep.subr.bf16.mxu0 %v3643
        %4772 = vmatpush1.bf16.msra.mxu0 %v3642
        %4773 = vmatprep.subr.bf16.mxu0 %v3653
        %4774 = vmatpush1.bf16.msra.mxu0 %v3652
        %4775 = vmatprep.subr.bf16.mxu0 %v3663
        %4776 = vmatpush1.bf16.msra.mxu0 %v3662
        %4777 = vmatprep.subr.bf16.mxu0 %v3673
        %4778 = vmatpush1.bf16.msra.mxu0 %v3672
        %4779 = vmatprep.mubr.bf16.mxu0 %v463
        %4780 = vmatmul.mubr.bf16.gmra.mrb[0].mxu0 %v462
        %v4781 = vpop.f32.mrb[0].mxu0
        %v4782 = vadd.f32 %v4721, %v4781
        %v4783 = vpop.f32.mrb[0].mxu0
        %v4784 = vadd.f32 %v4723, %v4783
        %v4785 = vpop.f32.mrb[0].mxu0
        %v4786 = vadd.f32 %v4725, %v4785
        %v4787 = vpop.f32.mrb[0].mxu0
        %v4788 = vadd.f32 %v4727, %v4787
        %4789 = vmatprep.mubr.bf16.mxu0 %v471
        %4790 = vmatmul.mubr.bf16.gmra.mrb[0].mxu0 %v470
        %v4791 = vpop.f32.mrb[0].mxu0
        %v4792 = vadd.f32 %v4731, %v4791
        %v4793 = vpop.f32.mrb[0].mxu0
        %v4794 = vadd.f32 %v4733, %v4793
        %v4795 = vpop.f32.mrb[0].mxu0
        %v4796 = vadd.f32 %v4735, %v4795
        %v4797 = vpop.f32.mrb[0].mxu0
        %v4798 = vadd.f32 %v4737, %v4797
        %4799 = vmatprep.mubr.bf16.mxu0 %v479
        %4800 = vmatmul.mubr.bf16.gmra.mrb[0].mxu0 %v478
        %v4801 = vpop.f32.mrb[0].mxu0
        %v4802 = vadd.f32 %v4741, %v4801
        %v4803 = vpop.f32.mrb[0].mxu0
        %v4804 = vadd.f32 %v4743, %v4803
        %v4805 = vpop.f32.mrb[0].mxu0
        %v4806 = vpop.f32.mrb[0].mxu0
        %4807 = vdwg.mxu0
        %4808 = vmatprep.subr.bf16.mxu0 %v3045
        %4809 = vmatpush1.bf16.msra.mxu0 %v3044
        %4810 = vmatprep.subr.bf16.mxu0 %v3055
        %4811 = vmatpush1.bf16.msra.mxu0 %v3054
        %4812 = vmatprep.subr.bf16.mxu0 %v3065
        %4813 = vmatpush1.bf16.msra.mxu0 %v3064
        %4814 = vmatprep.subr.bf16.mxu0 %v3075
        %4815 = vmatpush1.bf16.msra.mxu0 %v3074
        %4816 = vmatprep.subr.bf16.mxu0 %v3085
        %4817 = vmatpush1.bf16.msra.mxu0 %v3084
        %4818 = vmatprep.subr.bf16.mxu0 %v3095
        %4819 = vmatpush1.bf16.msra.mxu0 %v3094
        %4820 = vmatprep.subr.bf16.mxu0 %v3105
        %4821 = vmatpush1.bf16.msra.mxu0 %v3104
        %4822 = vmatprep.subr.bf16.mxu0 %v3115
        %4823 = vmatpush1.bf16.msra.mxu0 %v3114
        %4824 = vmatprep.subr.bf16.mxu0 %v3125
        %4825 = vmatpush1.bf16.msra.mxu0 %v3124
        %4826 = vmatprep.subr.bf16.mxu0 %v3135
        %4827 = vmatpush1.bf16.msra.mxu0 %v3134
        %4828 = vmatprep.subr.bf16.mxu0 %v3145
        %4829 = vmatpush1.bf16.msra.mxu0 %v3144
        %4830 = vmatprep.subr.bf16.mxu0 %v3155
        %4831 = vmatpush1.bf16.msra.mxu0 %v3154
        %4832 = vmatprep.subr.bf16.mxu0 %v3165
        %4833 = vmatpush1.bf16.msra.mxu0 %v3164
        %4834 = vmatprep.subr.bf16.mxu0 %v3175
        %4835 = vmatpush1.bf16.msra.mxu0 %v3174
        %4836 = vmatprep.subr.bf16.mxu0 %v3185
        %4837 = vmatpush1.bf16.msra.mxu0 %v3184
        %4838 = vmatprep.subr.bf16.mxu0 %v3195
        %4839 = vmatpush1.bf16.msra.mxu0 %v3194
        %4840 = vmatprep.mubr.bf16.mxu0 %v457
        %4841 = vmatmul.mubr.bf16.gmra.mrb[0].mxu0 %v456
        %v4842 = vpop.f32.mrb[0].mxu0
        %v4843 = vadd.f32 0.0, %v4842
        %v4844 = vpop.f32.mrb[0].mxu0
        %v4845 = vadd.f32 0.0, %v4844
        %v4846 = vpop.f32.mrb[0].mxu0
        %v4847 = vadd.f32 0.0, %v4846
        %v4848 = vpop.f32.mrb[0].mxu0
        %v4849 = vadd.f32 0.0, %v4848
        %4850 = vmatprep.mubr.bf16.mxu0 %v465
        %4851 = vmatmul.mubr.bf16.gmra.mrb[0].mxu0 %v464
        %v4852 = vpop.f32.mrb[0].mxu0
        %v4853 = vadd.f32 0.0, %v4852
        %v4854 = vpop.f32.mrb[0].mxu0
        %v4855 = vadd.f32 0.0, %v4854
        %v4856 = vpop.f32.mrb[0].mxu0
        %v4857 = vadd.f32 0.0, %v4856
        %v4858 = vpop.f32.mrb[0].mxu0
        %v4859 = vadd.f32 0.0, %v4858
        %4860 = vmatprep.mubr.bf16.mxu0 %v473
        %4861 = vmatmul.mubr.bf16.gmra.mrb[0].mxu0 %v472
        %v4862 = vpop.f32.mrb[0].mxu0
        %v4863 = vadd.f32 0.0, %v4862
        %v4864 = vpop.f32.mrb[0].mxu0
        %v4865 = vadd.f32 0.0, %v4864
        %v4866 = vpop.f32.mrb[0].mxu0
        %v4867 = vpop.f32.mrb[0].mxu0
        %4868 = vdwg.mxu0
        %4869 = vmatprep.subr.bf16.mxu0 %v3205
        %4870 = vmatpush1.bf16.msra.mxu0 %v3204
        %4871 = vmatprep.subr.bf16.mxu0 %v3215
        %4872 = vmatpush1.bf16.msra.mxu0 %v3214
        %4873 = vmatprep.subr.bf16.mxu0 %v3225
        %4874 = vmatpush1.bf16.msra.mxu0 %v3224
        %4875 = vmatprep.subr.bf16.mxu0 %v3235
        %4876 = vmatpush1.bf16.msra.mxu0 %v3234
        %4877 = vmatprep.subr.bf16.mxu0 %v3245
        %4878 = vmatpush1.bf16.msra.mxu0 %v3244
        %4879 = vmatprep.subr.bf16.mxu0 %v3255
        %4880 = vmatpush1.bf16.msra.mxu0 %v3254
        %4881 = vmatprep.subr.bf16.mxu0 %v3265
        %4882 = vmatpush1.bf16.msra.mxu0 %v3264
        %4883 = vmatprep.subr.bf16.mxu0 %v3275
        %4884 = vmatpush1.bf16.msra.mxu0 %v3274
        %4885 = vmatprep.subr.bf16.mxu0 %v3285
        %4886 = vmatpush1.bf16.msra.mxu0 %v3284
        %4887 = vmatprep.subr.bf16.mxu0 %v3295
        %4888 = vmatpush1.bf16.msra.mxu0 %v3294
        %4889 = vmatprep.subr.bf16.mxu0 %v3305
        %4890 = vmatpush1.bf16.msra.mxu0 %v3304
        %4891 = vmatprep.subr.bf16.mxu0 %v3315
        %4892 = vmatpush1.bf16.msra.mxu0 %v3314
        %4893 = vmatprep.subr.bf16.mxu0 %v3325
        %4894 = vmatpush1.bf16.msra.mxu0 %v3324
        %4895 = vmatprep.subr.bf16.mxu0 %v3335
        %4896 = vmatpush1.bf16.msra.mxu0 %v3334
        %4897 = vmatprep.subr.bf16.mxu0 %v3345
        %4898 = vmatpush1.bf16.msra.mxu0 %v3344
        %4899 = vmatprep.subr.bf16.mxu0 %v3355
        %4900 = vmatpush1.bf16.msra.mxu0 %v3354
        %4901 = vmatprep.mubr.bf16.mxu0 %v459
        %4902 = vmatmul.mubr.bf16.gmra.mrb[0].mxu0 %v458
        %v4903 = vpop.f32.mrb[0].mxu0
        %v4904 = vadd.f32 %v4843, %v4903
        %v4905 = vpop.f32.mrb[0].mxu0
        %v4906 = vadd.f32 %v4845, %v4905
        %v4907 = vpop.f32.mrb[0].mxu0
        %v4908 = vadd.f32 %v4847, %v4907
        %v4909 = vpop.f32.mrb[0].mxu0
        %v4910 = vadd.f32 %v4849, %v4909
        %4911 = vmatprep.mubr.bf16.mxu0 %v467
        %4912 = vmatmul.mubr.bf16.gmra.mrb[0].mxu0 %v466
        %v4913 = vpop.f32.mrb[0].mxu0
        %v4914 = vadd.f32 %v4853, %v4913
        %v4915 = vpop.f32.mrb[0].mxu0
        %v4916 = vadd.f32 %v4855, %v4915
        %v4917 = vpop.f32.mrb[0].mxu0
        %v4918 = vadd.f32 %v4857, %v4917
        %v4919 = vpop.f32.mrb[0].mxu0
        %v4920 = vadd.f32 %v4859, %v4919
        %4921 = vmatprep.mubr.bf16.mxu0 %v475
        %4922 = vmatmul.mubr.bf16.gmra.mrb[0].mxu0 %v474
        %v4923 = vpop.f32.mrb[0].mxu0
        %v4924 = vadd.f32 %v4863, %v4923
        %v4925 = vpop.f32.mrb[0].mxu0
        %v4926 = vadd.f32 %v4865, %v4925
        %v4927 = vpop.f32.mrb[0].mxu0
        %v4928 = vpop.f32.mrb[0].mxu0
        %4929 = vdwg.mxu0
        %4930 = vmatprep.subr.bf16.mxu0 %v3365
        %4931 = vmatpush1.bf16.msra.mxu0 %v3364
        %4932 = vmatprep.subr.bf16.mxu0 %v3375
        %4933 = vmatpush1.bf16.msra.mxu0 %v3374
        %4934 = vmatprep.subr.bf16.mxu0 %v3385
        %4935 = vmatpush1.bf16.msra.mxu0 %v3384
        %4936 = vmatprep.subr.bf16.mxu0 %v3395
        %4937 = vmatpush1.bf16.msra.mxu0 %v3394
        %4938 = vmatprep.subr.bf16.mxu0 %v3405
        %4939 = vmatpush1.bf16.msra.mxu0 %v3404
        %4940 = vmatprep.subr.bf16.mxu0 %v3415
        %4941 = vmatpush1.bf16.msra.mxu0 %v3414
        %4942 = vmatprep.subr.bf16.mxu0 %v3425
        %4943 = vmatpush1.bf16.msra.mxu0 %v3424
        %4944 = vmatprep.subr.bf16.mxu0 %v3435
        %4945 = vmatpush1.bf16.msra.mxu0 %v3434
        %4946 = vmatprep.subr.bf16.mxu0 %v3445
        %4947 = vmatpush1.bf16.msra.mxu0 %v3444
        %4948 = vmatprep.subr.bf16.mxu0 %v3455
        %4949 = vmatpush1.bf16.msra.mxu0 %v3454
        %4950 = vmatprep.subr.bf16.mxu0 %v3465
        %4951 = vmatpush1.bf16.msra.mxu0 %v3464
        %4952 = vmatprep.subr.bf16.mxu0 %v3475
        %4953 = vmatpush1.bf16.msra.mxu0 %v3474
        %4954 = vmatprep.subr.bf16.mxu0 %v3485
        %4955 = vmatpush1.bf16.msra.mxu0 %v3484
        %4956 = vmatprep.subr.bf16.mxu0 %v3495
        %4957 = vmatpush1.bf16.msra.mxu0 %v3494
        %4958 = vmatprep.subr.bf16.mxu0 %v3505
        %4959 = vmatpush1.bf16.msra.mxu0 %v3504
        %4960 = vmatprep.subr.bf16.mxu0 %v3515
        %4961 = vmatpush1.bf16.msra.mxu0 %v3514
        %4962 = vmatprep.mubr.bf16.mxu0 %v461
        %4963 = vmatmul.mubr.bf16.gmra.mrb[0].mxu0 %v460
        %v4964 = vpop.f32.mrb[0].mxu0
        %v4965 = vadd.f32 %v4904, %v4964
        %v4966 = vpop.f32.mrb[0].mxu0
        %v4967 = vadd.f32 %v4906, %v4966
        %v4968 = vpop.f32.mrb[0].mxu0
        %v4969 = vadd.f32 %v4908, %v4968
        %v4970 = vpop.f32.mrb[0].mxu0
        %v4971 = vadd.f32 %v4910, %v4970
        %4972 = vmatprep.mubr.bf16.mxu0 %v469
        %4973 = vmatmul.mubr.bf16.gmra.mrb[0].mxu0 %v468
        %v4974 = vpop.f32.mrb[0].mxu0
        %v4975 = vadd.f32 %v4914, %v4974
        %v4976 = vpop.f32.mrb[0].mxu0
        %v4977 = vadd.f32 %v4916, %v4976
        %v4978 = vpop.f32.mrb[0].mxu0
        %v4979 = vadd.f32 %v4918, %v4978
        %v4980 = vpop.f32.mrb[0].mxu0
        %v4981 = vadd.f32 %v4920, %v4980
        %4982 = vmatprep.mubr.bf16.mxu0 %v477
        %4983 = vmatmul.mubr.bf16.gmra.mrb[0].mxu0 %v476
        %v4984 = vpop.f32.mrb[0].mxu0
        %v4985 = vadd.f32 %v4924, %v4984
        %v4986 = vpop.f32.mrb[0].mxu0
        %v4987 = vadd.f32 %v4926, %v4986
        %v4988 = vpop.f32.mrb[0].mxu0
        %v4989 = vpop.f32.mrb[0].mxu0
        %4990 = vdwg.mxu0
        %4991 = vmatprep.subr.bf16.mxu0 %v3525
        %4992 = vmatpush1.bf16.msra.mxu0 %v3524
        %4993 = vmatprep.subr.bf16.mxu0 %v3535
        %4994 = vmatpush1.bf16.msra.mxu0 %v3534
        %4995 = vmatprep.subr.bf16.mxu0 %v3545
        %4996 = vmatpush1.bf16.msra.mxu0 %v3544
        %4997 = vmatprep.subr.bf16.mxu0 %v3555
        %4998 = vmatpush1.bf16.msra.mxu0 %v3554
        %4999 = vmatprep.subr.bf16.mxu0 %v3565
        %5000 = vmatpush1.bf16.msra.mxu0 %v3564
        %5001 = vmatprep.subr.bf16.mxu0 %v3575
        %5002 = vmatpush1.bf16.msra.mxu0 %v3574
        %5003 = vmatprep.subr.bf16.mxu0 %v3585
        %5004 = vmatpush1.bf16.msra.mxu0 %v3584
        %5005 = vmatprep.subr.bf16.mxu0 %v3595
        %5006 = vmatpush1.bf16.msra.mxu0 %v3594
        %5007 = vmatprep.subr.bf16.mxu0 %v3605
        %5008 = vmatpush1.bf16.msra.mxu0 %v3604
        %5009 = vmatprep.subr.bf16.mxu0 %v3615
        %5010 = vmatpush1.bf16.msra.mxu0 %v3614
        %5011 = vmatprep.subr.bf16.mxu0 %v3625
        %5012 = vmatpush1.bf16.msra.mxu0 %v3624
        %5013 = vmatprep.subr.bf16.mxu0 %v3635
        %5014 = vmatpush1.bf16.msra.mxu0 %v3634
        %5015 = vmatprep.subr.bf16.mxu0 %v3645
        %5016 = vmatpush1.bf16.msra.mxu0 %v3644
        %5017 = vmatprep.subr.bf16.mxu0 %v3655
        %5018 = vmatpush1.bf16.msra.mxu0 %v3654
        %5019 = vmatprep.subr.bf16.mxu0 %v3665
        %5020 = vmatpush1.bf16.msra.mxu0 %v3664
        %5021 = vmatprep.subr.bf16.mxu0 %v3675
        %5022 = vmatpush1.bf16.msra.mxu0 %v3674
        %5023 = vmatprep.mubr.bf16.mxu0 %v463
        %5024 = vmatmul.mubr.bf16.gmra.mrb[0].mxu0 %v462
        %v5025 = vpop.f32.mrb[0].mxu0
        %v5026 = vadd.f32 %v4965, %v5025
        %v5027 = vpop.f32.mrb[0].mxu0
        %v5028 = vadd.f32 %v4967, %v5027
        %v5029 = vpop.f32.mrb[0].mxu0
        %v5030 = vadd.f32 %v4969, %v5029
        %v5031 = vpop.f32.mrb[0].mxu0
        %v5032 = vadd.f32 %v4971, %v5031
        %5033 = vmatprep.mubr.bf16.mxu0 %v471
        %5034 = vmatmul.mubr.bf16.gmra.mrb[0].mxu0 %v470
        %v5035 = vpop.f32.mrb[0].mxu0
        %v5036 = vadd.f32 %v4975, %v5035
        %v5037 = vpop.f32.mrb[0].mxu0
        %v5038 = vadd.f32 %v4977, %v5037
        %v5039 = vpop.f32.mrb[0].mxu0
        %v5040 = vadd.f32 %v4979, %v5039
        %v5041 = vpop.f32.mrb[0].mxu0
        %v5042 = vadd.f32 %v4981, %v5041
        %5043 = vmatprep.mubr.bf16.mxu0 %v479
        %5044 = vmatmul.mubr.bf16.gmra.mrb[0].mxu0 %v478
        %v5045 = vpop.f32.mrb[0].mxu0
        %v5046 = vadd.f32 %v4985, %v5045
        %v5047 = vpop.f32.mrb[0].mxu0
        %v5048 = vadd.f32 %v4987, %v5047
        %v5049 = vpop.f32.mrb[0].mxu0
        %v5050 = vpop.f32.mrb[0].mxu0
        %5051 = vdwg.mxu0
        %5052 = vmatprep.subr.bf16.mxu0 %v3047
        %5053 = vmatpush1.bf16.msra.mxu0 %v3046
        %5054 = vmatprep.subr.bf16.mxu0 %v3057
        %5055 = vmatpush1.bf16.msra.mxu0 %v3056
        %5056 = vmatprep.subr.bf16.mxu0 %v3067
        %5057 = vmatpush1.bf16.msra.mxu0 %v3066
        %5058 = vmatprep.subr.bf16.mxu0 %v3077
        %5059 = vmatpush1.bf16.msra.mxu0 %v3076
        %5060 = vmatprep.subr.bf16.mxu0 %v3087
        %5061 = vmatpush1.bf16.msra.mxu0 %v3086
        %5062 = vmatprep.subr.bf16.mxu0 %v3097
        %5063 = vmatpush1.bf16.msra.mxu0 %v3096
        %5064 = vmatprep.subr.bf16.mxu0 %v3107
        %5065 = vmatpush1.bf16.msra.mxu0 %v3106
        %5066 = vmatprep.subr.bf16.mxu0 %v3117
        %5067 = vmatpush1.bf16.msra.mxu0 %v3116
        %5068 = vmatprep.subr.bf16.mxu0 %v3127
        %5069 = vmatpush1.bf16.msra.mxu0 %v3126
        %5070 = vmatprep.subr.bf16.mxu0 %v3137
        %5071 = vmatpush1.bf16.msra.mxu0 %v3136
        %5072 = vmatprep.subr.bf16.mxu0 %v3147
        %5073 = vmatpush1.bf16.msra.mxu0 %v3146
        %5074 = vmatprep.subr.bf16.mxu0 %v3157
        %5075 = vmatpush1.bf16.msra.mxu0 %v3156
        %5076 = vmatprep.subr.bf16.mxu0 %v3167
        %5077 = vmatpush1.bf16.msra.mxu0 %v3166
        %5078 = vmatprep.subr.bf16.mxu0 %v3177
        %5079 = vmatpush1.bf16.msra.mxu0 %v3176
        %5080 = vmatprep.subr.bf16.mxu0 %v3187
        %5081 = vmatpush1.bf16.msra.mxu0 %v3186
        %5082 = vmatprep.subr.bf16.mxu0 %v3197
        %5083 = vmatpush1.bf16.msra.mxu0 %v3196
        %5084 = vmatprep.mubr.bf16.mxu0 %v457
        %5085 = vmatmul.mubr.bf16.gmra.mrb[0].mxu0 %v456
        %v5086 = vpop.f32.mrb[0].mxu0
        %v5087 = vadd.f32 0.0, %v5086
        %v5088 = vpop.f32.mrb[0].mxu0
        %v5089 = vadd.f32 0.0, %v5088
        %v5090 = vpop.f32.mrb[0].mxu0
        %v5091 = vadd.f32 0.0, %v5090
        %v5092 = vpop.f32.mrb[0].mxu0
        %v5093 = vadd.f32 0.0, %v5092
        %5094 = vmatprep.mubr.bf16.mxu0 %v465
        %5095 = vmatmul.mubr.bf16.gmra.mrb[0].mxu0 %v464
        %v5096 = vpop.f32.mrb[0].mxu0
        %v5097 = vadd.f32 0.0, %v5096
        %v5098 = vpop.f32.mrb[0].mxu0
        %v5099 = vadd.f32 0.0, %v5098
        %v5100 = vpop.f32.mrb[0].mxu0
        %v5101 = vadd.f32 0.0, %v5100
        %v5102 = vpop.f32.mrb[0].mxu0
        %v5103 = vadd.f32 0.0, %v5102
        %5104 = vmatprep.mubr.bf16.mxu0 %v473
        %5105 = vmatmul.mubr.bf16.gmra.mrb[0].mxu0 %v472
        %v5106 = vpop.f32.mrb[0].mxu0
        %v5107 = vadd.f32 0.0, %v5106
        %v5108 = vpop.f32.mrb[0].mxu0
        %v5109 = vadd.f32 0.0, %v5108
        %v5110 = vpop.f32.mrb[0].mxu0
        %v5111 = vpop.f32.mrb[0].mxu0
        %5112 = vdwg.mxu0
        %5113 = vmatprep.subr.bf16.mxu0 %v3207
        %5114 = vmatpush1.bf16.msra.mxu0 %v3206
        %5115 = vmatprep.subr.bf16.mxu0 %v3217
        %5116 = vmatpush1.bf16.msra.mxu0 %v3216
        %5117 = vmatprep.subr.bf16.mxu0 %v3227
        %5118 = vmatpush1.bf16.msra.mxu0 %v3226
        %5119 = vmatprep.subr.bf16.mxu0 %v3237
        %5120 = vmatpush1.bf16.msra.mxu0 %v3236
        %5121 = vmatprep.subr.bf16.mxu0 %v3247
        %5122 = vmatpush1.bf16.msra.mxu0 %v3246
        %5123 = vmatprep.subr.bf16.mxu0 %v3257
        %5124 = vmatpush1.bf16.msra.mxu0 %v3256
        %5125 = vmatprep.subr.bf16.mxu0 %v3267
        %5126 = vmatpush1.bf16.msra.mxu0 %v3266
        %5127 = vmatprep.subr.bf16.mxu0 %v3277
        %5128 = vmatpush1.bf16.msra.mxu0 %v3276
        %5129 = vmatprep.subr.bf16.mxu0 %v3287
        %5130 = vmatpush1.bf16.msra.mxu0 %v3286
        %5131 = vmatprep.subr.bf16.mxu0 %v3297
        %5132 = vmatpush1.bf16.msra.mxu0 %v3296
        %5133 = vmatprep.subr.bf16.mxu0 %v3307
        %5134 = vmatpush1.bf16.msra.mxu0 %v3306
        %5135 = vmatprep.subr.bf16.mxu0 %v3317
        %5136 = vmatpush1.bf16.msra.mxu0 %v3316
        %5137 = vmatprep.subr.bf16.mxu0 %v3327
        %5138 = vmatpush1.bf16.msra.mxu0 %v3326
        %5139 = vmatprep.subr.bf16.mxu0 %v3337
        %5140 = vmatpush1.bf16.msra.mxu0 %v3336
        %5141 = vmatprep.subr.bf16.mxu0 %v3347
        %5142 = vmatpush1.bf16.msra.mxu0 %v3346
        %5143 = vmatprep.subr.bf16.mxu0 %v3357
        %5144 = vmatpush1.bf16.msra.mxu0 %v3356
        %5145 = vmatprep.mubr.bf16.mxu0 %v459
        %5146 = vmatmul.mubr.bf16.gmra.mrb[0].mxu0 %v458
        %v5147 = vpop.f32.mrb[0].mxu0
        %v5148 = vadd.f32 %v5087, %v5147
        %v5149 = vpop.f32.mrb[0].mxu0
        %v5150 = vadd.f32 %v5089, %v5149
        %v5151 = vpop.f32.mrb[0].mxu0
        %v5152 = vadd.f32 %v5091, %v5151
        %v5153 = vpop.f32.mrb[0].mxu0
        %v5154 = vadd.f32 %v5093, %v5153
        %5155 = vmatprep.mubr.bf16.mxu0 %v467
        %5156 = vmatmul.mubr.bf16.gmra.mrb[0].mxu0 %v466
        %v5157 = vpop.f32.mrb[0].mxu0
        %v5158 = vadd.f32 %v5097, %v5157
        %v5159 = vpop.f32.mrb[0].mxu0
        %v5160 = vadd.f32 %v5099, %v5159
        %v5161 = vpop.f32.mrb[0].mxu0
        %v5162 = vadd.f32 %v5101, %v5161
        %v5163 = vpop.f32.mrb[0].mxu0
        %v5164 = vadd.f32 %v5103, %v5163
        %5165 = vmatprep.mubr.bf16.mxu0 %v475
        %5166 = vmatmul.mubr.bf16.gmra.mrb[0].mxu0 %v474
        %v5167 = vpop.f32.mrb[0].mxu0
        %v5168 = vadd.f32 %v5107, %v5167
        %v5169 = vpop.f32.mrb[0].mxu0
        %v5170 = vadd.f32 %v5109, %v5169
        %v5171 = vpop.f32.mrb[0].mxu0
        %v5172 = vpop.f32.mrb[0].mxu0
        %5173 = vdwg.mxu0
        %5174 = vmatprep.subr.bf16.mxu0 %v3367
        %5175 = vmatpush1.bf16.msra.mxu0 %v3366
        %5176 = vmatprep.subr.bf16.mxu0 %v3377
        %5177 = vmatpush1.bf16.msra.mxu0 %v3376
        %5178 = vmatprep.subr.bf16.mxu0 %v3387
        %5179 = vmatpush1.bf16.msra.mxu0 %v3386
        %5180 = vmatprep.subr.bf16.mxu0 %v3397
        %5181 = vmatpush1.bf16.msra.mxu0 %v3396
        %5182 = vmatprep.subr.bf16.mxu0 %v3407
        %5183 = vmatpush1.bf16.msra.mxu0 %v3406
        %5184 = vmatprep.subr.bf16.mxu0 %v3417
        %5185 = vmatpush1.bf16.msra.mxu0 %v3416
        %5186 = vmatprep.subr.bf16.mxu0 %v3427
        %5187 = vmatpush1.bf16.msra.mxu0 %v3426
        %5188 = vmatprep.subr.bf16.mxu0 %v3437
        %5189 = vmatpush1.bf16.msra.mxu0 %v3436
        %5190 = vmatprep.subr.bf16.mxu0 %v3447
        %5191 = vmatpush1.bf16.msra.mxu0 %v3446
        %5192 = vmatprep.subr.bf16.mxu0 %v3457
        %5193 = vmatpush1.bf16.msra.mxu0 %v3456
        %5194 = vmatprep.subr.bf16.mxu0 %v3467
        %5195 = vmatpush1.bf16.msra.mxu0 %v3466
        %5196 = vmatprep.subr.bf16.mxu0 %v3477
        %5197 = vmatpush1.bf16.msra.mxu0 %v3476
        %5198 = vmatprep.subr.bf16.mxu0 %v3487
        %5199 = vmatpush1.bf16.msra.mxu0 %v3486
        %5200 = vmatprep.subr.bf16.mxu0 %v3497
        %5201 = vmatpush1.bf16.msra.mxu0 %v3496
        %5202 = vmatprep.subr.bf16.mxu0 %v3507
        %5203 = vmatpush1.bf16.msra.mxu0 %v3506
        %5204 = vmatprep.subr.bf16.mxu0 %v3517
        %5205 = vmatpush1.bf16.msra.mxu0 %v3516
        %5206 = vmatprep.mubr.bf16.mxu0 %v461
        %5207 = vmatmul.mubr.bf16.gmra.mrb[0].mxu0 %v460
        %v5208 = vpop.f32.mrb[0].mxu0
        %v5209 = vadd.f32 %v5148, %v5208
        %v5210 = vpop.f32.mrb[0].mxu0
        %v5211 = vadd.f32 %v5150, %v5210
        %v5212 = vpop.f32.mrb[0].mxu0
        %v5213 = vadd.f32 %v5152, %v5212
        %v5214 = vpop.f32.mrb[0].mxu0
        %v5215 = vadd.f32 %v5154, %v5214
        %5216 = vmatprep.mubr.bf16.mxu0 %v469
        %5217 = vmatmul.mubr.bf16.gmra.mrb[0].mxu0 %v468
        %v5218 = vpop.f32.mrb[0].mxu0
        %v5219 = vadd.f32 %v5158, %v5218
        %v5220 = vpop.f32.mrb[0].mxu0
        %v5221 = vadd.f32 %v5160, %v5220
        %v5222 = vpop.f32.mrb[0].mxu0
        %v5223 = vadd.f32 %v5162, %v5222
        %v5224 = vpop.f32.mrb[0].mxu0
        %v5225 = vadd.f32 %v5164, %v5224
        %5226 = vmatprep.mubr.bf16.mxu0 %v477
        %5227 = vmatmul.mubr.bf16.gmra.mrb[0].mxu0 %v476
        %v5228 = vpop.f32.mrb[0].mxu0
        %v5229 = vadd.f32 %v5168, %v5228
        %v5230 = vpop.f32.mrb[0].mxu0
        %v5231 = vadd.f32 %v5170, %v5230
        %v5232 = vpop.f32.mrb[0].mxu0
        %v5233 = vpop.f32.mrb[0].mxu0
        %5234 = vdwg.mxu0
        %5235 = vmatprep.subr.bf16.mxu0 %v3527
        %5236 = vmatpush1.bf16.msra.mxu0 %v3526
        %5237 = vmatprep.subr.bf16.mxu0 %v3537
        %5238 = vmatpush1.bf16.msra.mxu0 %v3536
        %5239 = vmatprep.subr.bf16.mxu0 %v3547
        %5240 = vmatpush1.bf16.msra.mxu0 %v3546
        %5241 = vmatprep.subr.bf16.mxu0 %v3557
        %5242 = vmatpush1.bf16.msra.mxu0 %v3556
        %5243 = vmatprep.subr.bf16.mxu0 %v3567
        %5244 = vmatpush1.bf16.msra.mxu0 %v3566
        %5245 = vmatprep.subr.bf16.mxu0 %v3577
        %5246 = vmatpush1.bf16.msra.mxu0 %v3576
        %5247 = vmatprep.subr.bf16.mxu0 %v3587
        %5248 = vmatpush1.bf16.msra.mxu0 %v3586
        %5249 = vmatprep.subr.bf16.mxu0 %v3597
        %5250 = vmatpush1.bf16.msra.mxu0 %v3596
        %5251 = vmatprep.subr.bf16.mxu0 %v3607
        %5252 = vmatpush1.bf16.msra.mxu0 %v3606
        %5253 = vmatprep.subr.bf16.mxu0 %v3617
        %5254 = vmatpush1.bf16.msra.mxu0 %v3616
        %5255 = vmatprep.subr.bf16.mxu0 %v3627
        %5256 = vmatpush1.bf16.msra.mxu0 %v3626
        %5257 = vmatprep.subr.bf16.mxu0 %v3637
        %5258 = vmatpush1.bf16.msra.mxu0 %v3636
        %5259 = vmatprep.subr.bf16.mxu0 %v3647
        %5260 = vmatpush1.bf16.msra.mxu0 %v3646
        %5261 = vmatprep.subr.bf16.mxu0 %v3657
        %5262 = vmatpush1.bf16.msra.mxu0 %v3656
        %5263 = vmatprep.subr.bf16.mxu0 %v3667
        %5264 = vmatpush1.bf16.msra.mxu0 %v3666
        %5265 = vmatprep.subr.bf16.mxu0 %v3677
        %5266 = vmatpush1.bf16.msra.mxu0 %v3676
        %5267 = vmatprep.mubr.bf16.mxu0 %v463
        %5268 = vmatmul.mubr.bf16.gmra.mrb[0].mxu0 %v462
        %v5269 = vpop.f32.mrb[0].mxu0
        %v5270 = vadd.f32 %v5209, %v5269
        %v5271 = vpop.f32.mrb[0].mxu0
        %v5272 = vadd.f32 %v5211, %v5271
        %v5273 = vpop.f32.mrb[0].mxu0
        %v5274 = vadd.f32 %v5213, %v5273
        %v5275 = vpop.f32.mrb[0].mxu0
        %v5276 = vadd.f32 %v5215, %v5275
        %5277 = vmatprep.mubr.bf16.mxu0 %v471
        %5278 = vmatmul.mubr.bf16.gmra.mrb[0].mxu0 %v470
        %v5279 = vpop.f32.mrb[0].mxu0
        %v5280 = vadd.f32 %v5219, %v5279
        %v5281 = vpop.f32.mrb[0].mxu0
        %v5282 = vadd.f32 %v5221, %v5281
        %v5283 = vpop.f32.mrb[0].mxu0
        %v5284 = vadd.f32 %v5223, %v5283
        %v5285 = vpop.f32.mrb[0].mxu0
        %v5286 = vadd.f32 %v5225, %v5285
        %5287 = vmatprep.mubr.bf16.mxu0 %v479
        %5288 = vmatmul.mubr.bf16.gmra.mrb[0].mxu0 %v478
        %v5289 = vpop.f32.mrb[0].mxu0
        %v5290 = vadd.f32 %v5229, %v5289
        %v5291 = vpop.f32.mrb[0].mxu0
        %v5292 = vadd.f32 %v5231, %v5291
        %v5293 = vpop.f32.mrb[0].mxu0
        %v5294 = vpop.f32.mrb[0].mxu0
        %5295 = vdwg.mxu0
        %5296 = vmatprep.subr.bf16.mxu0 %v3049
        %5297 = vmatpush1.bf16.msra.mxu0 %v3048
        %5298 = vmatprep.subr.bf16.mxu0 %v3059
        %5299 = vmatpush1.bf16.msra.mxu0 %v3058
        %5300 = vmatprep.subr.bf16.mxu0 %v3069
        %5301 = vmatpush1.bf16.msra.mxu0 %v3068
        %5302 = vmatprep.subr.bf16.mxu0 %v3079
        %5303 = vmatpush1.bf16.msra.mxu0 %v3078
        %5304 = vmatprep.subr.bf16.mxu0 %v3089
        %5305 = vmatpush1.bf16.msra.mxu0 %v3088
        %5306 = vmatprep.subr.bf16.mxu0 %v3099
        %5307 = vmatpush1.bf16.msra.mxu0 %v3098
        %5308 = vmatprep.subr.bf16.mxu0 %v3109
        %5309 = vmatpush1.bf16.msra.mxu0 %v3108
        %5310 = vmatprep.subr.bf16.mxu0 %v3119
        %5311 = vmatpush1.bf16.msra.mxu0 %v3118
        %5312 = vmatprep.subr.bf16.mxu0 %v3129
        %5313 = vmatpush1.bf16.msra.mxu0 %v3128
        %5314 = vmatprep.subr.bf16.mxu0 %v3139
        %5315 = vmatpush1.bf16.msra.mxu0 %v3138
        %5316 = vmatprep.subr.bf16.mxu0 %v3149
        %5317 = vmatpush1.bf16.msra.mxu0 %v3148
        %5318 = vmatprep.subr.bf16.mxu0 %v3159
        %5319 = vmatpush1.bf16.msra.mxu0 %v3158
        %5320 = vmatprep.subr.bf16.mxu0 %v3169
        %5321 = vmatpush1.bf16.msra.mxu0 %v3168
        %5322 = vmatprep.subr.bf16.mxu0 %v3179
        %5323 = vmatpush1.bf16.msra.mxu0 %v3178
        %5324 = vmatprep.subr.bf16.mxu0 %v3189
        %5325 = vmatpush1.bf16.msra.mxu0 %v3188
        %5326 = vmatprep.subr.bf16.mxu0 %v3199
        %5327 = vmatpush1.bf16.msra.mxu0 %v3198
        %5328 = vmatprep.mubr.bf16.mxu0 %v457
        %5329 = vmatmul.mubr.bf16.gmra.mrb[0].mxu0 %v456
        %v5330 = vpop.f32.mrb[0].mxu0
        %v5331 = vadd.f32 0.0, %v5330
        %v5332 = vpop.f32.mrb[0].mxu0
        %v5333 = vadd.f32 0.0, %v5332
        %v5334 = vpop.f32.mrb[0].mxu0
        %v5335 = vadd.f32 0.0, %v5334
        %v5336 = vpop.f32.mrb[0].mxu0
        %v5337 = vadd.f32 0.0, %v5336
        %5338 = vmatprep.mubr.bf16.mxu0 %v465
        %5339 = vmatmul.mubr.bf16.gmra.mrb[0].mxu0 %v464
        %v5340 = vpop.f32.mrb[0].mxu0
        %v5341 = vadd.f32 0.0, %v5340
        %v5342 = vpop.f32.mrb[0].mxu0
        %v5343 = vadd.f32 0.0, %v5342
        %v5344 = vpop.f32.mrb[0].mxu0
        %v5345 = vadd.f32 0.0, %v5344
        %v5346 = vpop.f32.mrb[0].mxu0
        %v5347 = vadd.f32 0.0, %v5346
        %5348 = vmatprep.mubr.bf16.mxu0 %v473
        %5349 = vmatmul.mubr.bf16.gmra.mrb[0].mxu0 %v472
        %v5350 = vpop.f32.mrb[0].mxu0
        %v5351 = vadd.f32 0.0, %v5350
        %v5352 = vpop.f32.mrb[0].mxu0
        %v5353 = vadd.f32 0.0, %v5352
        %v5354 = vpop.f32.mrb[0].mxu0
        %v5355 = vpop.f32.mrb[0].mxu0
        %5356 = vdwg.mxu0
        %5357 = vmatprep.subr.bf16.mxu0 %v3209
        %5358 = vmatpush1.bf16.msra.mxu0 %v3208
        %5359 = vmatprep.subr.bf16.mxu0 %v3219
        %5360 = vmatpush1.bf16.msra.mxu0 %v3218
        %5361 = vmatprep.subr.bf16.mxu0 %v3229
        %5362 = vmatpush1.bf16.msra.mxu0 %v3228
        %5363 = vmatprep.subr.bf16.mxu0 %v3239
        %5364 = vmatpush1.bf16.msra.mxu0 %v3238
        %5365 = vmatprep.subr.bf16.mxu0 %v3249
        %5366 = vmatpush1.bf16.msra.mxu0 %v3248
        %5367 = vmatprep.subr.bf16.mxu0 %v3259
        %5368 = vmatpush1.bf16.msra.mxu0 %v3258
        %5369 = vmatprep.subr.bf16.mxu0 %v3269
        %5370 = vmatpush1.bf16.msra.mxu0 %v3268
        %5371 = vmatprep.subr.bf16.mxu0 %v3279
        %5372 = vmatpush1.bf16.msra.mxu0 %v3278
        %5373 = vmatprep.subr.bf16.mxu0 %v3289
        %5374 = vmatpush1.bf16.msra.mxu0 %v3288
        %5375 = vmatprep.subr.bf16.mxu0 %v3299
        %5376 = vmatpush1.bf16.msra.mxu0 %v3298
        %5377 = vmatprep.subr.bf16.mxu0 %v3309
        %5378 = vmatpush1.bf16.msra.mxu0 %v3308
        %5379 = vmatprep.subr.bf16.mxu0 %v3319
        %5380 = vmatpush1.bf16.msra.mxu0 %v3318
        %5381 = vmatprep.subr.bf16.mxu0 %v3329
        %5382 = vmatpush1.bf16.msra.mxu0 %v3328
        %5383 = vmatprep.subr.bf16.mxu0 %v3339
        %5384 = vmatpush1.bf16.msra.mxu0 %v3338
        %5385 = vmatprep.subr.bf16.mxu0 %v3349
        %5386 = vmatpush1.bf16.msra.mxu0 %v3348
        %5387 = vmatprep.subr.bf16.mxu0 %v3359
        %5388 = vmatpush1.bf16.msra.mxu0 %v3358
        %5389 = vmatprep.mubr.bf16.mxu0 %v459
        %5390 = vmatmul.mubr.bf16.gmra.mrb[0].mxu0 %v458
        %v5391 = vpop.f32.mrb[0].mxu0
        %v5392 = vadd.f32 %v5331, %v5391
        %v5393 = vpop.f32.mrb[0].mxu0
        %v5394 = vadd.f32 %v5333, %v5393
        %v5395 = vpop.f32.mrb[0].mxu0
        %v5396 = vadd.f32 %v5335, %v5395
        %v5397 = vpop.f32.mrb[0].mxu0
        %v5398 = vadd.f32 %v5337, %v5397
        %5399 = vmatprep.mubr.bf16.mxu0 %v467
        %5400 = vmatmul.mubr.bf16.gmra.mrb[0].mxu0 %v466
        %v5401 = vpop.f32.mrb[0].mxu0
        %v5402 = vadd.f32 %v5341, %v5401
        %v5403 = vpop.f32.mrb[0].mxu0
        %v5404 = vadd.f32 %v5343, %v5403
        %v5405 = vpop.f32.mrb[0].mxu0
        %v5406 = vadd.f32 %v5345, %v5405
        %v5407 = vpop.f32.mrb[0].mxu0
        %v5408 = vadd.f32 %v5347, %v5407
        %5409 = vmatprep.mubr.bf16.mxu0 %v475
        %5410 = vmatmul.mubr.bf16.gmra.mrb[0].mxu0 %v474
        %v5411 = vpop.f32.mrb[0].mxu0
        %v5412 = vadd.f32 %v5351, %v5411
        %v5413 = vpop.f32.mrb[0].mxu0
        %v5414 = vadd.f32 %v5353, %v5413
        %v5415 = vpop.f32.mrb[0].mxu0
        %v5416 = vpop.f32.mrb[0].mxu0
        %5417 = vdwg.mxu0
        %5418 = vmatprep.subr.bf16.mxu0 %v3369
        %5419 = vmatpush1.bf16.msra.mxu0 %v3368
        %5420 = vmatprep.subr.bf16.mxu0 %v3379
        %5421 = vmatpush1.bf16.msra.mxu0 %v3378
        %5422 = vmatprep.subr.bf16.mxu0 %v3389
        %5423 = vmatpush1.bf16.msra.mxu0 %v3388
        %5424 = vmatprep.subr.bf16.mxu0 %v3399
        %5425 = vmatpush1.bf16.msra.mxu0 %v3398
        %5426 = vmatprep.subr.bf16.mxu0 %v3409
        %5427 = vmatpush1.bf16.msra.mxu0 %v3408
        %5428 = vmatprep.subr.bf16.mxu0 %v3419
        %5429 = vmatpush1.bf16.msra.mxu0 %v3418
        %5430 = vmatprep.subr.bf16.mxu0 %v3429
        %5431 = vmatpush1.bf16.msra.mxu0 %v3428
        %5432 = vmatprep.subr.bf16.mxu0 %v3439
        %5433 = vmatpush1.bf16.msra.mxu0 %v3438
        %5434 = vmatprep.subr.bf16.mxu0 %v3449
        %5435 = vmatpush1.bf16.msra.mxu0 %v3448
        %5436 = vmatprep.subr.bf16.mxu0 %v3459
        %5437 = vmatpush1.bf16.msra.mxu0 %v3458
        %5438 = vmatprep.subr.bf16.mxu0 %v3469
        %5439 = vmatpush1.bf16.msra.mxu0 %v3468
        %5440 = vmatprep.subr.bf16.mxu0 %v3479
        %5441 = vmatpush1.bf16.msra.mxu0 %v3478
        %5442 = vmatprep.subr.bf16.mxu0 %v3489
        %5443 = vmatpush1.bf16.msra.mxu0 %v3488
        %5444 = vmatprep.subr.bf16.mxu0 %v3499
        %5445 = vmatpush1.bf16.msra.mxu0 %v3498
        %5446 = vmatprep.subr.bf16.mxu0 %v3509
        %5447 = vmatpush1.bf16.msra.mxu0 %v3508
        %5448 = vmatprep.subr.bf16.mxu0 %v3519
        %5449 = vmatpush1.bf16.msra.mxu0 %v3518
        %5450 = vmatprep.mubr.bf16.mxu0 %v461
        %5451 = vmatmul.mubr.bf16.gmra.mrb[0].mxu0 %v460
        %v5452 = vpop.f32.mrb[0].mxu0
        %v5453 = vadd.f32 %v5392, %v5452
        %v5454 = vpop.f32.mrb[0].mxu0
        %v5455 = vadd.f32 %v5394, %v5454
        %v5456 = vpop.f32.mrb[0].mxu0
        %v5457 = vadd.f32 %v5396, %v5456
        %v5458 = vpop.f32.mrb[0].mxu0
        %v5459 = vadd.f32 %v5398, %v5458
        %5460 = vmatprep.mubr.bf16.mxu0 %v469
        %5461 = vmatmul.mubr.bf16.gmra.mrb[0].mxu0 %v468
        %v5462 = vpop.f32.mrb[0].mxu0
        %v5463 = vadd.f32 %v5402, %v5462
        %v5464 = vpop.f32.mrb[0].mxu0
        %v5465 = vadd.f32 %v5404, %v5464
        %v5466 = vpop.f32.mrb[0].mxu0
        %v5467 = vadd.f32 %v5406, %v5466
        %v5468 = vpop.f32.mrb[0].mxu0
        %v5469 = vadd.f32 %v5408, %v5468
        %5470 = vmatprep.mubr.bf16.mxu0 %v477
        %5471 = vmatmul.mubr.bf16.gmra.mrb[0].mxu0 %v476
        %v5472 = vpop.f32.mrb[0].mxu0
        %v5473 = vadd.f32 %v5412, %v5472
        %v5474 = vpop.f32.mrb[0].mxu0
        %v5475 = vadd.f32 %v5414, %v5474
        %v5476 = vpop.f32.mrb[0].mxu0
        %v5477 = vpop.f32.mrb[0].mxu0
        %5478 = vdwg.mxu0
        %5479 = vmatprep.subr.bf16.mxu0 %v3529
        %5480 = vmatpush1.bf16.msra.mxu0 %v3528
        %5481 = vmatprep.subr.bf16.mxu0 %v3539
        %5482 = vmatpush1.bf16.msra.mxu0 %v3538
        %5483 = vmatprep.subr.bf16.mxu0 %v3549
        %5484 = vmatpush1.bf16.msra.mxu0 %v3548
        %5485 = vmatprep.subr.bf16.mxu0 %v3559
        %5486 = vmatpush1.bf16.msra.mxu0 %v3558
        %5487 = vmatprep.subr.bf16.mxu0 %v3569
        %5488 = vmatpush1.bf16.msra.mxu0 %v3568
        %5489 = vmatprep.subr.bf16.mxu0 %v3579
        %5490 = vmatpush1.bf16.msra.mxu0 %v3578
        %5491 = vmatprep.subr.bf16.mxu0 %v3589
        %5492 = vmatpush1.bf16.msra.mxu0 %v3588
        %5493 = vmatprep.subr.bf16.mxu0 %v3599
        %5494 = vmatpush1.bf16.msra.mxu0 %v3598
        %5495 = vmatprep.subr.bf16.mxu0 %v3609
        %5496 = vmatpush1.bf16.msra.mxu0 %v3608
        %5497 = vmatprep.subr.bf16.mxu0 %v3619
        %5498 = vmatpush1.bf16.msra.mxu0 %v3618
        %5499 = vmatprep.subr.bf16.mxu0 %v3629
        %5500 = vmatpush1.bf16.msra.mxu0 %v3628
        %5501 = vmatprep.subr.bf16.mxu0 %v3639
        %5502 = vmatpush1.bf16.msra.mxu0 %v3638
        %5503 = vmatprep.subr.bf16.mxu0 %v3649
        %5504 = vmatpush1.bf16.msra.mxu0 %v3648
        %5505 = vmatprep.subr.bf16.mxu0 %v3659
        %5506 = vmatpush1.bf16.msra.mxu0 %v3658
        %5507 = vmatprep.subr.bf16.mxu0 %v3669
        %5508 = vmatpush1.bf16.msra.mxu0 %v3668
        %5509 = vmatprep.subr.bf16.mxu0 %v3679
        %5510 = vmatpush1.bf16.msra.mxu0 %v3678
        %5511 = vmatprep.mubr.bf16.mxu0 %v463
        %5512 = vmatmul.mubr.bf16.gmra.mrb[0].mxu0 %v462
        %v5513 = vpop.f32.mrb[0].mxu0
        %v5514 = vadd.f32 %v5453, %v5513
        %v5515 = vpop.f32.mrb[0].mxu0
        %v5516 = vadd.f32 %v5455, %v5515
        %v5517 = vpop.f32.mrb[0].mxu0
        %v5518 = vadd.f32 %v5457, %v5517
        %v5519 = vpop.f32.mrb[0].mxu0
        %v5520 = vadd.f32 %v5459, %v5519
        %5521 = vmatprep.mubr.bf16.mxu0 %v471
        %5522 = vmatmul.mubr.bf16.gmra.mrb[0].mxu0 %v470
        %v5523 = vpop.f32.mrb[0].mxu0
        %v5524 = vadd.f32 %v5463, %v5523
        %v5525 = vpop.f32.mrb[0].mxu0
        %v5526 = vadd.f32 %v5465, %v5525
        %v5527 = vpop.f32.mrb[0].mxu0
        %v5528 = vadd.f32 %v5467, %v5527
        %v5529 = vpop.f32.mrb[0].mxu0
        %v5530 = vadd.f32 %v5469, %v5529
        %5531 = vmatprep.mubr.bf16.mxu0 %v479
        %5532 = vmatmul.mubr.bf16.gmra.mrb[0].mxu0 %v478
        %v5533 = vpop.f32.mrb[0].mxu0
        %v5534 = vadd.f32 %v5473, %v5533
        %v5535 = vpop.f32.mrb[0].mxu0
        %v5536 = vadd.f32 %v5475, %v5535
        %v5537 = vpop.f32.mrb[0].mxu0
        %v5538 = vpop.f32.mrb[0].mxu0
        %5539 = vdwg.mxu0
        %v5540 = vmul.f32 %v4538, %v4538
        %v5541 = vmul.f32 %v4540, %v4540
        %v5542 = vmul.f32 %v4782, %v4782
        %v5543 = vmul.f32 %v4784, %v4784
        %v5544 = vmul.f32 %v5026, %v5026
        %v5545 = vmul.f32 %v4542, %v4542
        %v5546 = vmul.f32 %v4544, %v4544
        %v5547 = vmul.f32 %v4786, %v4786
        %v5548 = vmul.f32 %v4788, %v4788
        %v5549 = vmul.f32 %v5030, %v5030
        %v5550 = vmul.f32 %v4548, %v4548
        %v5551 = vmul.f32 %v4550, %v4550
        %v5552 = vmul.f32 %v4792, %v4792
        %v5553 = vmul.f32 %v4794, %v4794
        %v5554 = vmul.f32 %v5036, %v5036
        %v5555 = vmul.f32 %v4552, %v4552
        %v5556 = vmul.f32 %v4554, %v4554
        %v5557 = vmul.f32 %v4796, %v4796
        %v5558 = vmul.f32 %v4798, %v4798
        %v5559 = vmul.f32 %v5040, %v5040
        %v5560 = vmul.f32 %v4558, %v4558
        %v5561 = vmul.f32 %v4560, %v4560
        %v5562 = vmul.f32 %v4802, %v4802
        %v5563 = vmul.f32 %v4804, %v4804
        %v5564 = vmul.f32 %v5046, %v5046
        %v5565 = vmul.f32 %v5028, %v5028
        %v5566 = vmul.f32 %v5270, %v5270
        %v5567 = vmul.f32 %v5272, %v5272
        %v5568 = vmul.f32 %v5514, %v5514
        %v5569 = vmul.f32 %v5516, %v5516
        %v5570 = vmul.f32 %v5032, %v5032
        %v5571 = vmul.f32 %v5274, %v5274
        %v5572 = vmul.f32 %v5276, %v5276
        %v5573 = vmul.f32 %v5518, %v5518
        %v5574 = vmul.f32 %v5520, %v5520
        %v5575 = vmul.f32 %v5038, %v5038
        %v5576 = vmul.f32 %v5280, %v5280
        %v5577 = vmul.f32 %v5282, %v5282
        %v5578 = vmul.f32 %v5524, %v5524
        %v5579 = vmul.f32 %v5526, %v5526
        %v5580 = vmul.f32 %v5042, %v5042
        %v5581 = vmul.f32 %v5284, %v5284
        %v5582 = vmul.f32 %v5286, %v5286
        %v5583 = vmul.f32 %v5528, %v5528
        %v5584 = vmul.f32 %v5530, %v5530
        %v5585 = vmul.f32 %v5048, %v5048
        %v5586 = vmul.f32 %v5290, %v5290
        %v5587 = vmul.f32 %v5292, %v5292
        %v5588 = vmul.f32 %v5534, %v5534
        %v5589 = vmul.f32 %v5536, %v5536
        %v5590 = vadd.f32 %v5540, %v5565
        %v5591 = vadd.f32 %v5541, %v5566
        %v5592 = vadd.f32 %v5542, %v5567
        %v5593 = vadd.f32 %v5543, %v5568
        %v5594 = vadd.f32 %v5544, %v5569
        %v5595 = vadd.f32 %v5545, %v5570
        %v5596 = vadd.f32 %v5546, %v5571
        %v5597 = vadd.f32 %v5547, %v5572
        %v5598 = vadd.f32 %v5548, %v5573
        %v5599 = vadd.f32 %v5549, %v5574
        %v5600 = vadd.f32 %v5550, %v5575
        %v5601 = vadd.f32 %v5551, %v5576
        %v5602 = vadd.f32 %v5552, %v5577
        %v5603 = vadd.f32 %v5553, %v5578
        %v5604 = vadd.f32 %v5554, %v5579
        %v5605 = vadd.f32 %v5555, %v5580
        %v5606 = vadd.f32 %v5556, %v5581
        %v5607 = vadd.f32 %v5557, %v5582
        %v5608 = vadd.f32 %v5558, %v5583
        %v5609 = vadd.f32 %v5559, %v5584
        %v5610 = vadd.f32 %v5560, %v5585
        %v5611 = vadd.f32 %v5561, %v5586
        %v5612 = vadd.f32 %v5562, %v5587
        %v5613 = vadd.f32 %v5563, %v5588
        %v5614 = vadd.f32 %v5564, %v5589
        %v5615 = vrsqrt.pop %v5590
        %v5616 = vmul.f32 %v5590, %v5615
        %vm5617 = vcmp.eq.f32.partialorder %v5590, inf
        %v5618 = vsel %vm5617, %v5590, %v5616
        %vm5619 = vcmp.eq.f32.partialorder %v5590, 0.0
        %v5620 = vand.u32 %v5590, 2147483648
        %v5621 = vsel %vm5619, %v5620, %v5618
        %v5622 = vrsqrt.pop %v5591
        %v5623 = vmul.f32 %v5591, %v5622
        %vm5624 = vcmp.eq.f32.partialorder %v5591, inf
        %v5625 = vsel %vm5624, %v5591, %v5623
        %vm5626 = vcmp.eq.f32.partialorder %v5591, 0.0
        %v5627 = vand.u32 %v5591, 2147483648
        %v5628 = vsel %vm5626, %v5627, %v5625
        %v5629 = vrsqrt.pop %v5592
        %v5630 = vmul.f32 %v5592, %v5629
        %vm5631 = vcmp.eq.f32.partialorder %v5592, inf
        %v5632 = vsel %vm5631, %v5592, %v5630
        %vm5633 = vcmp.eq.f32.partialorder %v5592, 0.0
        %v5634 = vand.u32 %v5592, 2147483648
        %v5635 = vsel %vm5633, %v5634, %v5632
        %v5636 = vrsqrt.pop %v5593
        %v5637 = vmul.f32 %v5593, %v5636
        %vm5638 = vcmp.eq.f32.partialorder %v5593, inf
        %v5639 = vsel %vm5638, %v5593, %v5637
        %vm5640 = vcmp.eq.f32.partialorder %v5593, 0.0
        %v5641 = vand.u32 %v5593, 2147483648
        %v5642 = vsel %vm5640, %v5641, %v5639
        %v5643 = vrsqrt.pop %v5594
        %v5644 = vmul.f32 %v5594, %v5643
        %vm5645 = vcmp.eq.f32.partialorder %v5594, inf
        %v5646 = vsel %vm5645, %v5594, %v5644
        %vm5647 = vcmp.eq.f32.partialorder %v5594, 0.0
        %v5648 = vand.u32 %v5594, 2147483648
        %v5649 = vsel %vm5647, %v5648, %v5646
        %v5650 = vrsqrt.pop %v5595
        %v5651 = vmul.f32 %v5595, %v5650
        %vm5652 = vcmp.eq.f32.partialorder %v5595, inf
        %v5653 = vsel %vm5652, %v5595, %v5651
        %vm5654 = vcmp.eq.f32.partialorder %v5595, 0.0
        %v5655 = vand.u32 %v5595, 2147483648
        %v5656 = vsel %vm5654, %v5655, %v5653
        %v5657 = vrsqrt.pop %v5596
        %v5658 = vmul.f32 %v5596, %v5657
        %vm5659 = vcmp.eq.f32.partialorder %v5596, inf
        %v5660 = vsel %vm5659, %v5596, %v5658
        %vm5661 = vcmp.eq.f32.partialorder %v5596, 0.0
        %v5662 = vand.u32 %v5596, 2147483648
        %v5663 = vsel %vm5661, %v5662, %v5660
        %v5664 = vrsqrt.pop %v5597
        %v5665 = vmul.f32 %v5597, %v5664
        %vm5666 = vcmp.eq.f32.partialorder %v5597, inf
        %v5667 = vsel %vm5666, %v5597, %v5665
        %vm5668 = vcmp.eq.f32.partialorder %v5597, 0.0
        %v5669 = vand.u32 %v5597, 2147483648
        %v5670 = vsel %vm5668, %v5669, %v5667
        %v5671 = vrsqrt.pop %v5598
        %v5672 = vmul.f32 %v5598, %v5671
        %vm5673 = vcmp.eq.f32.partialorder %v5598, inf
        %v5674 = vsel %vm5673, %v5598, %v5672
        %vm5675 = vcmp.eq.f32.partialorder %v5598, 0.0
        %v5676 = vand.u32 %v5598, 2147483648
        %v5677 = vsel %vm5675, %v5676, %v5674
        %v5678 = vrsqrt.pop %v5599
        %v5679 = vmul.f32 %v5599, %v5678
        %vm5680 = vcmp.eq.f32.partialorder %v5599, inf
        %v5681 = vsel %vm5680, %v5599, %v5679
        %vm5682 = vcmp.eq.f32.partialorder %v5599, 0.0
        %v5683 = vand.u32 %v5599, 2147483648
        %v5684 = vsel %vm5682, %v5683, %v5681
        %v5685 = vrsqrt.pop %v5600
        %v5686 = vmul.f32 %v5600, %v5685
        %vm5687 = vcmp.eq.f32.partialorder %v5600, inf
        %v5688 = vsel %vm5687, %v5600, %v5686
        %vm5689 = vcmp.eq.f32.partialorder %v5600, 0.0
        %v5690 = vand.u32 %v5600, 2147483648
        %v5691 = vsel %vm5689, %v5690, %v5688
        %v5692 = vrsqrt.pop %v5601
        %v5693 = vmul.f32 %v5601, %v5692
        %vm5694 = vcmp.eq.f32.partialorder %v5601, inf
        %v5695 = vsel %vm5694, %v5601, %v5693
        %vm5696 = vcmp.eq.f32.partialorder %v5601, 0.0
        %v5697 = vand.u32 %v5601, 2147483648
        %v5698 = vsel %vm5696, %v5697, %v5695
        %v5699 = vrsqrt.pop %v5602
        %v5700 = vmul.f32 %v5602, %v5699
        %vm5701 = vcmp.eq.f32.partialorder %v5602, inf
        %v5702 = vsel %vm5701, %v5602, %v5700
        %vm5703 = vcmp.eq.f32.partialorder %v5602, 0.0
        %v5704 = vand.u32 %v5602, 2147483648
        %v5705 = vsel %vm5703, %v5704, %v5702
        %v5706 = vrsqrt.pop %v5603
        %v5707 = vmul.f32 %v5603, %v5706
        %vm5708 = vcmp.eq.f32.partialorder %v5603, inf
        %v5709 = vsel %vm5708, %v5603, %v5707
        %vm5710 = vcmp.eq.f32.partialorder %v5603, 0.0
        %v5711 = vand.u32 %v5603, 2147483648
        %v5712 = vsel %vm5710, %v5711, %v5709
        %v5713 = vrsqrt.pop %v5604
        %v5714 = vmul.f32 %v5604, %v5713
        %vm5715 = vcmp.eq.f32.partialorder %v5604, inf
        %v5716 = vsel %vm5715, %v5604, %v5714
        %vm5717 = vcmp.eq.f32.partialorder %v5604, 0.0
        %v5718 = vand.u32 %v5604, 2147483648
        %v5719 = vsel %vm5717, %v5718, %v5716
        %v5720 = vrsqrt.pop %v5605
        %v5721 = vmul.f32 %v5605, %v5720
        %vm5722 = vcmp.eq.f32.partialorder %v5605, inf
        %v5723 = vsel %vm5722, %v5605, %v5721
        %vm5724 = vcmp.eq.f32.partialorder %v5605, 0.0
        %v5725 = vand.u32 %v5605, 2147483648
        %v5726 = vsel %vm5724, %v5725, %v5723
        %v5727 = vrsqrt.pop %v5606
        %v5728 = vmul.f32 %v5606, %v5727
        %vm5729 = vcmp.eq.f32.partialorder %v5606, inf
        %v5730 = vsel %vm5729, %v5606, %v5728
        %vm5731 = vcmp.eq.f32.partialorder %v5606, 0.0
        %v5732 = vand.u32 %v5606, 2147483648
        %v5733 = vsel %vm5731, %v5732, %v5730
        %v5734 = vrsqrt.pop %v5607
        %v5735 = vmul.f32 %v5607, %v5734
        %vm5736 = vcmp.eq.f32.partialorder %v5607, inf
        %v5737 = vsel %vm5736, %v5607, %v5735
        %vm5738 = vcmp.eq.f32.partialorder %v5607, 0.0
        %v5739 = vand.u32 %v5607, 2147483648
        %v5740 = vsel %vm5738, %v5739, %v5737
        %v5741 = vrsqrt.pop %v5608
        %v5742 = vmul.f32 %v5608, %v5741
        %vm5743 = vcmp.eq.f32.partialorder %v5608, inf
        %v5744 = vsel %vm5743, %v5608, %v5742
        %vm5745 = vcmp.eq.f32.partialorder %v5608, 0.0
        %v5746 = vand.u32 %v5608, 2147483648
        %v5747 = vsel %vm5745, %v5746, %v5744
        %v5748 = vrsqrt.pop %v5609
        %v5749 = vmul.f32 %v5609, %v5748
        %vm5750 = vcmp.eq.f32.partialorder %v5609, inf
        %v5751 = vsel %vm5750, %v5609, %v5749
        %vm5752 = vcmp.eq.f32.partialorder %v5609, 0.0
        %v5753 = vand.u32 %v5609, 2147483648
        %v5754 = vsel %vm5752, %v5753, %v5751
        %v5755 = vrsqrt.pop %v5610
        %v5756 = vmul.f32 %v5610, %v5755
        %vm5757 = vcmp.eq.f32.partialorder %v5610, inf
        %v5758 = vsel %vm5757, %v5610, %v5756
        %vm5759 = vcmp.eq.f32.partialorder %v5610, 0.0
        %v5760 = vand.u32 %v5610, 2147483648
        %v5761 = vsel %vm5759, %v5760, %v5758
        %v5762 = vrsqrt.pop %v5611
        %v5763 = vmul.f32 %v5611, %v5762
        %vm5764 = vcmp.eq.f32.partialorder %v5611, inf
        %v5765 = vsel %vm5764, %v5611, %v5763
        %vm5766 = vcmp.eq.f32.partialorder %v5611, 0.0
        %v5767 = vand.u32 %v5611, 2147483648
        %v5768 = vsel %vm5766, %v5767, %v5765
        %v5769 = vrsqrt.pop %v5612
        %v5770 = vmul.f32 %v5612, %v5769
        %vm5771 = vcmp.eq.f32.partialorder %v5612, inf
        %v5772 = vsel %vm5771, %v5612, %v5770
        %vm5773 = vcmp.eq.f32.partialorder %v5612, 0.0
        %v5774 = vand.u32 %v5612, 2147483648
        %v5775 = vsel %vm5773, %v5774, %v5772
        %v5776 = vrsqrt.pop %v5613
        %v5777 = vmul.f32 %v5613, %v5776
        %vm5778 = vcmp.eq.f32.partialorder %v5613, inf
        %v5779 = vsel %vm5778, %v5613, %v5777
        %vm5780 = vcmp.eq.f32.partialorder %v5613, 0.0
        %v5781 = vand.u32 %v5613, 2147483648
        %v5782 = vsel %vm5780, %v5781, %v5779
        %v5783 = vrsqrt.pop %v5614
        %v5784 = vmul.f32 %v5614, %v5783
        %vm5785 = vcmp.eq.f32.partialorder %v5614, inf
        %v5786 = vsel %vm5785, %v5614, %v5784
        %vm5787 = vcmp.eq.f32.partialorder %v5614, 0.0
        %v5788 = vand.u32 %v5614, 2147483648
        %v5789 = vsel %vm5787, %v5788, %v5786
        %v5790 = vpack.c.bf16 %v5656, %v5621
        %v5791 = vpack.c.bf16 %v5663, %v5628
        %v5792 = vpack.c.bf16 %v5670, %v5635
        %v5793 = vpack.c.bf16 %v5677, %v5642
        %v5794 = vpack.c.bf16 %v5684, %v5649
        %v5795 = vpack.c.bf16 %v5726, %v5691
        %v5796 = vpack.c.bf16 %v5733, %v5698
        %v5797 = vpack.c.bf16 %v5740, %v5705
        %v5798 = vpack.c.bf16 %v5747, %v5712
        %v5799 = vpack.c.bf16 %v5754, %v5719
        %v5800 = vpack.c.bf16 %v5761, %v5761
        %v5801 = vpack.c.bf16 %v5768, %v5768
        %v5802 = vpack.c.bf16 %v5775, %v5775
        %v5803 = vpack.c.bf16 %v5782, %v5782
        %v5804 = vpack.c.bf16 %v5789, %v5789
        %v5805 = vld [vmem:[#allocation8] sm:$0xf]
        %v5806 = vld [vmem:[#allocation8 + $0x4] sm:$0xf]
        %v5807 = vld [vmem:[#allocation8 + $0x8] sm:$0xf]
        %v5808 = vld [vmem:[#allocation8 + $0xc] sm:$0xf]
        %v5809 = vld [vmem:[#allocation8 + $0x10] sm:$0xf]
        %v5810 = vld [vmem:[#allocation8 + $0x14] sm:$0xf]
        %v5811 = vld [vmem:[#allocation8 + $0x18] sm:$0xf]
        %v5812 = vld [vmem:[#allocation8 + $0x1c] sm:$0xf]
        %v5813 = vld [vmem:[#allocation8 + $0x20] sm:$0xf]
        %v5814 = vld [vmem:[#allocation8 + $0x24] sm:$0xf]
        %v5815 = vld [vmem:[#allocation8 + $0x28] sm:$0xf]
        %v5816 = vld [vmem:[#allocation8 + $0x2c] sm:$0xf]
        %v5817 = vld [vmem:[#allocation8 + $0x30] sm:$0xf]
        %v5818 = vld [vmem:[#allocation8 + $0x34] sm:$0xf]
        %v5819 = vld [vmem:[#allocation8 + $0x38] sm:$0xf]
        %v5820 = vld [vmem:[#allocation8 + $0x3c] sm:$0xf]
        %v5821 = vld [vmem:[#allocation8 + $0x40] sm:$0xf]
        %v5822 = vld [vmem:[#allocation8 + $0x44] sm:$0xf]
        %v5823 = vld [vmem:[#allocation8 + $0x48] sm:$0xf]
        %v5824 = vld [vmem:[#allocation8 + $0x4c] sm:$0xf]
        %v5825 = vld [vmem:[#allocation8 + $0x50] sm:$0xf]
        %v5826 = vld [vmem:[#allocation8 + $0x54] sm:$0xf]
        %v5827 = vld [vmem:[#allocation8 + $0x58] sm:$0xf]
        %v5828 = vld [vmem:[#allocation8 + $0x5c] sm:$0xf]
        %v5829 = vld [vmem:[#allocation8 + $0x60] sm:$0xf]
        %v5830 = vld [vmem:[#allocation8 + $0x64] sm:$0xf]
        %v5831 = vld [vmem:[#allocation8 + $0x68] sm:$0xf]
        %v5832 = vld [vmem:[#allocation8 + $0x6c] sm:$0xf]
        %v5833 = vld [vmem:[#allocation8 + $0x70] sm:$0xf]
        %v5834 = vld [vmem:[#allocation8 + $0x74] sm:$0xf]
        %v5835 = vld [vmem:[#allocation8 + $0x78] sm:$0xf]
        %v5836 = vld [vmem:[#allocation8 + $0x7c] sm:$0xf]
        %v5837 = vld [vmem:[#allocation8 + $0x80] sm:$0xf]
        %v5838 = vld [vmem:[#allocation8 + $0x84] sm:$0xf]
        %v5839 = vld [vmem:[#allocation8 + $0x88] sm:$0xf]
        %v5840 = vld [vmem:[#allocation8 + $0x8c] sm:$0xf]
        %v5841 = vld [vmem:[#allocation8 + $0x90] sm:$0xf]
        %v5842 = vld [vmem:[#allocation8 + $0x94] sm:$0xf]
        %v5843 = vld [vmem:[#allocation8 + $0x98] sm:$0xf]
        %v5844 = vld [vmem:[#allocation8 + $0x9c] sm:$0xf]
        %v5845 = vld [vmem:[#allocation8 + $0xa0] sm:$0xf]
        %v5846 = vld [vmem:[#allocation8 + $0xa4] sm:$0xf]
        %v5847 = vld [vmem:[#allocation8 + $0xa8] sm:$0xf]
        %v5848 = vld [vmem:[#allocation8 + $0xac] sm:$0xf]
        %v5849 = vld [vmem:[#allocation8 + $0xb0] sm:$0xf]
        %v5850 = vld [vmem:[#allocation8 + $0xb4] sm:$0xf]
        %v5851 = vld [vmem:[#allocation8 + $0xb8] sm:$0xf]
        %v5852 = vld [vmem:[#allocation8 + $0xbc] sm:$0xf]
        %v5853 = vld [vmem:[#allocation8 + $0xc0] sm:$0xf]
        %v5854 = vld [vmem:[#allocation8 + $0xc4] sm:$0xf]
        %v5855 = vld [vmem:[#allocation8 + $0xc8] sm:$0xf]
        %v5856 = vld [vmem:[#allocation8 + $0xcc] sm:$0xf]
        %v5857 = vld [vmem:[#allocation8 + $0xd0] sm:$0xf]
        %v5858 = vld [vmem:[#allocation8 + $0xd4] sm:$0xf]
        %v5859 = vld [vmem:[#allocation8 + $0xd8] sm:$0xf]
        %v5860 = vld [vmem:[#allocation8 + $0xdc] sm:$0xf]
        %v5861 = vld [vmem:[#allocation8 + $0xe0] sm:$0xf]
        %v5862 = vld [vmem:[#allocation8 + $0xe4] sm:$0xf]
        %v5863 = vld [vmem:[#allocation8 + $0xe8] sm:$0xf]
        %v5864 = vld [vmem:[#allocation8 + $0xec] sm:$0xf]
        %v5865 = vld [vmem:[#allocation8 + $0xf0] sm:$0xf]
        %v5866 = vld [vmem:[#allocation8 + $0xf4] sm:$0xf]
        %v5867 = vld [vmem:[#allocation8 + $0xf8] sm:$0xf]
        %v5868 = vld [vmem:[#allocation8 + $0xfc] sm:$0xf]
        %v5869 = vld [vmem:[#allocation8 + $0x100] sm:$0xf]
        %v5870 = vld [vmem:[#allocation8 + $0x104] sm:$0xf]
        %v5871 = vld [vmem:[#allocation8 + $0x108] sm:$0xf]
        %v5872 = vld [vmem:[#allocation8 + $0x10c] sm:$0xf]
        %v5873 = vld [vmem:[#allocation8 + $0x110] sm:$0xf]
        %v5874 = vld [vmem:[#allocation8 + $0x114] sm:$0xf]
        %v5875 = vld [vmem:[#allocation8 + $0x118] sm:$0xf]
        %v5876 = vld [vmem:[#allocation8 + $0x11c] sm:$0xf]
        %v5877 = vld [vmem:[#allocation8 + $0x120] sm:$0xf]
        %v5878 = vld [vmem:[#allocation8 + $0x124] sm:$0xf]
        %v5879 = vld [vmem:[#allocation8 + $0x128] sm:$0xf]
        %v5880 = vld [vmem:[#allocation8 + $0x12c] sm:$0xf]
        %v5881 = vld [vmem:[#allocation8 + $0x130] sm:$0xf]
        %v5882 = vld [vmem:[#allocation8 + $0x134] sm:$0xf]
        %v5883 = vld [vmem:[#allocation8 + $0x138] sm:$0xf]
        %v5884 = vld [vmem:[#allocation8 + $0x13c] sm:$0xf]
        %v5965 = vunpack.c.l.b16 %v5805
        %v5966 = vunpack.c.l.b16 %v5806
        %v5967 = vunpack.c.l.b16 %v5807
        %v5968 = vunpack.c.l.b16 %v5808
        %v5969 = vunpack.c.l.b16 %v5809
        %v5970 = vunpack.c.l.b16 %v5810
        %v5971 = vunpack.c.l.b16 %v5811
        %v5972 = vunpack.c.l.b16 %v5812
        %v5973 = vunpack.c.l.b16 %v5813
        %v5974 = vunpack.c.l.b16 %v5814
        %v5975 = vunpack.c.l.b16 %v5815
        %v5976 = vunpack.c.l.b16 %v5816
        %v5977 = vunpack.c.l.b16 %v5817
        %v5978 = vunpack.c.l.b16 %v5818
        %v5979 = vunpack.c.l.b16 %v5819
        %v5980 = vunpack.c.l.b16 %v5820
        %v5981 = vunpack.c.l.b16 %v5821
        %v5982 = vunpack.c.l.b16 %v5822
        %v5983 = vunpack.c.l.b16 %v5823
        %v5984 = vunpack.c.l.b16 %v5824
        %v5985 = vunpack.c.l.b16 %v5825
        %v5986 = vunpack.c.l.b16 %v5826
        %v5987 = vunpack.c.l.b16 %v5827
        %v5988 = vunpack.c.l.b16 %v5828
        %v5989 = vunpack.c.l.b16 %v5829
        %v5990 = vunpack.c.l.b16 %v5830
        %v5991 = vunpack.c.l.b16 %v5831
        %v5992 = vunpack.c.l.b16 %v5832
        %v5993 = vunpack.c.l.b16 %v5833
        %v5994 = vunpack.c.l.b16 %v5834
        %v5995 = vunpack.c.l.b16 %v5835
        %v5996 = vunpack.c.l.b16 %v5836
        %v5997 = vunpack.c.l.b16 %v5837
        %v5998 = vunpack.c.l.b16 %v5838
        %v5999 = vunpack.c.l.b16 %v5839
        %v6000 = vunpack.c.l.b16 %v5840
        %v6001 = vunpack.c.l.b16 %v5841
        %v6002 = vunpack.c.l.b16 %v5842
        %v6003 = vunpack.c.l.b16 %v5843
        %v6004 = vunpack.c.l.b16 %v5844
        %v6005 = vunpack.c.l.b16 %v5845
        %v6006 = vunpack.c.l.b16 %v5846
        %v6007 = vunpack.c.l.b16 %v5847
        %v6008 = vunpack.c.l.b16 %v5848
        %v6009 = vunpack.c.l.b16 %v5849
        %v6010 = vunpack.c.l.b16 %v5850
        %v6011 = vunpack.c.l.b16 %v5851
        %v6012 = vunpack.c.l.b16 %v5852
        %v6013 = vunpack.c.l.b16 %v5853
        %v6014 = vunpack.c.l.b16 %v5854
        %v6015 = vunpack.c.l.b16 %v5855
        %v6016 = vunpack.c.l.b16 %v5856
        %v6017 = vunpack.c.l.b16 %v5857
        %v6018 = vunpack.c.l.b16 %v5858
        %v6019 = vunpack.c.l.b16 %v5859
        %v6020 = vunpack.c.l.b16 %v5860
        %v6021 = vunpack.c.l.b16 %v5861
        %v6022 = vunpack.c.l.b16 %v5862
        %v6023 = vunpack.c.l.b16 %v5863
        %v6024 = vunpack.c.l.b16 %v5864
        %v6025 = vunpack.c.l.b16 %v5865
        %v6026 = vunpack.c.l.b16 %v5866
        %v6027 = vunpack.c.l.b16 %v5867
        %v6028 = vunpack.c.l.b16 %v5868
        %v6029 = vunpack.c.l.b16 %v5869
        %v6030 = vunpack.c.l.b16 %v5870
        %v6031 = vunpack.c.l.b16 %v5871
        %v6032 = vunpack.c.l.b16 %v5872
        %v6033 = vunpack.c.l.b16 %v5873
        %v6034 = vunpack.c.l.b16 %v5874
        %v6035 = vunpack.c.l.b16 %v5875
        %v6036 = vunpack.c.l.b16 %v5876
        %v6037 = vunpack.c.l.b16 %v5877
        %v6038 = vunpack.c.l.b16 %v5878
        %v6039 = vunpack.c.l.b16 %v5879
        %v6040 = vunpack.c.l.b16 %v5880
        %v6041 = vunpack.c.l.b16 %v5881
        %v6042 = vunpack.c.l.b16 %v5882
        %v6043 = vunpack.c.l.b16 %v5883
        %v6044 = vunpack.c.l.b16 %v5884
        %v6045 = vpack.c.b16 %v5966, %v5965
        %v6046 = vpack.c.b16 %v5968, %v5967
        %v6047 = vpack.c.b16 %v5970, %v5969
        %v6048 = vpack.c.b16 %v5972, %v5971
        %v6049 = vpack.c.b16 %v5974, %v5973
        %v6050 = vpack.c.b16 %v5976, %v5975
        %v6051 = vpack.c.b16 %v5978, %v5977
        %v6052 = vpack.c.b16 %v5980, %v5979
        %v6053 = vpack.c.b16 %v5982, %v5981
        %v6054 = vpack.c.b16 %v5984, %v5983
        %v6055 = vpack.c.b16 %v5986, %v5985
        %v6056 = vpack.c.b16 %v5988, %v5987
        %v6057 = vpack.c.b16 %v5990, %v5989
        %v6058 = vpack.c.b16 %v5992, %v5991
        %v6059 = vpack.c.b16 %v5994, %v5993
        %v6060 = vpack.c.b16 %v5996, %v5995
        %v6061 = vpack.c.b16 %v5998, %v5997
        %v6062 = vpack.c.b16 %v6000, %v5999
        %v6063 = vpack.c.b16 %v6002, %v6001
        %v6064 = vpack.c.b16 %v6004, %v6003
        %v6065 = vpack.c.b16 %v6006, %v6005
        %v6066 = vpack.c.b16 %v6008, %v6007
        %v6067 = vpack.c.b16 %v6010, %v6009
        %v6068 = vpack.c.b16 %v6012, %v6011
        %v6069 = vpack.c.b16 %v6014, %v6013
        %v6070 = vpack.c.b16 %v6016, %v6015
        %v6071 = vpack.c.b16 %v6018, %v6017
        %v6072 = vpack.c.b16 %v6020, %v6019
        %v6073 = vpack.c.b16 %v6022, %v6021
        %v6074 = vpack.c.b16 %v6024, %v6023
        %v6075 = vpack.c.b16 %v6026, %v6025
        %v6076 = vpack.c.b16 %v6028, %v6027
        %v6077 = vpack.c.b16 %v6030, %v6029
        %v6078 = vpack.c.b16 %v6032, %v6031
        %v6079 = vpack.c.b16 %v6034, %v6033
        %v6080 = vpack.c.b16 %v6036, %v6035
        %v6081 = vpack.c.b16 %v6038, %v6037
        %v6082 = vpack.c.b16 %v6040, %v6039
        %v6083 = vpack.c.b16 %v6042, %v6041
        %v6084 = vpack.c.b16 %v6044, %v6043
        %6125 = vmatprep.subr.bf16.mxu0 0
        %6126 = vmatpush1.bf16.msra.mxu0 %v6045
        %6127 = vmatprep.subr.bf16.mxu0 0
        %6128 = vmatpush1.bf16.msra.mxu0 %v6046
        %6129 = vmatprep.subr.bf16.mxu0 0
        %6130 = vmatpush1.bf16.msra.mxu0 %v6047
        %6131 = vmatprep.subr.bf16.mxu0 0
        %6132 = vmatpush1.bf16.msra.mxu0 %v6048
        %6133 = vmatprep.subr.bf16.mxu0 0
        %6134 = vmatpush1.bf16.msra.mxu0 %v6049
        %6135 = vmatprep.subr.bf16.mxu0 0
        %6136 = vmatpush1.bf16.msra.mxu0 %v6050
        %6137 = vmatprep.subr.bf16.mxu0 0
        %6138 = vmatpush1.bf16.msra.mxu0 %v6051
        %6139 = vmatprep.subr.bf16.mxu0 0
        %6140 = vmatpush1.bf16.msra.mxu0 %v6052
        %6141 = vmatprep.subr.bf16.mxu0 0
        %6142 = vmatpush1.bf16.msra.mxu0 %v6053
        %6143 = vmatprep.subr.bf16.mxu0 0
        %6144 = vmatpush1.bf16.msra.mxu0 %v6054
        %6145 = vmatprep.subr.bf16.mxu0 0
        %6146 = vmatpush1.bf16.msra.mxu0 %v6055
        %6147 = vmatprep.subr.bf16.mxu0 0
        %6148 = vmatpush1.bf16.msra.mxu0 %v6056
        %6149 = vmatprep.subr.bf16.mxu0 0
        %6150 = vmatpush1.bf16.msra.mxu0 %v6057
        %6151 = vmatprep.subr.bf16.mxu0 0
        %6152 = vmatpush1.bf16.msra.mxu0 %v6058
        %6153 = vmatprep.subr.bf16.mxu0 0
        %6154 = vmatpush1.bf16.msra.mxu0 %v6059
        %6155 = vmatprep.subr.bf16.mxu0 0
        %6156 = vmatpush1.bf16.msra.mxu0 %v6060
        %6157 = vmatprep.mubr.bf16.mxu0 %v5791
        %6158 = vmatmul.mubr.bf16.gmra.mrb[0].mxu0 %v5790
        %v6159 = vpop.f32.mrb[0].mxu0
        %v6160 = vadd.f32 0.0, %v6159
        %v6161 = vpop.f32.mrb[0].mxu0
        %v6162 = vpop.f32.mrb[0].mxu0
        %v6163 = vadd.f32 0.0, %v6162
        %v6164 = vpop.f32.mrb[0].mxu0
        %6165 = vmatprep.mubr.bf16.mxu0 %v5796
        %6166 = vmatmul.mubr.bf16.gmra.mrb[0].mxu0 %v5795
        %v6167 = vpop.f32.mrb[0].mxu0
        %v6168 = vadd.f32 0.0, %v6167
        %v6169 = vpop.f32.mrb[0].mxu0
        %v6170 = vpop.f32.mrb[0].mxu0
        %v6171 = vadd.f32 0.0, %v6170
        %v6172 = vpop.f32.mrb[0].mxu0
        %6173 = vmatprep.mubr.bf16.mxu0 %v5801
        %6174 = vmatmul.mubr.bf16.gmra.mrb[0].mxu0 %v5800
        %v6175 = vpop.f32.mrb[0].mxu0
        %v6176 = vadd.f32 0.0, %v6175
        %v6177 = vpop.f32.mrb[0].mxu0
        %v6178 = vpop.f32.mrb[0].mxu0
        %v6179 = vpop.f32.mrb[0].mxu0
        %6180 = vdwg.mxu0
        %6181 = vmatprep.subr.bf16.mxu0 0
        %6182 = vmatpush1.bf16.msra.mxu0 %v6061
        %6183 = vmatprep.subr.bf16.mxu0 0
        %6184 = vmatpush1.bf16.msra.mxu0 %v6062
        %6185 = vmatprep.subr.bf16.mxu0 0
        %6186 = vmatpush1.bf16.msra.mxu0 %v6063
        %6187 = vmatprep.subr.bf16.mxu0 0
        %6188 = vmatpush1.bf16.msra.mxu0 %v6064
        %6189 = vmatprep.subr.bf16.mxu0 0
        %6190 = vmatpush1.bf16.msra.mxu0 %v6065
        %6191 = vmatprep.subr.bf16.mxu0 0
        %6192 = vmatpush1.bf16.msra.mxu0 %v6066
        %6193 = vmatprep.subr.bf16.mxu0 0
        %6194 = vmatpush1.bf16.msra.mxu0 %v6067
        %6195 = vmatprep.subr.bf16.mxu0 0
        %6196 = vmatpush1.bf16.msra.mxu0 %v6068
        %6197 = vmatprep.subr.bf16.mxu0 0
        %6198 = vmatpush1.bf16.msra.mxu0 %v6069
        %6199 = vmatprep.subr.bf16.mxu0 0
        %6200 = vmatpush1.bf16.msra.mxu0 %v6070
        %6201 = vmatprep.subr.bf16.mxu0 0
        %6202 = vmatpush1.bf16.msra.mxu0 %v6071
        %6203 = vmatprep.subr.bf16.mxu0 0
        %6204 = vmatpush1.bf16.msra.mxu0 %v6072
        %6205 = vmatprep.subr.bf16.mxu0 0
        %6206 = vmatpush1.bf16.msra.mxu0 %v6073
        %6207 = vmatprep.subr.bf16.mxu0 0
        %6208 = vmatpush1.bf16.msra.mxu0 %v6074
        %6209 = vmatprep.subr.bf16.mxu0 0
        %6210 = vmatpush1.bf16.msra.mxu0 %v6075
        %6211 = vmatprep.subr.bf16.mxu0 0
        %6212 = vmatpush1.bf16.msra.mxu0 %v6076
        %6213 = vmatprep.mubr.bf16.mxu0 %v5793
        %6214 = vmatmul.mubr.bf16.gmra.mrb[0].mxu0 %v5792
        %v6215 = vpop.f32.mrb[0].mxu0
        %v6216 = vadd.f32 %v6160, %v6215
        %v6217 = vpop.f32.mrb[0].mxu0
        %v6218 = vpop.f32.mrb[0].mxu0
        %v6219 = vadd.f32 %v6163, %v6218
        %v6220 = vpop.f32.mrb[0].mxu0
        %6221 = vmatprep.mubr.bf16.mxu0 %v5798
        %6222 = vmatmul.mubr.bf16.gmra.mrb[0].mxu0 %v5797
        %v6223 = vpop.f32.mrb[0].mxu0
        %v6224 = vadd.f32 %v6168, %v6223
        %v6225 = vpop.f32.mrb[0].mxu0
        %v6226 = vpop.f32.mrb[0].mxu0
        %v6227 = vadd.f32 %v6171, %v6226
        %v6228 = vpop.f32.mrb[0].mxu0
        %6229 = vmatprep.mubr.bf16.mxu0 %v5803
        %6230 = vmatmul.mubr.bf16.gmra.mrb[0].mxu0 %v5802
        %v6231 = vpop.f32.mrb[0].mxu0
        %v6232 = vadd.f32 %v6176, %v6231
        %v6233 = vpop.f32.mrb[0].mxu0
        %v6234 = vpop.f32.mrb[0].mxu0
        %v6235 = vpop.f32.mrb[0].mxu0
        %6236 = vdwg.mxu0
        %6237 = vmatprep.subr.bf16.mxu0 0
        %6238 = vmatpush1.bf16.msra.mxu0 %v6077
        %6239 = vmatprep.subr.bf16.mxu0 0
        %6240 = vmatpush1.bf16.msra.mxu0 %v6078
        %6241 = vmatprep.subr.bf16.mxu0 0
        %6242 = vmatpush1.bf16.msra.mxu0 %v6079
        %6243 = vmatprep.subr.bf16.mxu0 0
        %6244 = vmatpush1.bf16.msra.mxu0 %v6080
        %6245 = vmatprep.subr.bf16.mxu0 0
        %6246 = vmatpush1.bf16.msra.mxu0 %v6081
        %6247 = vmatprep.subr.bf16.mxu0 0
        %6248 = vmatpush1.bf16.msra.mxu0 %v6082
        %6249 = vmatprep.subr.bf16.mxu0 0
        %6250 = vmatpush1.bf16.msra.mxu0 %v6083
        %6251 = vmatprep.subr.bf16.mxu0 0
        %6252 = vmatpush1.bf16.msra.mxu0 %v6084
        %6253 = vmatprep.subr.bf16.mxu0 0
        %6254 = vmatpush1.bf16.msra.mxu0 0
        %6255 = vmatprep.subr.bf16.mxu0 0
        %6256 = vmatpush1.bf16.msra.mxu0 0
        %6257 = vmatprep.subr.bf16.mxu0 0
        %6258 = vmatpush1.bf16.msra.mxu0 0
        %6259 = vmatprep.subr.bf16.mxu0 0
        %6260 = vmatpush1.bf16.msra.mxu0 0
        %6261 = vmatprep.subr.bf16.mxu0 0
        %6262 = vmatpush1.bf16.msra.mxu0 0
        %6263 = vmatprep.subr.bf16.mxu0 0
        %6264 = vmatpush1.bf16.msra.mxu0 0
        %6265 = vmatprep.subr.bf16.mxu0 0
        %6266 = vmatpush1.bf16.msra.mxu0 0
        %6267 = vmatprep.subr.bf16.mxu0 0
        %6268 = vmatpush1.bf16.msra.mxu0 0
        %6269 = vmatprep.mubr.bf16.mxu0 0
        %6270 = vmatmul.mubr.bf16.gmra.mrb[0].mxu0 %v5794
        %v6271 = vpop.f32.mrb[0].mxu0
        %v6272 = vadd.f32 %v6216, %v6271
        %v6273 = vpop.f32.mrb[0].mxu0
        %v6274 = vpop.f32.mrb[0].mxu0
        %v6275 = vadd.f32 %v6219, %v6274
        %v6276 = vpop.f32.mrb[0].mxu0
        %6277 = vmatprep.mubr.bf16.mxu0 0
        %6278 = vmatmul.mubr.bf16.gmra.mrb[0].mxu0 %v5799
        %v6279 = vpop.f32.mrb[0].mxu0
        %v6280 = vadd.f32 %v6224, %v6279
        %v6281 = vpop.f32.mrb[0].mxu0
        %v6282 = vpop.f32.mrb[0].mxu0
        %v6283 = vadd.f32 %v6227, %v6282
        %v6284 = vpop.f32.mrb[0].mxu0
        %6285 = vmatprep.mubr.bf16.mxu0 0
        %6286 = vmatmul.mubr.bf16.gmra.mrb[0].mxu0 %v5804
        %v6287 = vpop.f32.mrb[0].mxu0
        %v6288 = vadd.f32 %v6232, %v6287
        %v6289 = vpop.f32.mrb[0].mxu0
        %v6290 = vpop.f32.mrb[0].mxu0
        %v6291 = vpop.f32.mrb[0].mxu0
        %6292 = vdwg.mxu0
        %v6293 = vmax.f32 %v6272, 1e-10
        %v6294 = vmax.f32 %v6275, 1e-10
        %v6295 = vmax.f32 %v6280, 1e-10
        %v6296 = vmax.f32 %v6283, 1e-10
        %v6297 = vmax.f32 %v6288, 1e-10
        %v6298 = vlog2.pop %v6293
        %v6299 = vmul.f32 %v6298, 0.6931472
        %v6300 = vlog2.pop %v6294
        %v6301 = vmul.f32 %v6300, 0.6931472
        %v6302 = vlog2.pop %v6295
        %v6303 = vmul.f32 %v6302, 0.6931472
        %v6304 = vlog2.pop %v6296
        %v6305 = vmul.f32 %v6304, 0.6931472
        %v6306 = vlog2.pop %v6297
        %v6307 = vmul.f32 %v6306, 0.6931472
        %v6308 = vmul.f32 %v6299, 0.4342945
        %v6309 = vmul.f32 %v6301, 0.4342945
        %v6310 = vmul.f32 %v6303, 0.4342945
        %v6311 = vmul.f32 %v6305, 0.4342945
        %v6312 = vmul.f32 %v6307, 0.4342945
        %6313 = vst [vmem:[%s315] sm:$0xff] %v6308
        %6314 = vst [vmem:[%s315 + $0x8] sm:$0xff] %v6309
        %6315 = vst [vmem:[%s315 + $0x10] sm:$0xff] %v6310
        %6316 = vst [vmem:[%s315 + $0x18] sm:$0xff] %v6311
        %6317 = vst [vmem:[%s315 + $0x20] sm:$0xff] %v6312
        %s6318 = sand.u32 %s149, 1
        %s6319 = scalar_lea.sflag [#allocation4], %s6318
        %s6320 = sand.u32 %s149, 1
        %s6321 = smul.addr %s6320, 40
        %s6322 = scalar_lea.vmem [#allocation10], %s6321
        // Predicated region
        $region53: #{tpu_custom_call.1} parent=35 // pred_check
          %p6323 = pneg %p159
        $region54: #{tpu_custom_call.1} parent=35 // pred_check_branch
          %6325 = sbr.rel (%p6323) target = $region56
        $region55: #{tpu_custom_call.1} parent=35 // pred_region
          %s6326 = smul.u32 5, %s30
          %s6328 = ssub.s32 640, 640
          %6329 = vsyncadd %s6319, %s6328
          %s6330 = smul.addr %s29, 5
          %s6331 = sadd.s32 %s6326, %s6330
          %s6332 = smul.addr %s6331, 128
          %s6333 = scalar_lea.hbm %s4, %s6332
          %s6334 = sshll.u32 %s6322, 4
          %s6335 = int_to_ptr.vmem [resolvable:$true] %s6334
          %6340 = dma.vmem_to_hbm [thread:$0]  %s6335, 640, %s6333, %s6319, 128, 128, 8
        $region56: #{tpu_custom_call.1} parent=35 // pred_fallthru
          _
      $region36: #{tpu_custom_call.1} parent=5 // pred_fallthru
        _
      %p6341 = scmp.le.s32.totalorder 2, %s20
      // Predicated region
      $region57: #{tpu_custom_call.1} parent=5 // pred_check
        %p6342 = pneg %p6341
      $region58: #{tpu_custom_call.1} parent=5 // pred_check_branch
        %6344 = sbr.rel (%p6342) target = $region60
      $region59: #{tpu_custom_call.1} parent=5 // pred_region
        %s6345 = ssub.s32 %s20, 2
        // Predicated region
        $region61: #{tpu_custom_call.1} parent=59 // pred_check
          %p6346 = pneg %p165
        $region62: #{tpu_custom_call.1} parent=59 // pred_check_branch
          %6348 = sbr.rel (%p6346) target = $region64
        $region63: #{tpu_custom_call.1} parent=59 // pred_region
          %s6349 = sand.u32 %s150, 1
          %s6350 = scalar_lea.sflag [#allocation4], %s6349
          %s6351 = sand.u32 %s150, 1
          %s6352 = smul.addr %s6351, 40
          %s6353 = scalar_lea.vmem [#allocation10], %s6352
          %6354 = dma.done %s6350, 640
        $region64: #{tpu_custom_call.1} parent=59 // pred_fallthru
          _
      $region60: #{tpu_custom_call.1} parent=5 // pred_fallthru
        _
    $region6: #{tpu_custom_call.1} parent=1 // loop_footer
      %s24 = sadd.s32 1, %s20
    $region7: #{tpu_custom_call.1} parent=1 // loop_footer_branch
      %19 = sbr.rel target = $region3
    $region8: #{tpu_custom_call.1} parent=1 // loop_exit
      _
    %6355 = vsyncpa [#allocation3], 1
    %s6356 = scalar_lea.sflag [#allocation3], 1
    %6357 = vsyncpa %s6356, 1
    %6358 = vsyncpa [#allocation6], 1
    %s6359 = scalar_lea.sflag [#allocation6], 1
    %6360 = vsyncpa %s6359, 1
    %6361 = vsyncpa [#allocation9], 1
    %6362 = vsyncpa [#allocation4], 1
    %s6363 = scalar_lea.sflag [#allocation4], 1
    %6364 = vsyncpa %s6363, 1

</llo_original>
